<compile_context>
chip_gen: v5e
topology: v5e:2x2
jax: 0.10.0
libtpu: 0.0.40
codegen_flags: <defaults>
</compile_context>

<pallas_src>
import jax
import jax.numpy as jnp
import numpy as np
from jax import lax
from jax.experimental import pallas as pl
from jax.experimental.pallas import tpu as pltpu


# ---------------------------------------------------------------------------
# Fused kernel: one-hot embedding matmul -> batched input projection ->
# unrolled LSTM recurrence -> fused fc_out epilogue (lane-dense output).
# ---------------------------------------------------------------------------
def _lstm_fused_kernel(ids_ref, h0_ref, c0_ref, emb_ref, w_ih_ref, w_hh_ref,
                       b_ref, w_fc_ref, b_fc_ref, out_ref, gx_scr, h_scr):
    B, H = h0_ref.shape                  # (B_pad, H), static
    TB = ids_ref.shape[0]                # T * B_pad, static
    NE = emb_ref.shape[0]                # num embeddings
    T = TB // B

    # --- Prologue 1: embedding gather as a one-hot MXU matmul -------------
    ids = ids_ref[...]                                          # (TB, 1) i32
    iota = lax.broadcasted_iota(jnp.int32, (TB, NE), 1)
    onehot = jnp.where(iota == ids, 1.0, 0.0).astype(jnp.bfloat16)
    x = jnp.dot(onehot, emb_ref[...],                           # (TB, H) f32
                preferred_element_type=jnp.float32)

    # --- Prologue 2: input projection for ALL timesteps, bias added once --
    gx_scr[...] = (
        jnp.dot(x.astype(jnp.bfloat16), w_ih_ref[...],
                preferred_element_type=jnp.float32)
        + b_ref[...])                                           # (TB, 4H)

    h = h0_ref[...]                      # (B, H) f32 state
    c = c0_ref[...]                      # (B, H) f32 state

    # --- Recurrence: fully unrolled over T (T small and static) -----------
    # TODO(synk): weight-stationary W_hh (matmul_push_rhs) if re-streamed.
    for t in range(T):
        gates = (gx_scr[pl.ds(t * B, B), :]
                 + jnp.dot(h.astype(jnp.bfloat16), w_hh_ref[...],
                           preferred_element_type=jnp.float32))  # (B, 4H)

        # PyTorch gate order: input, forget, cell(g), output
        i_g = jax.nn.sigmoid(gates[:, 0:H])
        f_g = jax.nn.sigmoid(gates[:, H:2 * H])
        g_g = jnp.tanh(gates[:, 2 * H:3 * H])
        o_g = jax.nn.sigmoid(gates[:, 3 * H:4 * H])

        c = f_g * c + i_g * g_g
        h = o_g * jnp.tanh(c)

        h_scr[pl.ds(t * B, B), :] = h                           # static slice

    # --- Epilogue: fused fc_out, one (TB,H)@(H,O_pad) matmul ---------------
    # O_pad = 128 -> lane-dense unmasked store.
    out_ref[...] = (
        jnp.dot(h_scr[...].astype(jnp.bfloat16), w_fc_ref[...],
                preferred_element_type=jnp.float32)
        + b_fc_ref[...])


@jax.jit
def lstm_forward(input_seq, hidden_in, mem_in, params):
    """Forward pass matching the PyTorch module (batch_first)."""
    emb_table = params["embedding"]        # (num_emb, H)
    w_ih = params["w_ih"]                  # (4H, H)
    w_hh = params["w_hh"]                  # (4H, H)
    b_ih = params["b_ih"]                  # (4H,)
    b_hh = params["b_hh"]                  # (4H,)
    w_fc = params["w_fc"]                  # (O, H)
    b_fc = params["b_fc"]                  # (O,)

    B, T = input_seq.shape
    NE, H = emb_table.shape
    O = w_fc.shape[0]
    O_pad = ((O + 127) // 128) * 128

    # Pad batch up to a sublane multiple (8) so vregs / MXU rows are full.
    B_pad = ((B + 7) // 8) * 8
    pad_b = B_pad - B

    # Tiny int32 plumbing: time-major, batch-padded, flattened indices.
    ids_tm = jnp.transpose(input_seq)                  # (T, B)
    h0 = hidden_in[0]                                  # (B, H)  num_layers=1
    c0 = mem_in[0]                                     # (B, H)
    if pad_b:
        ids_tm = jnp.pad(ids_tm, ((0, 0), (0, pad_b)))
        h0 = jnp.pad(h0, ((0, pad_b), (0, 0)))
        c0 = jnp.pad(c0, ((0, pad_b), (0, 0)))
    ids2d = ids_tm.reshape(T * B_pad, 1).astype(jnp.int32)

    # bf16 MXU operands (gate/state math stays f32 inside the kernel).
    emb_bf = emb_table.astype(jnp.bfloat16)                        # (NE, H)
    w_ih_bf = jnp.transpose(w_ih).astype(jnp.bfloat16)             # (H, 4H)
    w_hh_bf = jnp.transpose(w_hh).astype(jnp.bfloat16)             # (H, 4H)
    bias = (b_ih + b_hh).reshape(1, 4 * H)                         # (1, 4H) f32
    w_fc_bf = jnp.pad(jnp.transpose(w_fc),
                      ((0, 0), (0, O_pad - O))).astype(jnp.bfloat16)  # (H, O_pad)
    b_fc_pad = jnp.pad(b_fc, (0, O_pad - O)).reshape(1, O_pad)     # (1, O_pad) f32

    TB = T * B_pad
    out_pad = pl.pallas_call(
        _lstm_fused_kernel,
        out_shape=jax.ShapeDtypeStruct((TB, O_pad), jnp.float32),
        grid=(1,),
        in_specs=[
            pl.BlockSpec((TB, 1), lambda i: (0, 0)),          # token ids
            pl.BlockSpec((B_pad, H), lambda i: (0, 0)),       # h0
            pl.BlockSpec((B_pad, H), lambda i: (0, 0)),       # c0
            pl.BlockSpec((NE, H), lambda i: (0, 0)),          # embedding table
            pl.BlockSpec((H, 4 * H), lambda i: (0, 0)),       # W_ih^T (bf16)
            pl.BlockSpec((H, 4 * H), lambda i: (0, 0)),       # W_hh^T (bf16)
            pl.BlockSpec((1, 4 * H), lambda i: (0, 0)),       # b_ih + b_hh
            pl.BlockSpec((H, O_pad), lambda i: (0, 0)),       # W_fc^T (bf16, padded)
            pl.BlockSpec((1, O_pad), lambda i: (0, 0)),       # b_fc (padded)
        ],
        out_specs=pl.BlockSpec((TB, O_pad), lambda i: (0, 0)),
        scratch_shapes=[
            pltpu.VMEM((TB, 4 * H), jnp.float32),             # gx (input proj)
            pltpu.VMEM((TB, H), jnp.float32),                 # h sequence
        ],
        compiler_params=pltpu.CompilerParams(
            dimension_semantics=("arbitrary",)),
    )(ids2d, h0, c0, emb_bf, w_ih_bf, w_hh_bf, bias, w_fc_bf, b_fc_pad)

    # Drop batch / output padding and go back to batch_first layout.
    out_tm = out_pad.reshape(T, B_pad, O_pad)[:, :B, :O]      # (T, B, O)
    return jnp.transpose(out_tm, (1, 0, 2))                   # (B, T, O)


# ---------------------------------------------------------------------------
# Pure-JAX f32 reference (correctness check only).
# ---------------------------------------------------------------------------
def lstm_forward_ref(input_seq, hidden_in, mem_in, params):
    x = jnp.take(params["embedding"], input_seq, axis=0)   # (B, T, H)
    w_ih, w_hh = params["w_ih"], params["w_hh"]
    b_ih, b_hh = params["b_ih"], params["b_hh"]

    def step(carry, x_t):
        h, c = carry
        gates = x_t @ w_ih.T + b_ih + h @ w_hh.T + b_hh
        i, f, g, o = jnp.split(gates, 4, axis=-1)
        i = jax.nn.sigmoid(i)
        f = jax.nn.sigmoid(f)
        g = jnp.tanh(g)
        o = jax.nn.sigmoid(o)
        c = f * c + i * g
        h = o * jnp.tanh(c)
        return (h, c), h

    _, hs = lax.scan(step, (hidden_in[0], mem_in[0]),
                     jnp.transpose(x, (1, 0, 2)))
    out = jnp.transpose(hs, (1, 0, 2))                      # (B, T, H)
    return out @ params["w_fc"].T + params["b_fc"]


# ---------------------------------------------------------------------------
# Deterministic parameter init (PyTorch-style shapes/scales).
# ---------------------------------------------------------------------------
def init_params(key, num_emb, output_size, hidden_size):
    ks = jax.random.split(key, 7)
    bound = 1.0 / np.sqrt(hidden_size)
    return {
        "embedding": jax.random.normal(ks[0], (num_emb, hidden_size),
                                       jnp.float32),
        "w_ih": jax.random.uniform(ks[1], (4 * hidden_size, hidden_size),
                                   jnp.float32, -bound, bound),
        "w_hh": jax.random.uniform(ks[2], (4 * hidden_size, hidden_size),
                                   jnp.float32, -bound, bound),
        "b_ih": jax.random.uniform(ks[3], (4 * hidden_size,),
                                   jnp.float32, -bound, bound),
        "b_hh": jax.random.uniform(ks[4], (4 * hidden_size,),
                                   jnp.float32, -bound, bound),
        "w_fc": jax.random.uniform(ks[5], (output_size, hidden_size),
                                   jnp.float32, -bound, bound),
        "b_fc": jax.random.uniform(ks[6], (output_size,),
                                   jnp.float32, -bound, bound),
    }


if __name__ == "__main__":
    NUM_EMB = 64
    OUTPUT_SIZE = 64
    HIDDEN = 128
    NUM_LAYERS = 1
    B, T = 4, 8

    key = jax.random.PRNGKey(0)
    k_par, k_ids, k_h, k_c = jax.random.split(key, 4)

    params = init_params(k_par, NUM_EMB, OUTPUT_SIZE, HIDDEN)
    input_seq = jax.random.randint(k_ids, (B, T), 0, NUM_EMB, jnp.int32)
    hidden_in = jax.random.normal(k_h, (NUM_LAYERS, B, HIDDEN), jnp.float32)
    mem_in = jax.random.normal(k_c, (NUM_LAYERS, B, HIDDEN), jnp.float32)

    out = lstm_forward(input_seq, hidden_in, mem_in, params)
    out = jax.block_until_ready(out)

    ref = jax.block_until_ready(
        lstm_forward_ref(input_seq, hidden_in, mem_in, params))

    assert out.shape == (B, T, OUTPUT_SIZE), out.shape
    # bf16 MXU operands (per perf review) -> loosened parity tolerance vs the
    # f32 reference.
    np.testing.assert_allclose(np.asarray(out), np.asarray(ref),
                               rtol=5e-2, atol=8e-2)
    print("KERNEL_OK")
</pallas_src>

<mosaic_0001>
module attributes {stable_mosaic.version = 11 : i64} {
  func.func @_lstm_fused_kernel(%arg0: i32, %arg1: memref<64x1xi32, #tpu.memory_space<vmem>>, %arg2: memref<8x128xf32, #tpu.memory_space<vmem>>, %arg3: memref<8x128xf32, #tpu.memory_space<vmem>>, %arg4: memref<64x128xbf16, #tpu.memory_space<vmem>>, %arg5: memref<128x512xbf16, #tpu.memory_space<vmem>>, %arg6: memref<128x512xbf16, #tpu.memory_space<vmem>>, %arg7: memref<1x512xf32, #tpu.memory_space<vmem>>, %arg8: memref<128x128xbf16, #tpu.memory_space<vmem>>, %arg9: memref<1x128xf32, #tpu.memory_space<vmem>>, %arg10: memref<64x128xf32, #tpu.memory_space<vmem>>, %arg11: memref<64x512xf32, #tpu.memory_space<vmem>>, %arg12: memref<64x128xf32, #tpu.memory_space<vmem>>) attributes {dimension_semantics = [#tpu.dimension_semantics<arbitrary>], iteration_bounds = array<i64: 1>, scalar_prefetch = 0 : i64, scratch_operands = 2 : i64, tpu.core_type = #tpu.core_type<tc>, window_params = [{pipeline_mode = #tpu.pipeline_mode<synchronous>, transform_indices = @transform_0, window_bounds = array<i64: 64, 1>}, {pipeline_mode = #tpu.pipeline_mode<synchronous>, transform_indices = @transform_1, window_bounds = array<i64: 8, 128>}, {pipeline_mode = #tpu.pipeline_mode<synchronous>, transform_indices = @transform_2, window_bounds = array<i64: 8, 128>}, {pipeline_mode = #tpu.pipeline_mode<synchronous>, transform_indices = @transform_3, window_bounds = array<i64: 64, 128>}, {pipeline_mode = #tpu.pipeline_mode<synchronous>, transform_indices = @transform_4, window_bounds = array<i64: 128, 512>}, {pipeline_mode = #tpu.pipeline_mode<synchronous>, transform_indices = @transform_5, window_bounds = array<i64: 128, 512>}, {pipeline_mode = #tpu.pipeline_mode<synchronous>, transform_indices = @transform_6, window_bounds = array<i64: 1, 512>}, {pipeline_mode = #tpu.pipeline_mode<synchronous>, transform_indices = @transform_7, window_bounds = array<i64: 128, 128>}, {pipeline_mode = #tpu.pipeline_mode<synchronous>, transform_indices = @transform_8, window_bounds = array<i64: 1, 128>}, {pipeline_mode = #tpu.pipeline_mode<synchronous>, transform_indices = @transform_9, window_bounds = array<i64: 64, 128>}]} {
    %c0 = arith.constant 0 : index
    %c0_0 = arith.constant 0 : index
    %0 = vector.load %arg1[%c0, %c0_0] : memref<64x1xi32, #tpu.memory_space<vmem>>, vector<64x1xi32>
    %1 = tpu.iota {dimensions = array<i32: 1>} : vector<64x64xi32>
    %2 = vector.broadcast %0 : vector<64x1xi32> to vector<64x64xi32>
    %3 = arith.cmpi eq, %1, %2 : vector<64x64xi32>
    %cst = arith.constant 1.000000e+00 : f32
    %cst_1 = arith.constant 0.000000e+00 : f32
    %4 = vector.broadcast %cst : f32 to vector<64x64xf32>
    %5 = vector.broadcast %cst_1 : f32 to vector<64x64xf32>
    %6 = arith.select %3, %4, %5 : vector<64x64xi1>, vector<64x64xf32>
    %7 = arith.truncf %6 : vector<64x64xf32> to vector<64x64xbf16>
    %c0_2 = arith.constant 0 : index
    %c0_3 = arith.constant 0 : index
    %8 = vector.load %arg4[%c0_2, %c0_3] : memref<64x128xbf16, #tpu.memory_space<vmem>>, vector<64x128xbf16>
    %cst_4 = arith.constant dense<0.000000e+00> : vector<64x128xf32>
    %9 = tpu.matmul %7, %8, %cst_4 {dimension_numbers = #tpu.dot_dimension_numbers<[1], [0], [0], [1], [0, 0, 1, 1], [], []>} : vector<64x64xbf16>, vector<64x128xbf16>, vector<64x128xf32> -> vector<64x128xf32>
    %10 = arith.truncf %9 : vector<64x128xf32> to vector<64x128xbf16>
    %c0_5 = arith.constant 0 : index
    %c0_6 = arith.constant 0 : index
    %11 = vector.load %arg5[%c0_5, %c0_6] : memref<128x512xbf16, #tpu.memory_space<vmem>>, vector<128x512xbf16>
    %cst_7 = arith.constant dense<0.000000e+00> : vector<64x512xf32>
    %12 = tpu.matmul %10, %11, %cst_7 {dimension_numbers = #tpu.dot_dimension_numbers<[1], [0], [0], [1], [0, 0, 1, 1], [], []>} : vector<64x128xbf16>, vector<128x512xbf16>, vector<64x512xf32> -> vector<64x512xf32>
    %c0_8 = arith.constant 0 : index
    %c0_9 = arith.constant 0 : index
    %13 = vector.load %arg7[%c0_8, %c0_9] : memref<1x512xf32, #tpu.memory_space<vmem>>, vector<1x512xf32>
    %14 = vector.broadcast %13 : vector<1x512xf32> to vector<64x512xf32>
    %15 = arith.addf %12, %14 : vector<64x512xf32>
    %c0_10 = arith.constant 0 : index
    %c0_11 = arith.constant 0 : index
    %16 = vector.load %arg11[%c0_10, %c0_11] : memref<64x512xf32, #tpu.memory_space<vmem>>, vector<64x512xf32>
    tpu.vector_store %arg11[%c0_10, %c0_11], %15 {strides = array<i32>} : memref<64x512xf32, #tpu.memory_space<vmem>>, vector<64x512xf32>,
    %c0_12 = arith.constant 0 : index
    %c0_13 = arith.constant 0 : index
    %17 = vector.load %arg2[%c0_12, %c0_13] : memref<8x128xf32, #tpu.memory_space<vmem>>, vector<8x128xf32>
    %c0_14 = arith.constant 0 : index
    %c0_15 = arith.constant 0 : index
    %18 = vector.load %arg3[%c0_14, %c0_15] : memref<8x128xf32, #tpu.memory_space<vmem>>, vector<8x128xf32>
    %c0_16 = arith.constant 0 : index
    %c0_17 = arith.constant 0 : index
    %19 = vector.load %arg11[%c0_16, %c0_17] : memref<64x512xf32, #tpu.memory_space<vmem>>, vector<8x512xf32>
    %20 = arith.truncf %17 : vector<8x128xf32> to vector<8x128xbf16>
    %c0_18 = arith.constant 0 : index
    %c0_19 = arith.constant 0 : index
    %21 = vector.load %arg6[%c0_18, %c0_19] : memref<128x512xbf16, #tpu.memory_space<vmem>>, vector<128x512xbf16>
    %cst_20 = arith.constant dense<0.000000e+00> : vector<8x512xf32>
    %22 = tpu.matmul %20, %21, %cst_20 {dimension_numbers = #tpu.dot_dimension_numbers<[1], [0], [0], [1], [0, 0, 1, 1], [], []>} : vector<8x128xbf16>, vector<128x512xbf16>, vector<8x512xf32> -> vector<8x512xf32>
    %23 = arith.addf %19, %22 : vector<8x512xf32>
    %24 = vector.extract_strided_slice %23 {offsets = [0, 0], sizes = [8, 128], strides = [1, 1]} : vector<8x512xf32> to vector<8x128xf32>
    %25 = arith.negf %24 : vector<8x128xf32>
    %26 = math.exp %25 : vector<8x128xf32>
    %cst_21 = arith.constant 1.000000e+00 : f32
    %27 = vector.broadcast %cst_21 : f32 to vector<8x128xf32>
    %28 = arith.addf %27, %26 : vector<8x128xf32>
    %29 = arith.divf %27, %28 : vector<8x128xf32>
    %30 = vector.extract_strided_slice %23 {offsets = [0, 128], sizes = [8, 128], strides = [1, 1]} : vector<8x512xf32> to vector<8x128xf32>
    %31 = arith.negf %30 : vector<8x128xf32>
    %32 = math.exp %31 : vector<8x128xf32>
    %cst_22 = arith.constant 1.000000e+00 : f32
    %33 = vector.broadcast %cst_22 : f32 to vector<8x128xf32>
    %34 = arith.addf %33, %32 : vector<8x128xf32>
    %35 = arith.divf %33, %34 : vector<8x128xf32>
    %36 = vector.extract_strided_slice %23 {offsets = [0, 256], sizes = [8, 128], strides = [1, 1]} : vector<8x512xf32> to vector<8x128xf32>
    %37 = math.tanh %36 : vector<8x128xf32>
    %38 = vector.extract_strided_slice %23 {offsets = [0, 384], sizes = [8, 128], strides = [1, 1]} : vector<8x512xf32> to vector<8x128xf32>
    %39 = arith.negf %38 : vector<8x128xf32>
    %40 = math.exp %39 : vector<8x128xf32>
    %cst_23 = arith.constant 1.000000e+00 : f32
    %41 = vector.broadcast %cst_23 : f32 to vector<8x128xf32>
    %42 = arith.addf %41, %40 : vector<8x128xf32>
    %43 = arith.divf %41, %42 : vector<8x128xf32>
    %44 = arith.mulf %35, %18 : vector<8x128xf32>
    %45 = arith.mulf %29, %37 : vector<8x128xf32>
    %46 = arith.addf %44, %45 : vector<8x128xf32>
    %47 = math.tanh %46 : vector<8x128xf32>
    %48 = arith.mulf %43, %47 : vector<8x128xf32>
    %c0_24 = arith.constant 0 : index
    %c0_25 = arith.constant 0 : index
    %49 = vector.load %arg12[%c0_24, %c0_25] : memref<64x128xf32, #tpu.memory_space<vmem>>, vector<8x128xf32>
    tpu.vector_store %arg12[%c0_24, %c0_25], %48 {strides = array<i32>} : memref<64x128xf32, #tpu.memory_space<vmem>>, vector<8x128xf32>,
    %c8 = arith.constant 8 : index
    %c0_26 = arith.constant 0 : index
    %50 = vector.load %arg11[%c8, %c0_26] : memref<64x512xf32, #tpu.memory_space<vmem>>, vector<8x512xf32>
    %51 = arith.truncf %48 : vector<8x128xf32> to vector<8x128xbf16>
    %c0_27 = arith.constant 0 : index
    %c0_28 = arith.constant 0 : index
    %52 = vector.load %arg6[%c0_27, %c0_28] : memref<128x512xbf16, #tpu.memory_space<vmem>>, vector<128x512xbf16>
    %cst_29 = arith.constant dense<0.000000e+00> : vector<8x512xf32>
    %53 = tpu.matmul %51, %52, %cst_29 {dimension_numbers = #tpu.dot_dimension_numbers<[1], [0], [0], [1], [0, 0, 1, 1], [], []>} : vector<8x128xbf16>, vector<128x512xbf16>, vector<8x512xf32> -> vector<8x512xf32>
    %54 = arith.addf %50, %53 : vector<8x512xf32>
    %55 = vector.extract_strided_slice %54 {offsets = [0, 0], sizes = [8, 128], strides = [1, 1]} : vector<8x512xf32> to vector<8x128xf32>
    %56 = arith.negf %55 : vector<8x128xf32>
    %57 = math.exp %56 : vector<8x128xf32>
    %cst_30 = arith.constant 1.000000e+00 : f32
    %58 = vector.broadcast %cst_30 : f32 to vector<8x128xf32>
    %59 = arith.addf %58, %57 : vector<8x128xf32>
    %60 = arith.divf %58, %59 : vector<8x128xf32>
    %61 = vector.extract_strided_slice %54 {offsets = [0, 128], sizes = [8, 128], strides = [1, 1]} : vector<8x512xf32> to vector<8x128xf32>
    %62 = arith.negf %61 : vector<8x128xf32>
    %63 = math.exp %62 : vector<8x128xf32>
    %cst_31 = arith.constant 1.000000e+00 : f32
    %64 = vector.broadcast %cst_31 : f32 to vector<8x128xf32>
    %65 = arith.addf %64, %63 : vector<8x128xf32>
    %66 = arith.divf %64, %65 : vector<8x128xf32>
    %67 = vector.extract_strided_slice %54 {offsets = [0, 256], sizes = [8, 128], strides = [1, 1]} : vector<8x512xf32> to vector<8x128xf32>
    %68 = math.tanh %67 : vector<8x128xf32>
    %69 = vector.extract_strided_slice %54 {offsets = [0, 384], sizes = [8, 128], strides = [1, 1]} : vector<8x512xf32> to vector<8x128xf32>
    %70 = arith.negf %69 : vector<8x128xf32>
    %71 = math.exp %70 : vector<8x128xf32>
    %cst_32 = arith.constant 1.000000e+00 : f32
    %72 = vector.broadcast %cst_32 : f32 to vector<8x128xf32>
    %73 = arith.addf %72, %71 : vector<8x128xf32>
    %74 = arith.divf %72, %73 : vector<8x128xf32>
    %75 = arith.mulf %66, %46 : vector<8x128xf32>
    %76 = arith.mulf %60, %68 : vector<8x128xf32>
    %77 = arith.addf %75, %76 : vector<8x128xf32>
    %78 = math.tanh %77 : vector<8x128xf32>
    %79 = arith.mulf %74, %78 : vector<8x128xf32>
    %c8_33 = arith.constant 8 : index
    %c0_34 = arith.constant 0 : index
    %80 = vector.load %arg12[%c8_33, %c0_34] : memref<64x128xf32, #tpu.memory_space<vmem>>, vector<8x128xf32>
    tpu.vector_store %arg12[%c8_33, %c0_34], %79 {strides = array<i32>} : memref<64x128xf32, #tpu.memory_space<vmem>>, vector<8x128xf32>,
    %c16 = arith.constant 16 : index
    %c0_35 = arith.constant 0 : index
    %81 = vector.load %arg11[%c16, %c0_35] : memref<64x512xf32, #tpu.memory_space<vmem>>, vector<8x512xf32>
    %82 = arith.truncf %79 : vector<8x128xf32> to vector<8x128xbf16>
    %c0_36 = arith.constant 0 : index
    %c0_37 = arith.constant 0 : index
    %83 = vector.load %arg6[%c0_36, %c0_37] : memref<128x512xbf16, #tpu.memory_space<vmem>>, vector<128x512xbf16>
    %cst_38 = arith.constant dense<0.000000e+00> : vector<8x512xf32>
    %84 = tpu.matmul %82, %83, %cst_38 {dimension_numbers = #tpu.dot_dimension_numbers<[1], [0], [0], [1], [0, 0, 1, 1], [], []>} : vector<8x128xbf16>, vector<128x512xbf16>, vector<8x512xf32> -> vector<8x512xf32>
    %85 = arith.addf %81, %84 : vector<8x512xf32>
    %86 = vector.extract_strided_slice %85 {offsets = [0, 0], sizes = [8, 128], strides = [1, 1]} : vector<8x512xf32> to vector<8x128xf32>
    %87 = arith.negf %86 : vector<8x128xf32>
    %88 = math.exp %87 : vector<8x128xf32>
    %cst_39 = arith.constant 1.000000e+00 : f32
    %89 = vector.broadcast %cst_39 : f32 to vector<8x128xf32>
    %90 = arith.addf %89, %88 : vector<8x128xf32>
    %91 = arith.divf %89, %90 : vector<8x128xf32>
    %92 = vector.extract_strided_slice %85 {offsets = [0, 128], sizes = [8, 128], strides = [1, 1]} : vector<8x512xf32> to vector<8x128xf32>
    %93 = arith.negf %92 : vector<8x128xf32>
    %94 = math.exp %93 : vector<8x128xf32>
    %cst_40 = arith.constant 1.000000e+00 : f32
    %95 = vector.broadcast %cst_40 : f32 to vector<8x128xf32>
    %96 = arith.addf %95, %94 : vector<8x128xf32>
    %97 = arith.divf %95, %96 : vector<8x128xf32>
    %98 = vector.extract_strided_slice %85 {offsets = [0, 256], sizes = [8, 128], strides = [1, 1]} : vector<8x512xf32> to vector<8x128xf32>
    %99 = math.tanh %98 : vector<8x128xf32>
    %100 = vector.extract_strided_slice %85 {offsets = [0, 384], sizes = [8, 128], strides = [1, 1]} : vector<8x512xf32> to vector<8x128xf32>
    %101 = arith.negf %100 : vector<8x128xf32>
    %102 = math.exp %101 : vector<8x128xf32>
    %cst_41 = arith.constant 1.000000e+00 : f32
    %103 = vector.broadcast %cst_41 : f32 to vector<8x128xf32>
    %104 = arith.addf %103, %102 : vector<8x128xf32>
    %105 = arith.divf %103, %104 : vector<8x128xf32>
    %106 = arith.mulf %97, %77 : vector<8x128xf32>
    %107 = arith.mulf %91, %99 : vector<8x128xf32>
    %108 = arith.addf %106, %107 : vector<8x128xf32>
    %109 = math.tanh %108 : vector<8x128xf32>
    %110 = arith.mulf %105, %109 : vector<8x128xf32>
    %c16_42 = arith.constant 16 : index
    %c0_43 = arith.constant 0 : index
    %111 = vector.load %arg12[%c16_42, %c0_43] : memref<64x128xf32, #tpu.memory_space<vmem>>, vector<8x128xf32>
    tpu.vector_store %arg12[%c16_42, %c0_43], %110 {strides = array<i32>} : memref<64x128xf32, #tpu.memory_space<vmem>>, vector<8x128xf32>,
    %c24 = arith.constant 24 : index
    %c0_44 = arith.constant 0 : index
    %112 = vector.load %arg11[%c24, %c0_44] : memref<64x512xf32, #tpu.memory_space<vmem>>, vector<8x512xf32>
    %113 = arith.truncf %110 : vector<8x128xf32> to vector<8x128xbf16>
    %c0_45 = arith.constant 0 : index
    %c0_46 = arith.constant 0 : index
    %114 = vector.load %arg6[%c0_45, %c0_46] : memref<128x512xbf16, #tpu.memory_space<vmem>>, vector<128x512xbf16>
    %cst_47 = arith.constant dense<0.000000e+00> : vector<8x512xf32>
    %115 = tpu.matmul %113, %114, %cst_47 {dimension_numbers = #tpu.dot_dimension_numbers<[1], [0], [0], [1], [0, 0, 1, 1], [], []>} : vector<8x128xbf16>, vector<128x512xbf16>, vector<8x512xf32> -> vector<8x512xf32>
    %116 = arith.addf %112, %115 : vector<8x512xf32>
    %117 = vector.extract_strided_slice %116 {offsets = [0, 0], sizes = [8, 128], strides = [1, 1]} : vector<8x512xf32> to vector<8x128xf32>
    %118 = arith.negf %117 : vector<8x128xf32>
    %119 = math.exp %118 : vector<8x128xf32>
    %cst_48 = arith.constant 1.000000e+00 : f32
    %120 = vector.broadcast %cst_48 : f32 to vector<8x128xf32>
    %121 = arith.addf %120, %119 : vector<8x128xf32>
    %122 = arith.divf %120, %121 : vector<8x128xf32>
    %123 = vector.extract_strided_slice %116 {offsets = [0, 128], sizes = [8, 128], strides = [1, 1]} : vector<8x512xf32> to vector<8x128xf32>
    %124 = arith.negf %123 : vector<8x128xf32>
    %125 = math.exp %124 : vector<8x128xf32>
    %cst_49 = arith.constant 1.000000e+00 : f32
    %126 = vector.broadcast %cst_49 : f32 to vector<8x128xf32>
    %127 = arith.addf %126, %125 : vector<8x128xf32>
    %128 = arith.divf %126, %127 : vector<8x128xf32>
    %129 = vector.extract_strided_slice %116 {offsets = [0, 256], sizes = [8, 128], strides = [1, 1]} : vector<8x512xf32> to vector<8x128xf32>
    %130 = math.tanh %129 : vector<8x128xf32>
    %131 = vector.extract_strided_slice %116 {offsets = [0, 384], sizes = [8, 128], strides = [1, 1]} : vector<8x512xf32> to vector<8x128xf32>
    %132 = arith.negf %131 : vector<8x128xf32>
    %133 = math.exp %132 : vector<8x128xf32>
    %cst_50 = arith.constant 1.000000e+00 : f32
    %134 = vector.broadcast %cst_50 : f32 to vector<8x128xf32>
    %135 = arith.addf %134, %133 : vector<8x128xf32>
    %136 = arith.divf %134, %135 : vector<8x128xf32>
    %137 = arith.mulf %128, %108 : vector<8x128xf32>
    %138 = arith.mulf %122, %130 : vector<8x128xf32>
    %139 = arith.addf %137, %138 : vector<8x128xf32>
    %140 = math.tanh %139 : vector<8x128xf32>
    %141 = arith.mulf %136, %140 : vector<8x128xf32>
    %c24_51 = arith.constant 24 : index
    %c0_52 = arith.constant 0 : index
    %142 = vector.load %arg12[%c24_51, %c0_52] : memref<64x128xf32, #tpu.memory_space<vmem>>, vector<8x128xf32>
    tpu.vector_store %arg12[%c24_51, %c0_52], %141 {strides = array<i32>} : memref<64x128xf32, #tpu.memory_space<vmem>>, vector<8x128xf32>,
    %c32 = arith.constant 32 : index
    %c0_53 = arith.constant 0 : index
    %143 = vector.load %arg11[%c32, %c0_53] : memref<64x512xf32, #tpu.memory_space<vmem>>, vector<8x512xf32>
    %144 = arith.truncf %141 : vector<8x128xf32> to vector<8x128xbf16>
    %c0_54 = arith.constant 0 : index
    %c0_55 = arith.constant 0 : index
    %145 = vector.load %arg6[%c0_54, %c0_55] : memref<128x512xbf16, #tpu.memory_space<vmem>>, vector<128x512xbf16>
    %cst_56 = arith.constant dense<0.000000e+00> : vector<8x512xf32>
    %146 = tpu.matmul %144, %145, %cst_56 {dimension_numbers = #tpu.dot_dimension_numbers<[1], [0], [0], [1], [0, 0, 1, 1], [], []>} : vector<8x128xbf16>, vector<128x512xbf16>, vector<8x512xf32> -> vector<8x512xf32>
    %147 = arith.addf %143, %146 : vector<8x512xf32>
    %148 = vector.extract_strided_slice %147 {offsets = [0, 0], sizes = [8, 128], strides = [1, 1]} : vector<8x512xf32> to vector<8x128xf32>
    %149 = arith.negf %148 : vector<8x128xf32>
    %150 = math.exp %149 : vector<8x128xf32>
    %cst_57 = arith.constant 1.000000e+00 : f32
    %151 = vector.broadcast %cst_57 : f32 to vector<8x128xf32>
    %152 = arith.addf %151, %150 : vector<8x128xf32>
    %153 = arith.divf %151, %152 : vector<8x128xf32>
    %154 = vector.extract_strided_slice %147 {offsets = [0, 128], sizes = [8, 128], strides = [1, 1]} : vector<8x512xf32> to vector<8x128xf32>
    %155 = arith.negf %154 : vector<8x128xf32>
    %156 = math.exp %155 : vector<8x128xf32>
    %cst_58 = arith.constant 1.000000e+00 : f32
    %157 = vector.broadcast %cst_58 : f32 to vector<8x128xf32>
    %158 = arith.addf %157, %156 : vector<8x128xf32>
    %159 = arith.divf %157, %158 : vector<8x128xf32>
    %160 = vector.extract_strided_slice %147 {offsets = [0, 256], sizes = [8, 128], strides = [1, 1]} : vector<8x512xf32> to vector<8x128xf32>
    %161 = math.tanh %160 : vector<8x128xf32>
    %162 = vector.extract_strided_slice %147 {offsets = [0, 384], sizes = [8, 128], strides = [1, 1]} : vector<8x512xf32> to vector<8x128xf32>
    %163 = arith.negf %162 : vector<8x128xf32>
    %164 = math.exp %163 : vector<8x128xf32>
    %cst_59 = arith.constant 1.000000e+00 : f32
    %165 = vector.broadcast %cst_59 : f32 to vector<8x128xf32>
    %166 = arith.addf %165, %164 : vector<8x128xf32>
    %167 = arith.divf %165, %166 : vector<8x128xf32>
    %168 = arith.mulf %159, %139 : vector<8x128xf32>
    %169 = arith.mulf %153, %161 : vector<8x128xf32>
    %170 = arith.addf %168, %169 : vector<8x128xf32>
    %171 = math.tanh %170 : vector<8x128xf32>
    %172 = arith.mulf %167, %171 : vector<8x128xf32>
    %c32_60 = arith.constant 32 : index
    %c0_61 = arith.constant 0 : index
    %173 = vector.load %arg12[%c32_60, %c0_61] : memref<64x128xf32, #tpu.memory_space<vmem>>, vector<8x128xf32>
    tpu.vector_store %arg12[%c32_60, %c0_61], %172 {strides = array<i32>} : memref<64x128xf32, #tpu.memory_space<vmem>>, vector<8x128xf32>,
    %c40 = arith.constant 40 : index
    %c0_62 = arith.constant 0 : index
    %174 = vector.load %arg11[%c40, %c0_62] : memref<64x512xf32, #tpu.memory_space<vmem>>, vector<8x512xf32>
    %175 = arith.truncf %172 : vector<8x128xf32> to vector<8x128xbf16>
    %c0_63 = arith.constant 0 : index
    %c0_64 = arith.constant 0 : index
    %176 = vector.load %arg6[%c0_63, %c0_64] : memref<128x512xbf16, #tpu.memory_space<vmem>>, vector<128x512xbf16>
    %cst_65 = arith.constant dense<0.000000e+00> : vector<8x512xf32>
    %177 = tpu.matmul %175, %176, %cst_65 {dimension_numbers = #tpu.dot_dimension_numbers<[1], [0], [0], [1], [0, 0, 1, 1], [], []>} : vector<8x128xbf16>, vector<128x512xbf16>, vector<8x512xf32> -> vector<8x512xf32>
    %178 = arith.addf %174, %177 : vector<8x512xf32>
    %179 = vector.extract_strided_slice %178 {offsets = [0, 0], sizes = [8, 128], strides = [1, 1]} : vector<8x512xf32> to vector<8x128xf32>
    %180 = arith.negf %179 : vector<8x128xf32>
    %181 = math.exp %180 : vector<8x128xf32>
    %cst_66 = arith.constant 1.000000e+00 : f32
    %182 = vector.broadcast %cst_66 : f32 to vector<8x128xf32>
    %183 = arith.addf %182, %181 : vector<8x128xf32>
    %184 = arith.divf %182, %183 : vector<8x128xf32>
    %185 = vector.extract_strided_slice %178 {offsets = [0, 128], sizes = [8, 128], strides = [1, 1]} : vector<8x512xf32> to vector<8x128xf32>
    %186 = arith.negf %185 : vector<8x128xf32>
    %187 = math.exp %186 : vector<8x128xf32>
    %cst_67 = arith.constant 1.000000e+00 : f32
    %188 = vector.broadcast %cst_67 : f32 to vector<8x128xf32>
    %189 = arith.addf %188, %187 : vector<8x128xf32>
    %190 = arith.divf %188, %189 : vector<8x128xf32>
    %191 = vector.extract_strided_slice %178 {offsets = [0, 256], sizes = [8, 128], strides = [1, 1]} : vector<8x512xf32> to vector<8x128xf32>
    %192 = math.tanh %191 : vector<8x128xf32>
    %193 = vector.extract_strided_slice %178 {offsets = [0, 384], sizes = [8, 128], strides = [1, 1]} : vector<8x512xf32> to vector<8x128xf32>
    %194 = arith.negf %193 : vector<8x128xf32>
    %195 = math.exp %194 : vector<8x128xf32>
    %cst_68 = arith.constant 1.000000e+00 : f32
    %196 = vector.broadcast %cst_68 : f32 to vector<8x128xf32>
    %197 = arith.addf %196, %195 : vector<8x128xf32>
    %198 = arith.divf %196, %197 : vector<8x128xf32>
    %199 = arith.mulf %190, %170 : vector<8x128xf32>
    %200 = arith.mulf %184, %192 : vector<8x128xf32>
    %201 = arith.addf %199, %200 : vector<8x128xf32>
    %202 = math.tanh %201 : vector<8x128xf32>
    %203 = arith.mulf %198, %202 : vector<8x128xf32>
    %c40_69 = arith.constant 40 : index
    %c0_70 = arith.constant 0 : index
    %204 = vector.load %arg12[%c40_69, %c0_70] : memref<64x128xf32, #tpu.memory_space<vmem>>, vector<8x128xf32>
    tpu.vector_store %arg12[%c40_69, %c0_70], %203 {strides = array<i32>} : memref<64x128xf32, #tpu.memory_space<vmem>>, vector<8x128xf32>,
    %c48 = arith.constant 48 : index
    %c0_71 = arith.constant 0 : index
    %205 = vector.load %arg11[%c48, %c0_71] : memref<64x512xf32, #tpu.memory_space<vmem>>, vector<8x512xf32>
    %206 = arith.truncf %203 : vector<8x128xf32> to vector<8x128xbf16>
    %c0_72 = arith.constant 0 : index
    %c0_73 = arith.constant 0 : index
    %207 = vector.load %arg6[%c0_72, %c0_73] : memref<128x512xbf16, #tpu.memory_space<vmem>>, vector<128x512xbf16>
    %cst_74 = arith.constant dense<0.000000e+00> : vector<8x512xf32>
    %208 = tpu.matmul %206, %207, %cst_74 {dimension_numbers = #tpu.dot_dimension_numbers<[1], [0], [0], [1], [0, 0, 1, 1], [], []>} : vector<8x128xbf16>, vector<128x512xbf16>, vector<8x512xf32> -> vector<8x512xf32>
    %209 = arith.addf %205, %208 : vector<8x512xf32>
    %210 = vector.extract_strided_slice %209 {offsets = [0, 0], sizes = [8, 128], strides = [1, 1]} : vector<8x512xf32> to vector<8x128xf32>
    %211 = arith.negf %210 : vector<8x128xf32>
    %212 = math.exp %211 : vector<8x128xf32>
    %cst_75 = arith.constant 1.000000e+00 : f32
    %213 = vector.broadcast %cst_75 : f32 to vector<8x128xf32>
    %214 = arith.addf %213, %212 : vector<8x128xf32>
    %215 = arith.divf %213, %214 : vector<8x128xf32>
    %216 = vector.extract_strided_slice %209 {offsets = [0, 128], sizes = [8, 128], strides = [1, 1]} : vector<8x512xf32> to vector<8x128xf32>
    %217 = arith.negf %216 : vector<8x128xf32>
    %218 = math.exp %217 : vector<8x128xf32>
    %cst_76 = arith.constant 1.000000e+00 : f32
    %219 = vector.broadcast %cst_76 : f32 to vector<8x128xf32>
    %220 = arith.addf %219, %218 : vector<8x128xf32>
    %221 = arith.divf %219, %220 : vector<8x128xf32>
    %222 = vector.extract_strided_slice %209 {offsets = [0, 256], sizes = [8, 128], strides = [1, 1]} : vector<8x512xf32> to vector<8x128xf32>
    %223 = math.tanh %222 : vector<8x128xf32>
    %224 = vector.extract_strided_slice %209 {offsets = [0, 384], sizes = [8, 128], strides = [1, 1]} : vector<8x512xf32> to vector<8x128xf32>
    %225 = arith.negf %224 : vector<8x128xf32>
    %226 = math.exp %225 : vector<8x128xf32>
    %cst_77 = arith.constant 1.000000e+00 : f32
    %227 = vector.broadcast %cst_77 : f32 to vector<8x128xf32>
    %228 = arith.addf %227, %226 : vector<8x128xf32>
    %229 = arith.divf %227, %228 : vector<8x128xf32>
    %230 = arith.mulf %221, %201 : vector<8x128xf32>
    %231 = arith.mulf %215, %223 : vector<8x128xf32>
    %232 = arith.addf %230, %231 : vector<8x128xf32>
    %233 = math.tanh %232 : vector<8x128xf32>
    %234 = arith.mulf %229, %233 : vector<8x128xf32>
    %c48_78 = arith.constant 48 : index
    %c0_79 = arith.constant 0 : index
    %235 = vector.load %arg12[%c48_78, %c0_79] : memref<64x128xf32, #tpu.memory_space<vmem>>, vector<8x128xf32>
    tpu.vector_store %arg12[%c48_78, %c0_79], %234 {strides = array<i32>} : memref<64x128xf32, #tpu.memory_space<vmem>>, vector<8x128xf32>,
    %c56 = arith.constant 56 : index
    %c0_80 = arith.constant 0 : index
    %236 = vector.load %arg11[%c56, %c0_80] : memref<64x512xf32, #tpu.memory_space<vmem>>, vector<8x512xf32>
    %237 = arith.truncf %234 : vector<8x128xf32> to vector<8x128xbf16>
    %c0_81 = arith.constant 0 : index
    %c0_82 = arith.constant 0 : index
    %238 = vector.load %arg6[%c0_81, %c0_82] : memref<128x512xbf16, #tpu.memory_space<vmem>>, vector<128x512xbf16>
    %cst_83 = arith.constant dense<0.000000e+00> : vector<8x512xf32>
    %239 = tpu.matmul %237, %238, %cst_83 {dimension_numbers = #tpu.dot_dimension_numbers<[1], [0], [0], [1], [0, 0, 1, 1], [], []>} : vector<8x128xbf16>, vector<128x512xbf16>, vector<8x512xf32> -> vector<8x512xf32>
    %240 = arith.addf %236, %239 : vector<8x512xf32>
    %241 = vector.extract_strided_slice %240 {offsets = [0, 0], sizes = [8, 128], strides = [1, 1]} : vector<8x512xf32> to vector<8x128xf32>
    %242 = arith.negf %241 : vector<8x128xf32>
    %243 = math.exp %242 : vector<8x128xf32>
    %cst_84 = arith.constant 1.000000e+00 : f32
    %244 = vector.broadcast %cst_84 : f32 to vector<8x128xf32>
    %245 = arith.addf %244, %243 : vector<8x128xf32>
    %246 = arith.divf %244, %245 : vector<8x128xf32>
    %247 = vector.extract_strided_slice %240 {offsets = [0, 128], sizes = [8, 128], strides = [1, 1]} : vector<8x512xf32> to vector<8x128xf32>
    %248 = arith.negf %247 : vector<8x128xf32>
    %249 = math.exp %248 : vector<8x128xf32>
    %cst_85 = arith.constant 1.000000e+00 : f32
    %250 = vector.broadcast %cst_85 : f32 to vector<8x128xf32>
    %251 = arith.addf %250, %249 : vector<8x128xf32>
    %252 = arith.divf %250, %251 : vector<8x128xf32>
    %253 = vector.extract_strided_slice %240 {offsets = [0, 256], sizes = [8, 128], strides = [1, 1]} : vector<8x512xf32> to vector<8x128xf32>
    %254 = math.tanh %253 : vector<8x128xf32>
    %255 = vector.extract_strided_slice %240 {offsets = [0, 384], sizes = [8, 128], strides = [1, 1]} : vector<8x512xf32> to vector<8x128xf32>
    %256 = arith.negf %255 : vector<8x128xf32>
    %257 = math.exp %256 : vector<8x128xf32>
    %cst_86 = arith.constant 1.000000e+00 : f32
    %258 = vector.broadcast %cst_86 : f32 to vector<8x128xf32>
    %259 = arith.addf %258, %257 : vector<8x128xf32>
    %260 = arith.divf %258, %259 : vector<8x128xf32>
    %261 = arith.mulf %252, %232 : vector<8x128xf32>
    %262 = arith.mulf %246, %254 : vector<8x128xf32>
    %263 = arith.addf %261, %262 : vector<8x128xf32>
    %264 = math.tanh %263 : vector<8x128xf32>
    %265 = arith.mulf %260, %264 : vector<8x128xf32>
    %c56_87 = arith.constant 56 : index
    %c0_88 = arith.constant 0 : index
    %266 = vector.load %arg12[%c56_87, %c0_88] : memref<64x128xf32, #tpu.memory_space<vmem>>, vector<8x128xf32>
    tpu.vector_store %arg12[%c56_87, %c0_88], %265 {strides = array<i32>} : memref<64x128xf32, #tpu.memory_space<vmem>>, vector<8x128xf32>,
    %c0_89 = arith.constant 0 : index
    %c0_90 = arith.constant 0 : index
    %267 = vector.load %arg12[%c0_89, %c0_90] : memref<64x128xf32, #tpu.memory_space<vmem>>, vector<64x128xf32>
    %268 = arith.truncf %267 : vector<64x128xf32> to vector<64x128xbf16>
    %c0_91 = arith.constant 0 : index
    %c0_92 = arith.constant 0 : index
    %269 = vector.load %arg8[%c0_91, %c0_92] : memref<128x128xbf16, #tpu.memory_space<vmem>>, vector<128x128xbf16>
    %cst_93 = arith.constant dense<0.000000e+00> : vector<64x128xf32>
    %270 = tpu.matmul %268, %269, %cst_93 {dimension_numbers = #tpu.dot_dimension_numbers<[1], [0], [0], [1], [0, 0, 1, 1], [], []>} : vector<64x128xbf16>, vector<128x128xbf16>, vector<64x128xf32> -> vector<64x128xf32>
    %c0_94 = arith.constant 0 : index
    %c0_95 = arith.constant 0 : index
    %271 = vector.load %arg9[%c0_94, %c0_95] : memref<1x128xf32, #tpu.memory_space<vmem>>, vector<1x128xf32>
    %272 = vector.broadcast %271 : vector<1x128xf32> to vector<64x128xf32>
    %273 = arith.addf %270, %272 : vector<64x128xf32>
    %c0_96 = arith.constant 0 : index
    %c0_97 = arith.constant 0 : index
    %274 = vector.load %arg10[%c0_96, %c0_97] : memref<64x128xf32, #tpu.memory_space<vmem>>, vector<64x128xf32>
    tpu.vector_store %arg10[%c0_96, %c0_97], %273 {strides = array<i32>} : memref<64x128xf32, #tpu.memory_space<vmem>>, vector<64x128xf32>,
    return
  }
  func.func @transform_0(%arg0: i32) -> (i32, i32) {
    %c0_i32 = arith.constant 0 : i32
    %c0_i32_0 = arith.constant 0 : i32
    %c0_i32_1 = arith.constant 0 : i32
    return %c0_i32, %c0_i32_0 : i32, i32
  }
  func.func @transform_1(%arg0: i32) -> (i32, i32) {
    %c0_i32 = arith.constant 0 : i32
    %c0_i32_0 = arith.constant 0 : i32
    %c0_i32_1 = arith.constant 0 : i32
    return %c0_i32, %c0_i32_0 : i32, i32
  }
  func.func @transform_2(%arg0: i32) -> (i32, i32) {
    %c0_i32 = arith.constant 0 : i32
    %c0_i32_0 = arith.constant 0 : i32
    %c0_i32_1 = arith.constant 0 : i32
    return %c0_i32, %c0_i32_0 : i32, i32
  }
  func.func @transform_3(%arg0: i32) -> (i32, i32) {
    %c0_i32 = arith.constant 0 : i32
    %c0_i32_0 = arith.constant 0 : i32
    %c0_i32_1 = arith.constant 0 : i32
    return %c0_i32, %c0_i32_0 : i32, i32
  }
  func.func @transform_4(%arg0: i32) -> (i32, i32) {
    %c0_i32 = arith.constant 0 : i32
    %c0_i32_0 = arith.constant 0 : i32
    %c0_i32_1 = arith.constant 0 : i32
    return %c0_i32, %c0_i32_0 : i32, i32
  }
  func.func @transform_5(%arg0: i32) -> (i32, i32) {
    %c0_i32 = arith.constant 0 : i32
    %c0_i32_0 = arith.constant 0 : i32
    %c0_i32_1 = arith.constant 0 : i32
    return %c0_i32, %c0_i32_0 : i32, i32
  }
  func.func @transform_6(%arg0: i32) -> (i32, i32) {
    %c0_i32 = arith.constant 0 : i32
    %c0_i32_0 = arith.constant 0 : i32
    %c0_i32_1 = arith.constant 0 : i32
    return %c0_i32, %c0_i32_0 : i32, i32
  }
  func.func @transform_7(%arg0: i32) -> (i32, i32) {
    %c0_i32 = arith.constant 0 : i32
    %c0_i32_0 = arith.constant 0 : i32
    %c0_i32_1 = arith.constant 0 : i32
    return %c0_i32, %c0_i32_0 : i32, i32
  }
  func.func @transform_8(%arg0: i32) -> (i32, i32) {
    %c0_i32 = arith.constant 0 : i32
    %c0_i32_0 = arith.constant 0 : i32
    %c0_i32_1 = arith.constant 0 : i32
    return %c0_i32, %c0_i32_0 : i32, i32
  }
  func.func @transform_9(%arg0: i32) -> (i32, i32) {
    %c0_i32 = arith.constant 0 : i32
    %c0_i32_0 = arith.constant 0 : i32
    %c0_i32_1 = arith.constant 0 : i32
    return %c0_i32, %c0_i32_0 : i32, i32
  }
}

</mosaic_0001>

<llo_original>
// kernel: lstm_forward.1
$region0: #{lstm_forward.1}
  #allocation0 [shape = 'u32[]', space=smem, size = 0x4, offset = 0x4, fixed_abs, tag = 'smem constant byte address 0x4 - core index']
  #allocation1 [shape = 'u32[72,128]{1,0:T(1,128)}', space=vmem, size = 0x9000, scoped, tag = 'internal scratch']
  #allocation2 [shape = 'f32[64,512]{1,0:T(8,128)}', space=vmem, size = 0x20000, scoped, tag = 'scratch operand']
  #allocation3 [shape = 'f32[64,128]{1,0:T(8,128)}', space=vmem, size = 0x8000, scoped, tag = 'scratch operand']
  %s0 = inlined_call_operand.vmem [shape: s32[64,1], index: 0, kind: input, shape index: {}]
  %s1 = inlined_call_operand.vmem [shape: f32[8,128], index: 1, kind: input, shape index: {}]
  %s2 = inlined_call_operand.vmem [shape: f32[8,128], index: 2, kind: input, shape index: {}]
  %s3 = inlined_call_operand.vmem [shape: bf16[64,128], index: 3, kind: input, shape index: {}]
  %s4 = inlined_call_operand.vmem [shape: bf16[128,512], index: 4, kind: input, shape index: {}]
  %s5 = inlined_call_operand.vmem [shape: bf16[128,512], index: 5, kind: input, shape index: {}]
  %s6 = inlined_call_operand.vmem [shape: f32[1,512], index: 6, kind: input, shape index: {}]
  %s7 = inlined_call_operand.vmem [shape: bf16[128,128], index: 7, kind: input, shape index: {}]
  %s8 = inlined_call_operand.vmem [shape: f32[1,128], index: 8, kind: input, shape index: {}]
  %s9 = inlined_call_operand.vmem [shape: f32[64,128], index: 9, kind: output, shape index: {}]
  %s10 = sld [smem:[#allocation0]]
  $region46: #{lstm_forward.1} parent=0
    _
  %s12 = ssub.s32 1, %s10
  %s13 = scalar_select 0, %s12, %s10
  // Predicated region
  $region2: #{lstm_forward.1} parent=0 // pred_check
    _
  $region3: #{lstm_forward.1} parent=0 // pred_check_branch
    %15 = sbr.rel (0) target = $region5
  $region4: #{lstm_forward.1} parent=0 // pred_region
    _
  $region5: #{lstm_forward.1} parent=0 // pred_fallthru
    _
  // Predicated region
  $region6: #{lstm_forward.1} parent=0 // pred_check
    _
  $region7: #{lstm_forward.1} parent=0 // pred_check_branch
    %17 = sbr.rel (0) target = $region9
  $region8: #{lstm_forward.1} parent=0 // pred_region
    _
  $region9: #{lstm_forward.1} parent=0 // pred_fallthru
    _
  // Predicated region
  $region10: #{lstm_forward.1} parent=0 // pred_check
    _
  $region11: #{lstm_forward.1} parent=0 // pred_check_branch
    %19 = sbr.rel (0) target = $region13
  $region12: #{lstm_forward.1} parent=0 // pred_region
    _
  $region13: #{lstm_forward.1} parent=0 // pred_fallthru
    _
  // Predicated region
  $region14: #{lstm_forward.1} parent=0 // pred_check
    _
  $region15: #{lstm_forward.1} parent=0 // pred_check_branch
    %21 = sbr.rel (0) target = $region17
  $region16: #{lstm_forward.1} parent=0 // pred_region
    _
  $region17: #{lstm_forward.1} parent=0 // pred_fallthru
    _
  // Predicated region
  $region18: #{lstm_forward.1} parent=0 // pred_check
    _
  $region19: #{lstm_forward.1} parent=0 // pred_check_branch
    %23 = sbr.rel (0) target = $region21
  $region20: #{lstm_forward.1} parent=0 // pred_region
    _
  $region21: #{lstm_forward.1} parent=0 // pred_fallthru
    _
  // Predicated region
  $region22: #{lstm_forward.1} parent=0 // pred_check
    _
  $region23: #{lstm_forward.1} parent=0 // pred_check_branch
    %25 = sbr.rel (0) target = $region25
  $region24: #{lstm_forward.1} parent=0 // pred_region
    _
  $region25: #{lstm_forward.1} parent=0 // pred_fallthru
    _
  // Predicated region
  $region26: #{lstm_forward.1} parent=0 // pred_check
    _
  $region27: #{lstm_forward.1} parent=0 // pred_check_branch
    %27 = sbr.rel (0) target = $region29
  $region28: #{lstm_forward.1} parent=0 // pred_region
    _
  $region29: #{lstm_forward.1} parent=0 // pred_fallthru
    _
  // Predicated region
  $region30: #{lstm_forward.1} parent=0 // pred_check
    _
  $region31: #{lstm_forward.1} parent=0 // pred_check_branch
    %29 = sbr.rel (0) target = $region33
  $region32: #{lstm_forward.1} parent=0 // pred_region
    _
  $region33: #{lstm_forward.1} parent=0 // pred_fallthru
    _
  // Predicated region
  $region34: #{lstm_forward.1} parent=0 // pred_check
    _
  $region35: #{lstm_forward.1} parent=0 // pred_check_branch
    %31 = sbr.rel (0) target = $region37
  $region36: #{lstm_forward.1} parent=0 // pred_region
    _
  $region37: #{lstm_forward.1} parent=0 // pred_fallthru
    _
  %v33 = vld [vmem:[%s0] sm:$0xff]
  %v34 = vld [vmem:[%s0 + $0x8] sm:$0xff]
  %v35 = vld [vmem:[%s0 + $0x10] sm:$0xff]
  %v36 = vld [vmem:[%s0 + $0x18] sm:$0xff]
  %v37 = vld [vmem:[%s0 + $0x20] sm:$0xff]
  %v38 = vld [vmem:[%s0 + $0x28] sm:$0xff]
  %v39 = vld [vmem:[%s0 + $0x30] sm:$0xff]
  %v40 = vld [vmem:[%s0 + $0x38] sm:$0xff]
  %v41 = vlaneseq
  %v42 = vand.u32 %v41, 127
  %43 = vset.pattern.permute.xlu0 0
  %44 = vperm.xlu0 %43, %v33
  %v45 = vpop.permute.xlu0 %44
  %46 = vset.pattern.permute.xlu0 0
  %47 = vperm.xlu0 %46, %v34
  %v48 = vpop.permute.xlu0 %47
  %49 = vset.pattern.permute.xlu0 0
  %50 = vperm.xlu0 %49, %v35
  %v51 = vpop.permute.xlu0 %50
  %52 = vset.pattern.permute.xlu0 0
  %53 = vperm.xlu0 %52, %v36
  %v54 = vpop.permute.xlu0 %53
  %55 = vset.pattern.permute.xlu0 0
  %56 = vperm.xlu0 %55, %v37
  %v57 = vpop.permute.xlu0 %56
  %58 = vset.pattern.permute.xlu0 0
  %59 = vperm.xlu0 %58, %v38
  %v60 = vpop.permute.xlu0 %59
  %61 = vset.pattern.permute.xlu0 0
  %62 = vperm.xlu0 %61, %v39
  %v63 = vpop.permute.xlu0 %62
  %64 = vset.pattern.permute.xlu0 0
  %65 = vperm.xlu0 %64, %v40
  %v66 = vpop.permute.xlu0 %65
  %vm67 = vcmp.eq.s32.totalorder %v42, %v45
  %vm68 = vcmp.eq.s32.totalorder %v42, %v48
  %vm69 = vcmp.eq.s32.totalorder %v42, %v51
  %vm70 = vcmp.eq.s32.totalorder %v42, %v54
  %vm71 = vcmp.eq.s32.totalorder %v42, %v57
  %vm72 = vcmp.eq.s32.totalorder %v42, %v60
  %vm73 = vcmp.eq.s32.totalorder %v42, %v63
  %vm74 = vcmp.eq.s32.totalorder %v42, %v66
  %v75 = vsel %vm67, 1.0, 0.0
  %v76 = vsel %vm68, 1.0, 0.0
  %v77 = vsel %vm69, 1.0, 0.0
  %v78 = vsel %vm70, 1.0, 0.0
  %v79 = vsel %vm71, 1.0, 0.0
  %v80 = vsel %vm72, 1.0, 0.0
  %v81 = vsel %vm73, 1.0, 0.0
  %v82 = vsel %vm74, 1.0, 0.0
  %v83 = vpack.c.bf16 %v76, %v75
  %v84 = vpack.c.bf16 %v78, %v77
  %v85 = vpack.c.bf16 %v80, %v79
  %v86 = vpack.c.bf16 %v82, %v81
  %v87 = vld [vmem:[%s3] sm:$0xf]
  %v88 = vld [vmem:[%s3 + $0x4] sm:$0xf]
  %v89 = vld [vmem:[%s3 + $0x8] sm:$0xf]
  %v90 = vld [vmem:[%s3 + $0xc] sm:$0xf]
  %v91 = vld [vmem:[%s3 + $0x10] sm:$0xf]
  %v92 = vld [vmem:[%s3 + $0x14] sm:$0xf]
  %v93 = vld [vmem:[%s3 + $0x18] sm:$0xf]
  %v94 = vld [vmem:[%s3 + $0x1c] sm:$0xf]
  %v103 = vunpack.c.l.b16 %v87
  %v104 = vunpack.c.l.b16 %v88
  %v105 = vunpack.c.l.b16 %v89
  %v106 = vunpack.c.l.b16 %v90
  %v107 = vunpack.c.l.b16 %v91
  %v108 = vunpack.c.l.b16 %v92
  %v109 = vunpack.c.l.b16 %v93
  %v110 = vunpack.c.l.b16 %v94
  %v111 = vpack.c.b16 %v104, %v103
  %v112 = vpack.c.b16 %v106, %v105
  %v113 = vpack.c.b16 %v108, %v107
  %v114 = vpack.c.b16 %v110, %v109
  %vm119 = vcmask 523264
  %v121 = vsel %vm119, %v83, 0
  %v124 = vsel %vm119, %v84, 0
  %v127 = vsel %vm119, %v85, 0
  %v130 = vsel %vm119, %v86, 0
  %132 = vmatpush.bf16.msra.mxu0 0
  %133 = vmatpush.bf16.msra.mxu0 0
  %134 = vmatpush.bf16.msra.mxu0 0
  %135 = vmatpush.bf16.msra.mxu0 0
  %136 = vmatpush.bf16.msra.mxu0 %v114
  %137 = vmatpush.bf16.msra.mxu0 %v113
  %138 = vmatpush.bf16.msra.mxu0 %v112
  %139 = vmatpush.bf16.msra.mxu0 %v111
  %140 = vmatmul.bf16.gmra.mxu0 %v121
  %v141 = vpop.f32.mrf.mxu0
  %v142 = vadd.f32 0.0, %v141
  %v143 = vpop.f32.mrf.mxu0
  %v144 = vadd.f32 0.0, %v143
  %145 = vmatmul.bf16.gmra.mxu0 %v124
  %v146 = vpop.f32.mrf.mxu0
  %v147 = vadd.f32 0.0, %v146
  %v148 = vpop.f32.mrf.mxu0
  %v149 = vadd.f32 0.0, %v148
  %150 = vmatmul.bf16.gmra.mxu0 %v127
  %v151 = vpop.f32.mrf.mxu0
  %v152 = vadd.f32 0.0, %v151
  %v153 = vpop.f32.mrf.mxu0
  %v154 = vadd.f32 0.0, %v153
  %155 = vmatmul.bf16.gmra.mxu0 %v130
  %v156 = vpop.f32.mrf.mxu0
  %v157 = vadd.f32 0.0, %v156
  %v158 = vpop.f32.mrf.mxu0
  %v159 = vadd.f32 0.0, %v158
  %160 = vdwg.mxu0
  %v161 = vpack.c.bf16 %v144, %v142
  %v162 = vpack.c.bf16 %v149, %v147
  %v163 = vpack.c.bf16 %v154, %v152
  %v164 = vpack.c.bf16 %v159, %v157
  %v165 = vld [vmem:[%s4] sm:$0xff]
  %v166 = vld [vmem:[%s4 + $0x8] sm:$0xff]
  %v167 = vld [vmem:[%s4 + $0x10] sm:$0xff]
  %v168 = vld [vmem:[%s4 + $0x18] sm:$0xff]
  %v169 = vld [vmem:[%s4 + $0x20] sm:$0xff]
  %v170 = vld [vmem:[%s4 + $0x28] sm:$0xff]
  %v171 = vld [vmem:[%s4 + $0x30] sm:$0xff]
  %v172 = vld [vmem:[%s4 + $0x38] sm:$0xff]
  %v173 = vld [vmem:[%s4 + $0x40] sm:$0xff]
  %v174 = vld [vmem:[%s4 + $0x48] sm:$0xff]
  %v175 = vld [vmem:[%s4 + $0x50] sm:$0xff]
  %v176 = vld [vmem:[%s4 + $0x58] sm:$0xff]
  %v177 = vld [vmem:[%s4 + $0x60] sm:$0xff]
  %v178 = vld [vmem:[%s4 + $0x68] sm:$0xff]
  %v179 = vld [vmem:[%s4 + $0x70] sm:$0xff]
  %v180 = vld [vmem:[%s4 + $0x78] sm:$0xff]
  %v181 = vld [vmem:[%s4 + $0x80] sm:$0xff]
  %v182 = vld [vmem:[%s4 + $0x88] sm:$0xff]
  %v183 = vld [vmem:[%s4 + $0x90] sm:$0xff]
  %v184 = vld [vmem:[%s4 + $0x98] sm:$0xff]
  %v185 = vld [vmem:[%s4 + $0xa0] sm:$0xff]
  %v186 = vld [vmem:[%s4 + $0xa8] sm:$0xff]
  %v187 = vld [vmem:[%s4 + $0xb0] sm:$0xff]
  %v188 = vld [vmem:[%s4 + $0xb8] sm:$0xff]
  %v189 = vld [vmem:[%s4 + $0xc0] sm:$0xff]
  %v190 = vld [vmem:[%s4 + $0xc8] sm:$0xff]
  %v191 = vld [vmem:[%s4 + $0xd0] sm:$0xff]
  %v192 = vld [vmem:[%s4 + $0xd8] sm:$0xff]
  %v193 = vld [vmem:[%s4 + $0xe0] sm:$0xff]
  %v194 = vld [vmem:[%s4 + $0xe8] sm:$0xff]
  %v195 = vld [vmem:[%s4 + $0xf0] sm:$0xff]
  %v196 = vld [vmem:[%s4 + $0xf8] sm:$0xff]
  %v197 = vld [vmem:[%s6] sm:$0xf]
  %v199 = vperm.slane %v197, 0
  %v200 = vperm.slane %v197, 1
  %v201 = vperm.slane %v197, 2
  %v202 = vperm.slane %v197, 3
  %v239 = vunpack.c.l.b16 %v165
  %v240 = vunpack.c.h.b16 %v165
  %v241 = vunpack.c.l.b16 %v166
  %v242 = vunpack.c.h.b16 %v166
  %v243 = vunpack.c.l.b16 %v167
  %v244 = vunpack.c.h.b16 %v167
  %v245 = vunpack.c.l.b16 %v168
  %v246 = vunpack.c.h.b16 %v168
  %v247 = vunpack.c.l.b16 %v169
  %v248 = vunpack.c.h.b16 %v169
  %v249 = vunpack.c.l.b16 %v170
  %v250 = vunpack.c.h.b16 %v170
  %v251 = vunpack.c.l.b16 %v171
  %v252 = vunpack.c.h.b16 %v171
  %v253 = vunpack.c.l.b16 %v172
  %v254 = vunpack.c.h.b16 %v172
  %v255 = vunpack.c.l.b16 %v173
  %v256 = vunpack.c.h.b16 %v173
  %v257 = vunpack.c.l.b16 %v174
  %v258 = vunpack.c.h.b16 %v174
  %v259 = vunpack.c.l.b16 %v175
  %v260 = vunpack.c.h.b16 %v175
  %v261 = vunpack.c.l.b16 %v176
  %v262 = vunpack.c.h.b16 %v176
  %v263 = vunpack.c.l.b16 %v177
  %v264 = vunpack.c.h.b16 %v177
  %v265 = vunpack.c.l.b16 %v178
  %v266 = vunpack.c.h.b16 %v178
  %v267 = vunpack.c.l.b16 %v179
  %v268 = vunpack.c.h.b16 %v179
  %v269 = vunpack.c.l.b16 %v180
  %v270 = vunpack.c.h.b16 %v180
  %v271 = vunpack.c.l.b16 %v181
  %v272 = vunpack.c.h.b16 %v181
  %v273 = vunpack.c.l.b16 %v182
  %v274 = vunpack.c.h.b16 %v182
  %v275 = vunpack.c.l.b16 %v183
  %v276 = vunpack.c.h.b16 %v183
  %v277 = vunpack.c.l.b16 %v184
  %v278 = vunpack.c.h.b16 %v184
  %v279 = vunpack.c.l.b16 %v185
  %v280 = vunpack.c.h.b16 %v185
  %v281 = vunpack.c.l.b16 %v186
  %v282 = vunpack.c.h.b16 %v186
  %v283 = vunpack.c.l.b16 %v187
  %v284 = vunpack.c.h.b16 %v187
  %v285 = vunpack.c.l.b16 %v188
  %v286 = vunpack.c.h.b16 %v188
  %v287 = vunpack.c.l.b16 %v189
  %v288 = vunpack.c.h.b16 %v189
  %v289 = vunpack.c.l.b16 %v190
  %v290 = vunpack.c.h.b16 %v190
  %v291 = vunpack.c.l.b16 %v191
  %v292 = vunpack.c.h.b16 %v191
  %v293 = vunpack.c.l.b16 %v192
  %v294 = vunpack.c.h.b16 %v192
  %v295 = vunpack.c.l.b16 %v193
  %v296 = vunpack.c.h.b16 %v193
  %v297 = vunpack.c.l.b16 %v194
  %v298 = vunpack.c.h.b16 %v194
  %v299 = vunpack.c.l.b16 %v195
  %v300 = vunpack.c.h.b16 %v195
  %v301 = vunpack.c.l.b16 %v196
  %v302 = vunpack.c.h.b16 %v196
  %v303 = vpack.c.b16 %v243, %v239
  %v304 = vpack.c.b16 %v244, %v240
  %v305 = vpack.c.b16 %v245, %v241
  %v306 = vpack.c.b16 %v246, %v242
  %v307 = vpack.c.b16 %v251, %v247
  %v308 = vpack.c.b16 %v252, %v248
  %v309 = vpack.c.b16 %v253, %v249
  %v310 = vpack.c.b16 %v254, %v250
  %v311 = vpack.c.b16 %v259, %v255
  %v312 = vpack.c.b16 %v260, %v256
  %v313 = vpack.c.b16 %v261, %v257
  %v314 = vpack.c.b16 %v262, %v258
  %v315 = vpack.c.b16 %v267, %v263
  %v316 = vpack.c.b16 %v268, %v264
  %v317 = vpack.c.b16 %v269, %v265
  %v318 = vpack.c.b16 %v270, %v266
  %v319 = vpack.c.b16 %v275, %v271
  %v320 = vpack.c.b16 %v276, %v272
  %v321 = vpack.c.b16 %v277, %v273
  %v322 = vpack.c.b16 %v278, %v274
  %v323 = vpack.c.b16 %v283, %v279
  %v324 = vpack.c.b16 %v284, %v280
  %v325 = vpack.c.b16 %v285, %v281
  %v326 = vpack.c.b16 %v286, %v282
  %v327 = vpack.c.b16 %v291, %v287
  %v328 = vpack.c.b16 %v292, %v288
  %v329 = vpack.c.b16 %v293, %v289
  %v330 = vpack.c.b16 %v294, %v290
  %v331 = vpack.c.b16 %v299, %v295
  %v332 = vpack.c.b16 %v300, %v296
  %v333 = vpack.c.b16 %v301, %v297
  %v334 = vpack.c.b16 %v302, %v298
  %367 = vmatpush.bf16.msra.mxu0 %v331
  %368 = vmatpush.bf16.msra.mxu0 %v327
  %369 = vmatpush.bf16.msra.mxu0 %v323
  %370 = vmatpush.bf16.msra.mxu0 %v319
  %371 = vmatpush.bf16.msra.mxu0 %v315
  %372 = vmatpush.bf16.msra.mxu0 %v311
  %373 = vmatpush.bf16.msra.mxu0 %v307
  %374 = vmatpush.bf16.msra.mxu0 %v303
  %375 = vmatmul.bf16.gmra.mxu0 %v161
  %v376 = vpop.f32.mrf.mxu0
  %v377 = vadd.f32 %v199, %v376
  %v378 = vpop.f32.mrf.mxu0
  %v379 = vadd.f32 %v199, %v378
  %380 = vmatmul.bf16.gmra.mxu0 %v162
  %v381 = vpop.f32.mrf.mxu0
  %v382 = vadd.f32 %v199, %v381
  %v383 = vpop.f32.mrf.mxu0
  %v384 = vadd.f32 %v199, %v383
  %385 = vmatmul.bf16.gmra.mxu0 %v163
  %v386 = vpop.f32.mrf.mxu0
  %v387 = vadd.f32 %v199, %v386
  %v388 = vpop.f32.mrf.mxu0
  %v389 = vadd.f32 %v199, %v388
  %390 = vmatmul.bf16.gmra.mxu0 %v164
  %v391 = vpop.f32.mrf.mxu0
  %v392 = vadd.f32 %v199, %v391
  %v393 = vpop.f32.mrf.mxu0
  %v394 = vadd.f32 %v199, %v393
  %395 = vdwg.mxu0
  %396 = vmatpush.bf16.msra.mxu0 %v332
  %397 = vmatpush.bf16.msra.mxu0 %v328
  %398 = vmatpush.bf16.msra.mxu0 %v324
  %399 = vmatpush.bf16.msra.mxu0 %v320
  %400 = vmatpush.bf16.msra.mxu0 %v316
  %401 = vmatpush.bf16.msra.mxu0 %v312
  %402 = vmatpush.bf16.msra.mxu0 %v308
  %403 = vmatpush.bf16.msra.mxu0 %v304
  %404 = vmatmul.bf16.gmra.mxu0 %v161
  %v405 = vpop.f32.mrf.mxu0
  %v406 = vadd.f32 %v200, %v405
  %v407 = vpop.f32.mrf.mxu0
  %v408 = vadd.f32 %v200, %v407
  %409 = vmatmul.bf16.gmra.mxu0 %v162
  %v410 = vpop.f32.mrf.mxu0
  %v411 = vadd.f32 %v200, %v410
  %v412 = vpop.f32.mrf.mxu0
  %v413 = vadd.f32 %v200, %v412
  %414 = vmatmul.bf16.gmra.mxu0 %v163
  %v415 = vpop.f32.mrf.mxu0
  %v416 = vadd.f32 %v200, %v415
  %v417 = vpop.f32.mrf.mxu0
  %v418 = vadd.f32 %v200, %v417
  %419 = vmatmul.bf16.gmra.mxu0 %v164
  %v420 = vpop.f32.mrf.mxu0
  %v421 = vadd.f32 %v200, %v420
  %v422 = vpop.f32.mrf.mxu0
  %v423 = vadd.f32 %v200, %v422
  %424 = vdwg.mxu0
  %425 = vmatpush.bf16.msra.mxu0 %v333
  %426 = vmatpush.bf16.msra.mxu0 %v329
  %427 = vmatpush.bf16.msra.mxu0 %v325
  %428 = vmatpush.bf16.msra.mxu0 %v321
  %429 = vmatpush.bf16.msra.mxu0 %v317
  %430 = vmatpush.bf16.msra.mxu0 %v313
  %431 = vmatpush.bf16.msra.mxu0 %v309
  %432 = vmatpush.bf16.msra.mxu0 %v305
  %433 = vmatmul.bf16.gmra.mxu0 %v161
  %v434 = vpop.f32.mrf.mxu0
  %v435 = vadd.f32 %v201, %v434
  %v436 = vpop.f32.mrf.mxu0
  %v437 = vadd.f32 %v201, %v436
  %438 = vmatmul.bf16.gmra.mxu0 %v162
  %v439 = vpop.f32.mrf.mxu0
  %v440 = vadd.f32 %v201, %v439
  %v441 = vpop.f32.mrf.mxu0
  %v442 = vadd.f32 %v201, %v441
  %443 = vmatmul.bf16.gmra.mxu0 %v163
  %v444 = vpop.f32.mrf.mxu0
  %v445 = vadd.f32 %v201, %v444
  %v446 = vpop.f32.mrf.mxu0
  %v447 = vadd.f32 %v201, %v446
  %448 = vmatmul.bf16.gmra.mxu0 %v164
  %v449 = vpop.f32.mrf.mxu0
  %v450 = vadd.f32 %v201, %v449
  %v451 = vpop.f32.mrf.mxu0
  %v452 = vadd.f32 %v201, %v451
  %453 = vdwg.mxu0
  %454 = vmatpush.bf16.msra.mxu0 %v334
  %455 = vmatpush.bf16.msra.mxu0 %v330
  %456 = vmatpush.bf16.msra.mxu0 %v326
  %457 = vmatpush.bf16.msra.mxu0 %v322
  %458 = vmatpush.bf16.msra.mxu0 %v318
  %459 = vmatpush.bf16.msra.mxu0 %v314
  %460 = vmatpush.bf16.msra.mxu0 %v310
  %461 = vmatpush.bf16.msra.mxu0 %v306
  %462 = vmatmul.bf16.gmra.mxu0 %v161
  %v463 = vpop.f32.mrf.mxu0
  %v464 = vadd.f32 %v202, %v463
  %v465 = vpop.f32.mrf.mxu0
  %v466 = vadd.f32 %v202, %v465
  %467 = vmatmul.bf16.gmra.mxu0 %v162
  %v468 = vpop.f32.mrf.mxu0
  %v469 = vadd.f32 %v202, %v468
  %v470 = vpop.f32.mrf.mxu0
  %v471 = vadd.f32 %v202, %v470
  %472 = vmatmul.bf16.gmra.mxu0 %v163
  %v473 = vpop.f32.mrf.mxu0
  %v474 = vadd.f32 %v202, %v473
  %v475 = vpop.f32.mrf.mxu0
  %v476 = vadd.f32 %v202, %v475
  %477 = vmatmul.bf16.gmra.mxu0 %v164
  %v478 = vpop.f32.mrf.mxu0
  %v479 = vadd.f32 %v202, %v478
  %v480 = vpop.f32.mrf.mxu0
  %v481 = vadd.f32 %v202, %v480
  %482 = vdwg.mxu0
  %483 = vst [vmem:[#allocation2] sm:$0xff] %v377
  %484 = vst [vmem:[#allocation2 + $0x8] sm:$0xff] %v406
  %485 = vst [vmem:[#allocation2 + $0x10] sm:$0xff] %v435
  %486 = vst [vmem:[#allocation2 + $0x18] sm:$0xff] %v464
  %487 = vst [vmem:[#allocation2 + $0x20] sm:$0xff] %v379
  %488 = vst [vmem:[#allocation2 + $0x28] sm:$0xff] %v408
  %489 = vst [vmem:[#allocation2 + $0x30] sm:$0xff] %v437
  %490 = vst [vmem:[#allocation2 + $0x38] sm:$0xff] %v466
  %491 = vst [vmem:[#allocation2 + $0x40] sm:$0xff] %v382
  %492 = vst [vmem:[#allocation2 + $0x48] sm:$0xff] %v411
  %493 = vst [vmem:[#allocation2 + $0x50] sm:$0xff] %v440
  %494 = vst [vmem:[#allocation2 + $0x58] sm:$0xff] %v469
  %495 = vst [vmem:[#allocation2 + $0x60] sm:$0xff] %v384
  %496 = vst [vmem:[#allocation2 + $0x68] sm:$0xff] %v413
  %497 = vst [vmem:[#allocation2 + $0x70] sm:$0xff] %v442
  %498 = vst [vmem:[#allocation2 + $0x78] sm:$0xff] %v471
  %499 = vst [vmem:[#allocation2 + $0x80] sm:$0xff] %v387
  %500 = vst [vmem:[#allocation2 + $0x88] sm:$0xff] %v416
  %501 = vst [vmem:[#allocation2 + $0x90] sm:$0xff] %v445
  %502 = vst [vmem:[#allocation2 + $0x98] sm:$0xff] %v474
  %503 = vst [vmem:[#allocation2 + $0xa0] sm:$0xff] %v389
  %504 = vst [vmem:[#allocation2 + $0xa8] sm:$0xff] %v418
  %505 = vst [vmem:[#allocation2 + $0xb0] sm:$0xff] %v447
  %506 = vst [vmem:[#allocation2 + $0xb8] sm:$0xff] %v476
  %507 = vst [vmem:[#allocation2 + $0xc0] sm:$0xff] %v392
  %508 = vst [vmem:[#allocation2 + $0xc8] sm:$0xff] %v421
  %509 = vst [vmem:[#allocation2 + $0xd0] sm:$0xff] %v450
  %510 = vst [vmem:[#allocation2 + $0xd8] sm:$0xff] %v479
  %511 = vst [vmem:[#allocation2 + $0xe0] sm:$0xff] %v394
  %512 = vst [vmem:[#allocation2 + $0xe8] sm:$0xff] %v423
  %513 = vst [vmem:[#allocation2 + $0xf0] sm:$0xff] %v452
  %514 = vst [vmem:[#allocation2 + $0xf8] sm:$0xff] %v481
  %v515 = vld [vmem:[%s1] sm:$0xff]
  %v516 = vld [vmem:[%s2] sm:$0xff]
  %v517 = vld [vmem:[#allocation2] sm:$0xff]
  %v518 = vld [vmem:[#allocation2 + $0x8] sm:$0xff]
  %v519 = vld [vmem:[#allocation2 + $0x10] sm:$0xff]
  %v520 = vld [vmem:[#allocation2 + $0x18] sm:$0xff]
  %v521 = vpack.c.bf16 %v515, %v515
  %v522 = vld [vmem:[%s5] sm:$0xff]
  %v523 = vld [vmem:[%s5 + $0x8] sm:$0xff]
  %v524 = vld [vmem:[%s5 + $0x10] sm:$0xff]
  %v525 = vld [vmem:[%s5 + $0x18] sm:$0xff]
  %v526 = vld [vmem:[%s5 + $0x20] sm:$0xff]
  %v527 = vld [vmem:[%s5 + $0x28] sm:$0xff]
  %v528 = vld [vmem:[%s5 + $0x30] sm:$0xff]
  %v529 = vld [vmem:[%s5 + $0x38] sm:$0xff]
  %v530 = vld [vmem:[%s5 + $0x40] sm:$0xff]
  %v531 = vld [vmem:[%s5 + $0x48] sm:$0xff]
  %v532 = vld [vmem:[%s5 + $0x50] sm:$0xff]
  %v533 = vld [vmem:[%s5 + $0x58] sm:$0xff]
  %v534 = vld [vmem:[%s5 + $0x60] sm:$0xff]
  %v535 = vld [vmem:[%s5 + $0x68] sm:$0xff]
  %v536 = vld [vmem:[%s5 + $0x70] sm:$0xff]
  %v537 = vld [vmem:[%s5 + $0x78] sm:$0xff]
  %v538 = vld [vmem:[%s5 + $0x80] sm:$0xff]
  %v539 = vld [vmem:[%s5 + $0x88] sm:$0xff]
  %v540 = vld [vmem:[%s5 + $0x90] sm:$0xff]
  %v541 = vld [vmem:[%s5 + $0x98] sm:$0xff]
  %v542 = vld [vmem:[%s5 + $0xa0] sm:$0xff]
  %v543 = vld [vmem:[%s5 + $0xa8] sm:$0xff]
  %v544 = vld [vmem:[%s5 + $0xb0] sm:$0xff]
  %v545 = vld [vmem:[%s5 + $0xb8] sm:$0xff]
  %v546 = vld [vmem:[%s5 + $0xc0] sm:$0xff]
  %v547 = vld [vmem:[%s5 + $0xc8] sm:$0xff]
  %v548 = vld [vmem:[%s5 + $0xd0] sm:$0xff]
  %v549 = vld [vmem:[%s5 + $0xd8] sm:$0xff]
  %v550 = vld [vmem:[%s5 + $0xe0] sm:$0xff]
  %v551 = vld [vmem:[%s5 + $0xe8] sm:$0xff]
  %v552 = vld [vmem:[%s5 + $0xf0] sm:$0xff]
  %v553 = vld [vmem:[%s5 + $0xf8] sm:$0xff]
  %v586 = vunpack.c.l.b16 %v522
  %v587 = vunpack.c.h.b16 %v522
  %v588 = vunpack.c.l.b16 %v523
  %v589 = vunpack.c.h.b16 %v523
  %v590 = vunpack.c.l.b16 %v524
  %v591 = vunpack.c.h.b16 %v524
  %v592 = vunpack.c.l.b16 %v525
  %v593 = vunpack.c.h.b16 %v525
  %v594 = vunpack.c.l.b16 %v526
  %v595 = vunpack.c.h.b16 %v526
  %v596 = vunpack.c.l.b16 %v527
  %v597 = vunpack.c.h.b16 %v527
  %v598 = vunpack.c.l.b16 %v528
  %v599 = vunpack.c.h.b16 %v528
  %v600 = vunpack.c.l.b16 %v529
  %v601 = vunpack.c.h.b16 %v529
  %v602 = vunpack.c.l.b16 %v530
  %v603 = vunpack.c.h.b16 %v530
  %v604 = vunpack.c.l.b16 %v531
  %v605 = vunpack.c.h.b16 %v531
  %v606 = vunpack.c.l.b16 %v532
  %v607 = vunpack.c.h.b16 %v532
  %v608 = vunpack.c.l.b16 %v533
  %v609 = vunpack.c.h.b16 %v533
  %v610 = vunpack.c.l.b16 %v534
  %v611 = vunpack.c.h.b16 %v534
  %v612 = vunpack.c.l.b16 %v535
  %v613 = vunpack.c.h.b16 %v535
  %v614 = vunpack.c.l.b16 %v536
  %v615 = vunpack.c.h.b16 %v536
  %v616 = vunpack.c.l.b16 %v537
  %v617 = vunpack.c.h.b16 %v537
  %v618 = vunpack.c.l.b16 %v538
  %v619 = vunpack.c.h.b16 %v538
  %v620 = vunpack.c.l.b16 %v539
  %v621 = vunpack.c.h.b16 %v539
  %v622 = vunpack.c.l.b16 %v540
  %v623 = vunpack.c.h.b16 %v540
  %v624 = vunpack.c.l.b16 %v541
  %v625 = vunpack.c.h.b16 %v541
  %v626 = vunpack.c.l.b16 %v542
  %v627 = vunpack.c.h.b16 %v542
  %v628 = vunpack.c.l.b16 %v543
  %v629 = vunpack.c.h.b16 %v543
  %v630 = vunpack.c.l.b16 %v544
  %v631 = vunpack.c.h.b16 %v544
  %v632 = vunpack.c.l.b16 %v545
  %v633 = vunpack.c.h.b16 %v545
  %v634 = vunpack.c.l.b16 %v546
  %v635 = vunpack.c.h.b16 %v546
  %v636 = vunpack.c.l.b16 %v547
  %v637 = vunpack.c.h.b16 %v547
  %v638 = vunpack.c.l.b16 %v548
  %v639 = vunpack.c.h.b16 %v548
  %v640 = vunpack.c.l.b16 %v549
  %v641 = vunpack.c.h.b16 %v549
  %v642 = vunpack.c.l.b16 %v550
  %v643 = vunpack.c.h.b16 %v550
  %v644 = vunpack.c.l.b16 %v551
  %v645 = vunpack.c.h.b16 %v551
  %v646 = vunpack.c.l.b16 %v552
  %v647 = vunpack.c.h.b16 %v552
  %v648 = vunpack.c.l.b16 %v553
  %v649 = vunpack.c.h.b16 %v553
  %v650 = vpack.c.b16 %v590, %v586
  %v651 = vpack.c.b16 %v591, %v587
  %v652 = vpack.c.b16 %v592, %v588
  %v653 = vpack.c.b16 %v593, %v589
  %v654 = vpack.c.b16 %v598, %v594
  %v655 = vpack.c.b16 %v599, %v595
  %v656 = vpack.c.b16 %v600, %v596
  %v657 = vpack.c.b16 %v601, %v597
  %v658 = vpack.c.b16 %v606, %v602
  %v659 = vpack.c.b16 %v607, %v603
  %v660 = vpack.c.b16 %v608, %v604
  %v661 = vpack.c.b16 %v609, %v605
  %v662 = vpack.c.b16 %v614, %v610
  %v663 = vpack.c.b16 %v615, %v611
  %v664 = vpack.c.b16 %v616, %v612
  %v665 = vpack.c.b16 %v617, %v613
  %v666 = vpack.c.b16 %v622, %v618
  %v667 = vpack.c.b16 %v623, %v619
  %v668 = vpack.c.b16 %v624, %v620
  %v669 = vpack.c.b16 %v625, %v621
  %v670 = vpack.c.b16 %v630, %v626
  %v671 = vpack.c.b16 %v631, %v627
  %v672 = vpack.c.b16 %v632, %v628
  %v673 = vpack.c.b16 %v633, %v629
  %v674 = vpack.c.b16 %v638, %v634
  %v675 = vpack.c.b16 %v639, %v635
  %v676 = vpack.c.b16 %v640, %v636
  %v677 = vpack.c.b16 %v641, %v637
  %v678 = vpack.c.b16 %v646, %v642
  %v679 = vpack.c.b16 %v647, %v643
  %v680 = vpack.c.b16 %v648, %v644
  %v681 = vpack.c.b16 %v649, %v645
  %714 = vmatpush.bf16.msra.mxu0 %v678
  %715 = vmatpush.bf16.msra.mxu0 %v674
  %716 = vmatpush.bf16.msra.mxu0 %v670
  %717 = vmatpush.bf16.msra.mxu0 %v666
  %718 = vmatpush.bf16.msra.mxu0 %v662
  %719 = vmatpush.bf16.msra.mxu0 %v658
  %720 = vmatpush.bf16.msra.mxu0 %v654
  %721 = vmatpush.bf16.msra.mxu0 %v650
  %722 = vmatmul.bf16.gmra.mxu0 %v521
  %v723 = vpop.f32.mrf.mxu0
  %v724 = vadd.f32 0.0, %v723
  %v725 = vpop.f32.mrf.mxu0
  %726 = vdwg.mxu0
  %727 = vmatpush.bf16.msra.mxu0 %v679
  %728 = vmatpush.bf16.msra.mxu0 %v675
  %729 = vmatpush.bf16.msra.mxu0 %v671
  %730 = vmatpush.bf16.msra.mxu0 %v667
  %731 = vmatpush.bf16.msra.mxu0 %v663
  %732 = vmatpush.bf16.msra.mxu0 %v659
  %733 = vmatpush.bf16.msra.mxu0 %v655
  %734 = vmatpush.bf16.msra.mxu0 %v651
  %735 = vmatmul.bf16.gmra.mxu0 %v521
  %v736 = vpop.f32.mrf.mxu0
  %v737 = vadd.f32 0.0, %v736
  %v738 = vpop.f32.mrf.mxu0
  %739 = vdwg.mxu0
  %740 = vmatpush.bf16.msra.mxu0 %v680
  %741 = vmatpush.bf16.msra.mxu0 %v676
  %742 = vmatpush.bf16.msra.mxu0 %v672
  %743 = vmatpush.bf16.msra.mxu0 %v668
  %744 = vmatpush.bf16.msra.mxu0 %v664
  %745 = vmatpush.bf16.msra.mxu0 %v660
  %746 = vmatpush.bf16.msra.mxu0 %v656
  %747 = vmatpush.bf16.msra.mxu0 %v652
  %748 = vmatmul.bf16.gmra.mxu0 %v521
  %v749 = vpop.f32.mrf.mxu0
  %v750 = vadd.f32 0.0, %v749
  %v751 = vpop.f32.mrf.mxu0
  %752 = vdwg.mxu0
  %753 = vmatpush.bf16.msra.mxu0 %v681
  %754 = vmatpush.bf16.msra.mxu0 %v677
  %755 = vmatpush.bf16.msra.mxu0 %v673
  %756 = vmatpush.bf16.msra.mxu0 %v669
  %757 = vmatpush.bf16.msra.mxu0 %v665
  %758 = vmatpush.bf16.msra.mxu0 %v661
  %759 = vmatpush.bf16.msra.mxu0 %v657
  %760 = vmatpush.bf16.msra.mxu0 %v653
  %761 = vmatmul.bf16.gmra.mxu0 %v521
  %v762 = vpop.f32.mrf.mxu0
  %v763 = vadd.f32 0.0, %v762
  %v764 = vpop.f32.mrf.mxu0
  %765 = vdwg.mxu0
  %v766 = vadd.f32 %v517, %v724
  %v767 = vadd.f32 %v518, %v737
  %v768 = vadd.f32 %v519, %v750
  %v769 = vadd.f32 %v520, %v763
  %v770 = vxor.u32 %v766, 2147483648
  %v771 = vmul.f32 %v770, 1.442695
  %v772 = vpow.pop %v771
  %v773 = vadd.f32 %v772, 1.0
  %v774 = vrcp.pop %v773
  %v775 = vmul.f32 %v773, %v774
  %v776 = vsub.f32 1.0, %v775
  %v777 = vmul.f32 %v774, %v776
  %v778 = vadd.f32 %v774, %v777
  %vm779 = vweird.f32 %v773
  %vm780 = vweird.f32 %v774
  %vm781 = vmor %vm779, %vm780
  %v782 = vsel %vm781, %v774, %v778
  %v783 = vand.u32 2147483647, %v773
  %vm784 = vcmp.eq.f32.partialorder %v783, 8.507059e+37
  %v785 = vand.u32 %v773, 2147483648
  %v786 = vor.u32 1.1754944e-38, %v785
  %v787 = vsel %vm784, %v786, %v782
  %v788 = vmul.f32 1.0, %v787
  %v789 = vxor.u32 %v767, 2147483648
  %v790 = vmul.f32 %v789, 1.442695
  %v791 = vpow.pop %v790
  %v792 = vadd.f32 %v791, 1.0
  %v793 = vrcp.pop %v792
  %v794 = vmul.f32 %v792, %v793
  %v795 = vsub.f32 1.0, %v794
  %v796 = vmul.f32 %v793, %v795
  %v797 = vadd.f32 %v793, %v796
  %vm798 = vweird.f32 %v792
  %vm799 = vweird.f32 %v793
  %vm800 = vmor %vm798, %vm799
  %v801 = vsel %vm800, %v793, %v797
  %v802 = vand.u32 2147483647, %v792
  %vm803 = vcmp.eq.f32.partialorder %v802, 8.507059e+37
  %v804 = vand.u32 %v792, 2147483648
  %v805 = vor.u32 1.1754944e-38, %v804
  %v806 = vsel %vm803, %v805, %v801
  %v807 = vmul.f32 1.0, %v806
  %v808 = vtanh.pop %v768
  %v809 = vxor.u32 %v769, 2147483648
  %v810 = vmul.f32 %v809, 1.442695
  %v811 = vpow.pop %v810
  %v812 = vadd.f32 %v811, 1.0
  %v813 = vrcp.pop %v812
  %v814 = vmul.f32 %v812, %v813
  %v815 = vsub.f32 1.0, %v814
  %v816 = vmul.f32 %v813, %v815
  %v817 = vadd.f32 %v813, %v816
  %vm818 = vweird.f32 %v812
  %vm819 = vweird.f32 %v813
  %vm820 = vmor %vm818, %vm819
  %v821 = vsel %vm820, %v813, %v817
  %v822 = vand.u32 2147483647, %v812
  %vm823 = vcmp.eq.f32.partialorder %v822, 8.507059e+37
  %v824 = vand.u32 %v812, 2147483648
  %v825 = vor.u32 1.1754944e-38, %v824
  %v826 = vsel %vm823, %v825, %v821
  %v827 = vmul.f32 1.0, %v826
  %v828 = vmul.f32 %v807, %v516
  %v829 = vmul.f32 %v788, %v808
  %v830 = vadd.f32 %v828, %v829
  %v831 = vtanh.pop %v830
  %v832 = vmul.f32 %v827, %v831
  %833 = vst [vmem:[#allocation3] sm:$0xff] %v832
  %v834 = vld [vmem:[#allocation2 + $0x20] sm:$0xff]
  %v835 = vld [vmem:[#allocation2 + $0x28] sm:$0xff]
  %v836 = vld [vmem:[#allocation2 + $0x30] sm:$0xff]
  %v837 = vld [vmem:[#allocation2 + $0x38] sm:$0xff]
  %v838 = vpack.c.bf16 %v832, %v832
  %v839 = vld [vmem:[%s5] sm:$0xff]
  %v840 = vld [vmem:[%s5 + $0x8] sm:$0xff]
  %v841 = vld [vmem:[%s5 + $0x10] sm:$0xff]
  %v842 = vld [vmem:[%s5 + $0x18] sm:$0xff]
  %v843 = vld [vmem:[%s5 + $0x20] sm:$0xff]
  %v844 = vld [vmem:[%s5 + $0x28] sm:$0xff]
  %v845 = vld [vmem:[%s5 + $0x30] sm:$0xff]
  %v846 = vld [vmem:[%s5 + $0x38] sm:$0xff]
  %v847 = vld [vmem:[%s5 + $0x40] sm:$0xff]
  %v848 = vld [vmem:[%s5 + $0x48] sm:$0xff]
  %v849 = vld [vmem:[%s5 + $0x50] sm:$0xff]
  %v850 = vld [vmem:[%s5 + $0x58] sm:$0xff]
  %v851 = vld [vmem:[%s5 + $0x60] sm:$0xff]
  %v852 = vld [vmem:[%s5 + $0x68] sm:$0xff]
  %v853 = vld [vmem:[%s5 + $0x70] sm:$0xff]
  %v854 = vld [vmem:[%s5 + $0x78] sm:$0xff]
  %v855 = vld [vmem:[%s5 + $0x80] sm:$0xff]
  %v856 = vld [vmem:[%s5 + $0x88] sm:$0xff]
  %v857 = vld [vmem:[%s5 + $0x90] sm:$0xff]
  %v858 = vld [vmem:[%s5 + $0x98] sm:$0xff]
  %v859 = vld [vmem:[%s5 + $0xa0] sm:$0xff]
  %v860 = vld [vmem:[%s5 + $0xa8] sm:$0xff]
  %v861 = vld [vmem:[%s5 + $0xb0] sm:$0xff]
  %v862 = vld [vmem:[%s5 + $0xb8] sm:$0xff]
  %v863 = vld [vmem:[%s5 + $0xc0] sm:$0xff]
  %v864 = vld [vmem:[%s5 + $0xc8] sm:$0xff]
  %v865 = vld [vmem:[%s5 + $0xd0] sm:$0xff]
  %v866 = vld [vmem:[%s5 + $0xd8] sm:$0xff]
  %v867 = vld [vmem:[%s5 + $0xe0] sm:$0xff]
  %v868 = vld [vmem:[%s5 + $0xe8] sm:$0xff]
  %v869 = vld [vmem:[%s5 + $0xf0] sm:$0xff]
  %v870 = vld [vmem:[%s5 + $0xf8] sm:$0xff]
  %v903 = vunpack.c.l.b16 %v839
  %v904 = vunpack.c.h.b16 %v839
  %v905 = vunpack.c.l.b16 %v840
  %v906 = vunpack.c.h.b16 %v840
  %v907 = vunpack.c.l.b16 %v841
  %v908 = vunpack.c.h.b16 %v841
  %v909 = vunpack.c.l.b16 %v842
  %v910 = vunpack.c.h.b16 %v842
  %v911 = vunpack.c.l.b16 %v843
  %v912 = vunpack.c.h.b16 %v843
  %v913 = vunpack.c.l.b16 %v844
  %v914 = vunpack.c.h.b16 %v844
  %v915 = vunpack.c.l.b16 %v845
  %v916 = vunpack.c.h.b16 %v845
  %v917 = vunpack.c.l.b16 %v846
  %v918 = vunpack.c.h.b16 %v846
  %v919 = vunpack.c.l.b16 %v847
  %v920 = vunpack.c.h.b16 %v847
  %v921 = vunpack.c.l.b16 %v848
  %v922 = vunpack.c.h.b16 %v848
  %v923 = vunpack.c.l.b16 %v849
  %v924 = vunpack.c.h.b16 %v849
  %v925 = vunpack.c.l.b16 %v850
  %v926 = vunpack.c.h.b16 %v850
  %v927 = vunpack.c.l.b16 %v851
  %v928 = vunpack.c.h.b16 %v851
  %v929 = vunpack.c.l.b16 %v852
  %v930 = vunpack.c.h.b16 %v852
  %v931 = vunpack.c.l.b16 %v853
  %v932 = vunpack.c.h.b16 %v853
  %v933 = vunpack.c.l.b16 %v854
  %v934 = vunpack.c.h.b16 %v854
  %v935 = vunpack.c.l.b16 %v855
  %v936 = vunpack.c.h.b16 %v855
  %v937 = vunpack.c.l.b16 %v856
  %v938 = vunpack.c.h.b16 %v856
  %v939 = vunpack.c.l.b16 %v857
  %v940 = vunpack.c.h.b16 %v857
  %v941 = vunpack.c.l.b16 %v858
  %v942 = vunpack.c.h.b16 %v858
  %v943 = vunpack.c.l.b16 %v859
  %v944 = vunpack.c.h.b16 %v859
  %v945 = vunpack.c.l.b16 %v860
  %v946 = vunpack.c.h.b16 %v860
  %v947 = vunpack.c.l.b16 %v861
  %v948 = vunpack.c.h.b16 %v861
  %v949 = vunpack.c.l.b16 %v862
  %v950 = vunpack.c.h.b16 %v862
  %v951 = vunpack.c.l.b16 %v863
  %v952 = vunpack.c.h.b16 %v863
  %v953 = vunpack.c.l.b16 %v864
  %v954 = vunpack.c.h.b16 %v864
  %v955 = vunpack.c.l.b16 %v865
  %v956 = vunpack.c.h.b16 %v865
  %v957 = vunpack.c.l.b16 %v866
  %v958 = vunpack.c.h.b16 %v866
  %v959 = vunpack.c.l.b16 %v867
  %v960 = vunpack.c.h.b16 %v867
  %v961 = vunpack.c.l.b16 %v868
  %v962 = vunpack.c.h.b16 %v868
  %v963 = vunpack.c.l.b16 %v869
  %v964 = vunpack.c.h.b16 %v869
  %v965 = vunpack.c.l.b16 %v870
  %v966 = vunpack.c.h.b16 %v870
  %v967 = vpack.c.b16 %v907, %v903
  %v968 = vpack.c.b16 %v908, %v904
  %v969 = vpack.c.b16 %v909, %v905
  %v970 = vpack.c.b16 %v910, %v906
  %v971 = vpack.c.b16 %v915, %v911
  %v972 = vpack.c.b16 %v916, %v912
  %v973 = vpack.c.b16 %v917, %v913
  %v974 = vpack.c.b16 %v918, %v914
  %v975 = vpack.c.b16 %v923, %v919
  %v976 = vpack.c.b16 %v924, %v920
  %v977 = vpack.c.b16 %v925, %v921
  %v978 = vpack.c.b16 %v926, %v922
  %v979 = vpack.c.b16 %v931, %v927
  %v980 = vpack.c.b16 %v932, %v928
  %v981 = vpack.c.b16 %v933, %v929
  %v982 = vpack.c.b16 %v934, %v930
  %v983 = vpack.c.b16 %v939, %v935
  %v984 = vpack.c.b16 %v940, %v936
  %v985 = vpack.c.b16 %v941, %v937
  %v986 = vpack.c.b16 %v942, %v938
  %v987 = vpack.c.b16 %v947, %v943
  %v988 = vpack.c.b16 %v948, %v944
  %v989 = vpack.c.b16 %v949, %v945
  %v990 = vpack.c.b16 %v950, %v946
  %v991 = vpack.c.b16 %v955, %v951
  %v992 = vpack.c.b16 %v956, %v952
  %v993 = vpack.c.b16 %v957, %v953
  %v994 = vpack.c.b16 %v958, %v954
  %v995 = vpack.c.b16 %v963, %v959
  %v996 = vpack.c.b16 %v964, %v960
  %v997 = vpack.c.b16 %v965, %v961
  %v998 = vpack.c.b16 %v966, %v962
  %1031 = vmatpush.bf16.msra.mxu0 %v995
  %1032 = vmatpush.bf16.msra.mxu0 %v991
  %1033 = vmatpush.bf16.msra.mxu0 %v987
  %1034 = vmatpush.bf16.msra.mxu0 %v983
  %1035 = vmatpush.bf16.msra.mxu0 %v979
  %1036 = vmatpush.bf16.msra.mxu0 %v975
  %1037 = vmatpush.bf16.msra.mxu0 %v971
  %1038 = vmatpush.bf16.msra.mxu0 %v967
  %1039 = vmatmul.bf16.gmra.mxu0 %v838
  %v1040 = vpop.f32.mrf.mxu0
  %v1041 = vadd.f32 0.0, %v1040
  %v1042 = vpop.f32.mrf.mxu0
  %1043 = vdwg.mxu0
  %1044 = vmatpush.bf16.msra.mxu0 %v996
  %1045 = vmatpush.bf16.msra.mxu0 %v992
  %1046 = vmatpush.bf16.msra.mxu0 %v988
  %1047 = vmatpush.bf16.msra.mxu0 %v984
  %1048 = vmatpush.bf16.msra.mxu0 %v980
  %1049 = vmatpush.bf16.msra.mxu0 %v976
  %1050 = vmatpush.bf16.msra.mxu0 %v972
  %1051 = vmatpush.bf16.msra.mxu0 %v968
  %1052 = vmatmul.bf16.gmra.mxu0 %v838
  %v1053 = vpop.f32.mrf.mxu0
  %v1054 = vadd.f32 0.0, %v1053
  %v1055 = vpop.f32.mrf.mxu0
  %1056 = vdwg.mxu0
  %1057 = vmatpush.bf16.msra.mxu0 %v997
  %1058 = vmatpush.bf16.msra.mxu0 %v993
  %1059 = vmatpush.bf16.msra.mxu0 %v989
  %1060 = vmatpush.bf16.msra.mxu0 %v985
  %1061 = vmatpush.bf16.msra.mxu0 %v981
  %1062 = vmatpush.bf16.msra.mxu0 %v977
  %1063 = vmatpush.bf16.msra.mxu0 %v973
  %1064 = vmatpush.bf16.msra.mxu0 %v969
  %1065 = vmatmul.bf16.gmra.mxu0 %v838
  %v1066 = vpop.f32.mrf.mxu0
  %v1067 = vadd.f32 0.0, %v1066
  %v1068 = vpop.f32.mrf.mxu0
  %1069 = vdwg.mxu0
  %1070 = vmatpush.bf16.msra.mxu0 %v998
  %1071 = vmatpush.bf16.msra.mxu0 %v994
  %1072 = vmatpush.bf16.msra.mxu0 %v990
  %1073 = vmatpush.bf16.msra.mxu0 %v986
  %1074 = vmatpush.bf16.msra.mxu0 %v982
  %1075 = vmatpush.bf16.msra.mxu0 %v978
  %1076 = vmatpush.bf16.msra.mxu0 %v974
  %1077 = vmatpush.bf16.msra.mxu0 %v970
  %1078 = vmatmul.bf16.gmra.mxu0 %v838
  %v1079 = vpop.f32.mrf.mxu0
  %v1080 = vadd.f32 0.0, %v1079
  %v1081 = vpop.f32.mrf.mxu0
  %1082 = vdwg.mxu0
  %v1083 = vadd.f32 %v834, %v1041
  %v1084 = vadd.f32 %v835, %v1054
  %v1085 = vadd.f32 %v836, %v1067
  %v1086 = vadd.f32 %v837, %v1080
  %v1087 = vxor.u32 %v1083, 2147483648
  %v1088 = vmul.f32 %v1087, 1.442695
  %v1089 = vpow.pop %v1088
  %v1090 = vadd.f32 %v1089, 1.0
  %v1091 = vrcp.pop %v1090
  %v1092 = vmul.f32 %v1090, %v1091
  %v1093 = vsub.f32 1.0, %v1092
  %v1094 = vmul.f32 %v1091, %v1093
  %v1095 = vadd.f32 %v1091, %v1094
  %vm1096 = vweird.f32 %v1090
  %vm1097 = vweird.f32 %v1091
  %vm1098 = vmor %vm1096, %vm1097
  %v1099 = vsel %vm1098, %v1091, %v1095
  %v1100 = vand.u32 2147483647, %v1090
  %vm1101 = vcmp.eq.f32.partialorder %v1100, 8.507059e+37
  %v1102 = vand.u32 %v1090, 2147483648
  %v1103 = vor.u32 1.1754944e-38, %v1102
  %v1104 = vsel %vm1101, %v1103, %v1099
  %v1105 = vmul.f32 1.0, %v1104
  %v1106 = vxor.u32 %v1084, 2147483648
  %v1107 = vmul.f32 %v1106, 1.442695
  %v1108 = vpow.pop %v1107
  %v1109 = vadd.f32 %v1108, 1.0
  %v1110 = vrcp.pop %v1109
  %v1111 = vmul.f32 %v1109, %v1110
  %v1112 = vsub.f32 1.0, %v1111
  %v1113 = vmul.f32 %v1110, %v1112
  %v1114 = vadd.f32 %v1110, %v1113
  %vm1115 = vweird.f32 %v1109
  %vm1116 = vweird.f32 %v1110
  %vm1117 = vmor %vm1115, %vm1116
  %v1118 = vsel %vm1117, %v1110, %v1114
  %v1119 = vand.u32 2147483647, %v1109
  %vm1120 = vcmp.eq.f32.partialorder %v1119, 8.507059e+37
  %v1121 = vand.u32 %v1109, 2147483648
  %v1122 = vor.u32 1.1754944e-38, %v1121
  %v1123 = vsel %vm1120, %v1122, %v1118
  %v1124 = vmul.f32 1.0, %v1123
  %v1125 = vtanh.pop %v1085
  %v1126 = vxor.u32 %v1086, 2147483648
  %v1127 = vmul.f32 %v1126, 1.442695
  %v1128 = vpow.pop %v1127
  %v1129 = vadd.f32 %v1128, 1.0
  %v1130 = vrcp.pop %v1129
  %v1131 = vmul.f32 %v1129, %v1130
  %v1132 = vsub.f32 1.0, %v1131
  %v1133 = vmul.f32 %v1130, %v1132
  %v1134 = vadd.f32 %v1130, %v1133
  %vm1135 = vweird.f32 %v1129
  %vm1136 = vweird.f32 %v1130
  %vm1137 = vmor %vm1135, %vm1136
  %v1138 = vsel %vm1137, %v1130, %v1134
  %v1139 = vand.u32 2147483647, %v1129
  %vm1140 = vcmp.eq.f32.partialorder %v1139, 8.507059e+37
  %v1141 = vand.u32 %v1129, 2147483648
  %v1142 = vor.u32 1.1754944e-38, %v1141
  %v1143 = vsel %vm1140, %v1142, %v1138
  %v1144 = vmul.f32 1.0, %v1143
  %v1145 = vmul.f32 %v1124, %v830
  %v1146 = vmul.f32 %v1105, %v1125
  %v1147 = vadd.f32 %v1145, %v1146
  %v1148 = vtanh.pop %v1147
  %v1149 = vmul.f32 %v1144, %v1148
  %1150 = vst [vmem:[#allocation3 + $0x8] sm:$0xff] %v1149
  %v1151 = vld [vmem:[#allocation2 + $0x40] sm:$0xff]
  %v1152 = vld [vmem:[#allocation2 + $0x48] sm:$0xff]
  %v1153 = vld [vmem:[#allocation2 + $0x50] sm:$0xff]
  %v1154 = vld [vmem:[#allocation2 + $0x58] sm:$0xff]
  %v1155 = vpack.c.bf16 %v1149, %v1149
  %v1156 = vld [vmem:[%s5] sm:$0xff]
  %v1157 = vld [vmem:[%s5 + $0x8] sm:$0xff]
  %v1158 = vld [vmem:[%s5 + $0x10] sm:$0xff]
  %v1159 = vld [vmem:[%s5 + $0x18] sm:$0xff]
  %v1160 = vld [vmem:[%s5 + $0x20] sm:$0xff]
  %v1161 = vld [vmem:[%s5 + $0x28] sm:$0xff]
  %v1162 = vld [vmem:[%s5 + $0x30] sm:$0xff]
  %v1163 = vld [vmem:[%s5 + $0x38] sm:$0xff]
  %v1164 = vld [vmem:[%s5 + $0x40] sm:$0xff]
  %v1165 = vld [vmem:[%s5 + $0x48] sm:$0xff]
  %v1166 = vld [vmem:[%s5 + $0x50] sm:$0xff]
  %v1167 = vld [vmem:[%s5 + $0x58] sm:$0xff]
  %v1168 = vld [vmem:[%s5 + $0x60] sm:$0xff]
  %v1169 = vld [vmem:[%s5 + $0x68] sm:$0xff]
  %v1170 = vld [vmem:[%s5 + $0x70] sm:$0xff]
  %v1171 = vld [vmem:[%s5 + $0x78] sm:$0xff]
  %v1172 = vld [vmem:[%s5 + $0x80] sm:$0xff]
  %v1173 = vld [vmem:[%s5 + $0x88] sm:$0xff]
  %v1174 = vld [vmem:[%s5 + $0x90] sm:$0xff]
  %v1175 = vld [vmem:[%s5 + $0x98] sm:$0xff]
  %v1176 = vld [vmem:[%s5 + $0xa0] sm:$0xff]
  %v1177 = vld [vmem:[%s5 + $0xa8] sm:$0xff]
  %v1178 = vld [vmem:[%s5 + $0xb0] sm:$0xff]
  %v1179 = vld [vmem:[%s5 + $0xb8] sm:$0xff]
  %v1180 = vld [vmem:[%s5 + $0xc0] sm:$0xff]
  %v1181 = vld [vmem:[%s5 + $0xc8] sm:$0xff]
  %v1182 = vld [vmem:[%s5 + $0xd0] sm:$0xff]
  %v1183 = vld [vmem:[%s5 + $0xd8] sm:$0xff]
  %v1184 = vld [vmem:[%s5 + $0xe0] sm:$0xff]
  %v1185 = vld [vmem:[%s5 + $0xe8] sm:$0xff]
  %v1186 = vld [vmem:[%s5 + $0xf0] sm:$0xff]
  %v1187 = vld [vmem:[%s5 + $0xf8] sm:$0xff]
  %v1220 = vunpack.c.l.b16 %v1156
  %v1221 = vunpack.c.h.b16 %v1156
  %v1222 = vunpack.c.l.b16 %v1157
  %v1223 = vunpack.c.h.b16 %v1157
  %v1224 = vunpack.c.l.b16 %v1158
  %v1225 = vunpack.c.h.b16 %v1158
  %v1226 = vunpack.c.l.b16 %v1159
  %v1227 = vunpack.c.h.b16 %v1159
  %v1228 = vunpack.c.l.b16 %v1160
  %v1229 = vunpack.c.h.b16 %v1160
  %v1230 = vunpack.c.l.b16 %v1161
  %v1231 = vunpack.c.h.b16 %v1161
  %v1232 = vunpack.c.l.b16 %v1162
  %v1233 = vunpack.c.h.b16 %v1162
  %v1234 = vunpack.c.l.b16 %v1163
  %v1235 = vunpack.c.h.b16 %v1163
  %v1236 = vunpack.c.l.b16 %v1164
  %v1237 = vunpack.c.h.b16 %v1164
  %v1238 = vunpack.c.l.b16 %v1165
  %v1239 = vunpack.c.h.b16 %v1165
  %v1240 = vunpack.c.l.b16 %v1166
  %v1241 = vunpack.c.h.b16 %v1166
  %v1242 = vunpack.c.l.b16 %v1167
  %v1243 = vunpack.c.h.b16 %v1167
  %v1244 = vunpack.c.l.b16 %v1168
  %v1245 = vunpack.c.h.b16 %v1168
  %v1246 = vunpack.c.l.b16 %v1169
  %v1247 = vunpack.c.h.b16 %v1169
  %v1248 = vunpack.c.l.b16 %v1170
  %v1249 = vunpack.c.h.b16 %v1170
  %v1250 = vunpack.c.l.b16 %v1171
  %v1251 = vunpack.c.h.b16 %v1171
  %v1252 = vunpack.c.l.b16 %v1172
  %v1253 = vunpack.c.h.b16 %v1172
  %v1254 = vunpack.c.l.b16 %v1173
  %v1255 = vunpack.c.h.b16 %v1173
  %v1256 = vunpack.c.l.b16 %v1174
  %v1257 = vunpack.c.h.b16 %v1174
  %v1258 = vunpack.c.l.b16 %v1175
  %v1259 = vunpack.c.h.b16 %v1175
  %v1260 = vunpack.c.l.b16 %v1176
  %v1261 = vunpack.c.h.b16 %v1176
  %v1262 = vunpack.c.l.b16 %v1177
  %v1263 = vunpack.c.h.b16 %v1177
  %v1264 = vunpack.c.l.b16 %v1178
  %v1265 = vunpack.c.h.b16 %v1178
  %v1266 = vunpack.c.l.b16 %v1179
  %v1267 = vunpack.c.h.b16 %v1179
  %v1268 = vunpack.c.l.b16 %v1180
  %v1269 = vunpack.c.h.b16 %v1180
  %v1270 = vunpack.c.l.b16 %v1181
  %v1271 = vunpack.c.h.b16 %v1181
  %v1272 = vunpack.c.l.b16 %v1182
  %v1273 = vunpack.c.h.b16 %v1182
  %v1274 = vunpack.c.l.b16 %v1183
  %v1275 = vunpack.c.h.b16 %v1183
  %v1276 = vunpack.c.l.b16 %v1184
  %v1277 = vunpack.c.h.b16 %v1184
  %v1278 = vunpack.c.l.b16 %v1185
  %v1279 = vunpack.c.h.b16 %v1185
  %v1280 = vunpack.c.l.b16 %v1186
  %v1281 = vunpack.c.h.b16 %v1186
  %v1282 = vunpack.c.l.b16 %v1187
  %v1283 = vunpack.c.h.b16 %v1187
  %v1284 = vpack.c.b16 %v1224, %v1220
  %v1285 = vpack.c.b16 %v1225, %v1221
  %v1286 = vpack.c.b16 %v1226, %v1222
  %v1287 = vpack.c.b16 %v1227, %v1223
  %v1288 = vpack.c.b16 %v1232, %v1228
  %v1289 = vpack.c.b16 %v1233, %v1229
  %v1290 = vpack.c.b16 %v1234, %v1230
  %v1291 = vpack.c.b16 %v1235, %v1231
  %v1292 = vpack.c.b16 %v1240, %v1236
  %v1293 = vpack.c.b16 %v1241, %v1237
  %v1294 = vpack.c.b16 %v1242, %v1238
  %v1295 = vpack.c.b16 %v1243, %v1239
  %v1296 = vpack.c.b16 %v1248, %v1244
  %v1297 = vpack.c.b16 %v1249, %v1245
  %v1298 = vpack.c.b16 %v1250, %v1246
  %v1299 = vpack.c.b16 %v1251, %v1247
  %v1300 = vpack.c.b16 %v1256, %v1252
  %v1301 = vpack.c.b16 %v1257, %v1253
  %v1302 = vpack.c.b16 %v1258, %v1254
  %v1303 = vpack.c.b16 %v1259, %v1255
  %v1304 = vpack.c.b16 %v1264, %v1260
  %v1305 = vpack.c.b16 %v1265, %v1261
  %v1306 = vpack.c.b16 %v1266, %v1262
  %v1307 = vpack.c.b16 %v1267, %v1263
  %v1308 = vpack.c.b16 %v1272, %v1268
  %v1309 = vpack.c.b16 %v1273, %v1269
  %v1310 = vpack.c.b16 %v1274, %v1270
  %v1311 = vpack.c.b16 %v1275, %v1271
  %v1312 = vpack.c.b16 %v1280, %v1276
  %v1313 = vpack.c.b16 %v1281, %v1277
  %v1314 = vpack.c.b16 %v1282, %v1278
  %v1315 = vpack.c.b16 %v1283, %v1279
  %1348 = vmatpush.bf16.msra.mxu0 %v1312
  %1349 = vmatpush.bf16.msra.mxu0 %v1308
  %1350 = vmatpush.bf16.msra.mxu0 %v1304
  %1351 = vmatpush.bf16.msra.mxu0 %v1300
  %1352 = vmatpush.bf16.msra.mxu0 %v1296
  %1353 = vmatpush.bf16.msra.mxu0 %v1292
  %1354 = vmatpush.bf16.msra.mxu0 %v1288
  %1355 = vmatpush.bf16.msra.mxu0 %v1284
  %1356 = vmatmul.bf16.gmra.mxu0 %v1155
  %v1357 = vpop.f32.mrf.mxu0
  %v1358 = vadd.f32 0.0, %v1357
  %v1359 = vpop.f32.mrf.mxu0
  %1360 = vdwg.mxu0
  %1361 = vmatpush.bf16.msra.mxu0 %v1313
  %1362 = vmatpush.bf16.msra.mxu0 %v1309
  %1363 = vmatpush.bf16.msra.mxu0 %v1305
  %1364 = vmatpush.bf16.msra.mxu0 %v1301
  %1365 = vmatpush.bf16.msra.mxu0 %v1297
  %1366 = vmatpush.bf16.msra.mxu0 %v1293
  %1367 = vmatpush.bf16.msra.mxu0 %v1289
  %1368 = vmatpush.bf16.msra.mxu0 %v1285
  %1369 = vmatmul.bf16.gmra.mxu0 %v1155
  %v1370 = vpop.f32.mrf.mxu0
  %v1371 = vadd.f32 0.0, %v1370
  %v1372 = vpop.f32.mrf.mxu0
  %1373 = vdwg.mxu0
  %1374 = vmatpush.bf16.msra.mxu0 %v1314
  %1375 = vmatpush.bf16.msra.mxu0 %v1310
  %1376 = vmatpush.bf16.msra.mxu0 %v1306
  %1377 = vmatpush.bf16.msra.mxu0 %v1302
  %1378 = vmatpush.bf16.msra.mxu0 %v1298
  %1379 = vmatpush.bf16.msra.mxu0 %v1294
  %1380 = vmatpush.bf16.msra.mxu0 %v1290
  %1381 = vmatpush.bf16.msra.mxu0 %v1286
  %1382 = vmatmul.bf16.gmra.mxu0 %v1155
  %v1383 = vpop.f32.mrf.mxu0
  %v1384 = vadd.f32 0.0, %v1383
  %v1385 = vpop.f32.mrf.mxu0
  %1386 = vdwg.mxu0
  %1387 = vmatpush.bf16.msra.mxu0 %v1315
  %1388 = vmatpush.bf16.msra.mxu0 %v1311
  %1389 = vmatpush.bf16.msra.mxu0 %v1307
  %1390 = vmatpush.bf16.msra.mxu0 %v1303
  %1391 = vmatpush.bf16.msra.mxu0 %v1299
  %1392 = vmatpush.bf16.msra.mxu0 %v1295
  %1393 = vmatpush.bf16.msra.mxu0 %v1291
  %1394 = vmatpush.bf16.msra.mxu0 %v1287
  %1395 = vmatmul.bf16.gmra.mxu0 %v1155
  %v1396 = vpop.f32.mrf.mxu0
  %v1397 = vadd.f32 0.0, %v1396
  %v1398 = vpop.f32.mrf.mxu0
  %1399 = vdwg.mxu0
  %v1400 = vadd.f32 %v1151, %v1358
  %v1401 = vadd.f32 %v1152, %v1371
  %v1402 = vadd.f32 %v1153, %v1384
  %v1403 = vadd.f32 %v1154, %v1397
  %v1404 = vxor.u32 %v1400, 2147483648
  %v1405 = vmul.f32 %v1404, 1.442695
  %v1406 = vpow.pop %v1405
  %v1407 = vadd.f32 %v1406, 1.0
  %v1408 = vrcp.pop %v1407
  %v1409 = vmul.f32 %v1407, %v1408
  %v1410 = vsub.f32 1.0, %v1409
  %v1411 = vmul.f32 %v1408, %v1410
  %v1412 = vadd.f32 %v1408, %v1411
  %vm1413 = vweird.f32 %v1407
  %vm1414 = vweird.f32 %v1408
  %vm1415 = vmor %vm1413, %vm1414
  %v1416 = vsel %vm1415, %v1408, %v1412
  %v1417 = vand.u32 2147483647, %v1407
  %vm1418 = vcmp.eq.f32.partialorder %v1417, 8.507059e+37
  %v1419 = vand.u32 %v1407, 2147483648
  %v1420 = vor.u32 1.1754944e-38, %v1419
  %v1421 = vsel %vm1418, %v1420, %v1416
  %v1422 = vmul.f32 1.0, %v1421
  %v1423 = vxor.u32 %v1401, 2147483648
  %v1424 = vmul.f32 %v1423, 1.442695
  %v1425 = vpow.pop %v1424
  %v1426 = vadd.f32 %v1425, 1.0
  %v1427 = vrcp.pop %v1426
  %v1428 = vmul.f32 %v1426, %v1427
  %v1429 = vsub.f32 1.0, %v1428
  %v1430 = vmul.f32 %v1427, %v1429
  %v1431 = vadd.f32 %v1427, %v1430
  %vm1432 = vweird.f32 %v1426
  %vm1433 = vweird.f32 %v1427
  %vm1434 = vmor %vm1432, %vm1433
  %v1435 = vsel %vm1434, %v1427, %v1431
  %v1436 = vand.u32 2147483647, %v1426
  %vm1437 = vcmp.eq.f32.partialorder %v1436, 8.507059e+37
  %v1438 = vand.u32 %v1426, 2147483648
  %v1439 = vor.u32 1.1754944e-38, %v1438
  %v1440 = vsel %vm1437, %v1439, %v1435
  %v1441 = vmul.f32 1.0, %v1440
  %v1442 = vtanh.pop %v1402
  %v1443 = vxor.u32 %v1403, 2147483648
  %v1444 = vmul.f32 %v1443, 1.442695
  %v1445 = vpow.pop %v1444
  %v1446 = vadd.f32 %v1445, 1.0
  %v1447 = vrcp.pop %v1446
  %v1448 = vmul.f32 %v1446, %v1447
  %v1449 = vsub.f32 1.0, %v1448
  %v1450 = vmul.f32 %v1447, %v1449
  %v1451 = vadd.f32 %v1447, %v1450
  %vm1452 = vweird.f32 %v1446
  %vm1453 = vweird.f32 %v1447
  %vm1454 = vmor %vm1452, %vm1453
  %v1455 = vsel %vm1454, %v1447, %v1451
  %v1456 = vand.u32 2147483647, %v1446
  %vm1457 = vcmp.eq.f32.partialorder %v1456, 8.507059e+37
  %v1458 = vand.u32 %v1446, 2147483648
  %v1459 = vor.u32 1.1754944e-38, %v1458
  %v1460 = vsel %vm1457, %v1459, %v1455
  %v1461 = vmul.f32 1.0, %v1460
  %v1462 = vmul.f32 %v1441, %v1147
  %v1463 = vmul.f32 %v1422, %v1442
  %v1464 = vadd.f32 %v1462, %v1463
  %v1465 = vtanh.pop %v1464
  %v1466 = vmul.f32 %v1461, %v1465
  %1467 = vst [vmem:[#allocation3 + $0x10] sm:$0xff] %v1466
  %v1468 = vld [vmem:[#allocation2 + $0x60] sm:$0xff]
  %v1469 = vld [vmem:[#allocation2 + $0x68] sm:$0xff]
  %v1470 = vld [vmem:[#allocation2 + $0x70] sm:$0xff]
  %v1471 = vld [vmem:[#allocation2 + $0x78] sm:$0xff]
  %v1472 = vpack.c.bf16 %v1466, %v1466
  %v1473 = vld [vmem:[%s5] sm:$0xff]
  %v1474 = vld [vmem:[%s5 + $0x8] sm:$0xff]
  %v1475 = vld [vmem:[%s5 + $0x10] sm:$0xff]
  %v1476 = vld [vmem:[%s5 + $0x18] sm:$0xff]
  %v1477 = vld [vmem:[%s5 + $0x20] sm:$0xff]
  %v1478 = vld [vmem:[%s5 + $0x28] sm:$0xff]
  %v1479 = vld [vmem:[%s5 + $0x30] sm:$0xff]
  %v1480 = vld [vmem:[%s5 + $0x38] sm:$0xff]
  %v1481 = vld [vmem:[%s5 + $0x40] sm:$0xff]
  %v1482 = vld [vmem:[%s5 + $0x48] sm:$0xff]
  %v1483 = vld [vmem:[%s5 + $0x50] sm:$0xff]
  %v1484 = vld [vmem:[%s5 + $0x58] sm:$0xff]
  %v1485 = vld [vmem:[%s5 + $0x60] sm:$0xff]
  %v1486 = vld [vmem:[%s5 + $0x68] sm:$0xff]
  %v1487 = vld [vmem:[%s5 + $0x70] sm:$0xff]
  %v1488 = vld [vmem:[%s5 + $0x78] sm:$0xff]
  %v1489 = vld [vmem:[%s5 + $0x80] sm:$0xff]
  %v1490 = vld [vmem:[%s5 + $0x88] sm:$0xff]
  %v1491 = vld [vmem:[%s5 + $0x90] sm:$0xff]
  %v1492 = vld [vmem:[%s5 + $0x98] sm:$0xff]
  %v1493 = vld [vmem:[%s5 + $0xa0] sm:$0xff]
  %v1494 = vld [vmem:[%s5 + $0xa8] sm:$0xff]
  %v1495 = vld [vmem:[%s5 + $0xb0] sm:$0xff]
  %v1496 = vld [vmem:[%s5 + $0xb8] sm:$0xff]
  %v1497 = vld [vmem:[%s5 + $0xc0] sm:$0xff]
  %v1498 = vld [vmem:[%s5 + $0xc8] sm:$0xff]
  %v1499 = vld [vmem:[%s5 + $0xd0] sm:$0xff]
  %v1500 = vld [vmem:[%s5 + $0xd8] sm:$0xff]
  %v1501 = vld [vmem:[%s5 + $0xe0] sm:$0xff]
  %v1502 = vld [vmem:[%s5 + $0xe8] sm:$0xff]
  %v1503 = vld [vmem:[%s5 + $0xf0] sm:$0xff]
  %v1504 = vld [vmem:[%s5 + $0xf8] sm:$0xff]
  %v1537 = vunpack.c.l.b16 %v1473
  %v1538 = vunpack.c.h.b16 %v1473
  %v1539 = vunpack.c.l.b16 %v1474
  %v1540 = vunpack.c.h.b16 %v1474
  %v1541 = vunpack.c.l.b16 %v1475
  %v1542 = vunpack.c.h.b16 %v1475
  %v1543 = vunpack.c.l.b16 %v1476
  %v1544 = vunpack.c.h.b16 %v1476
  %v1545 = vunpack.c.l.b16 %v1477
  %v1546 = vunpack.c.h.b16 %v1477
  %v1547 = vunpack.c.l.b16 %v1478
  %v1548 = vunpack.c.h.b16 %v1478
  %v1549 = vunpack.c.l.b16 %v1479
  %v1550 = vunpack.c.h.b16 %v1479
  %v1551 = vunpack.c.l.b16 %v1480
  %v1552 = vunpack.c.h.b16 %v1480
  %v1553 = vunpack.c.l.b16 %v1481
  %v1554 = vunpack.c.h.b16 %v1481
  %v1555 = vunpack.c.l.b16 %v1482
  %v1556 = vunpack.c.h.b16 %v1482
  %v1557 = vunpack.c.l.b16 %v1483
  %v1558 = vunpack.c.h.b16 %v1483
  %v1559 = vunpack.c.l.b16 %v1484
  %v1560 = vunpack.c.h.b16 %v1484
  %v1561 = vunpack.c.l.b16 %v1485
  %v1562 = vunpack.c.h.b16 %v1485
  %v1563 = vunpack.c.l.b16 %v1486
  %v1564 = vunpack.c.h.b16 %v1486
  %v1565 = vunpack.c.l.b16 %v1487
  %v1566 = vunpack.c.h.b16 %v1487
  %v1567 = vunpack.c.l.b16 %v1488
  %v1568 = vunpack.c.h.b16 %v1488
  %v1569 = vunpack.c.l.b16 %v1489
  %v1570 = vunpack.c.h.b16 %v1489
  %v1571 = vunpack.c.l.b16 %v1490
  %v1572 = vunpack.c.h.b16 %v1490
  %v1573 = vunpack.c.l.b16 %v1491
  %v1574 = vunpack.c.h.b16 %v1491
  %v1575 = vunpack.c.l.b16 %v1492
  %v1576 = vunpack.c.h.b16 %v1492
  %v1577 = vunpack.c.l.b16 %v1493
  %v1578 = vunpack.c.h.b16 %v1493
  %v1579 = vunpack.c.l.b16 %v1494
  %v1580 = vunpack.c.h.b16 %v1494
  %v1581 = vunpack.c.l.b16 %v1495
  %v1582 = vunpack.c.h.b16 %v1495
  %v1583 = vunpack.c.l.b16 %v1496
  %v1584 = vunpack.c.h.b16 %v1496
  %v1585 = vunpack.c.l.b16 %v1497
  %v1586 = vunpack.c.h.b16 %v1497
  %v1587 = vunpack.c.l.b16 %v1498
  %v1588 = vunpack.c.h.b16 %v1498
  %v1589 = vunpack.c.l.b16 %v1499
  %v1590 = vunpack.c.h.b16 %v1499
  %v1591 = vunpack.c.l.b16 %v1500
  %v1592 = vunpack.c.h.b16 %v1500
  %v1593 = vunpack.c.l.b16 %v1501
  %v1594 = vunpack.c.h.b16 %v1501
  %v1595 = vunpack.c.l.b16 %v1502
  %v1596 = vunpack.c.h.b16 %v1502
  %v1597 = vunpack.c.l.b16 %v1503
  %v1598 = vunpack.c.h.b16 %v1503
  %v1599 = vunpack.c.l.b16 %v1504
  %v1600 = vunpack.c.h.b16 %v1504
  %v1601 = vpack.c.b16 %v1541, %v1537
  %v1602 = vpack.c.b16 %v1542, %v1538
  %v1603 = vpack.c.b16 %v1543, %v1539
  %v1604 = vpack.c.b16 %v1544, %v1540
  %v1605 = vpack.c.b16 %v1549, %v1545
  %v1606 = vpack.c.b16 %v1550, %v1546
  %v1607 = vpack.c.b16 %v1551, %v1547
  %v1608 = vpack.c.b16 %v1552, %v1548
  %v1609 = vpack.c.b16 %v1557, %v1553
  %v1610 = vpack.c.b16 %v1558, %v1554
  %v1611 = vpack.c.b16 %v1559, %v1555
  %v1612 = vpack.c.b16 %v1560, %v1556
  %v1613 = vpack.c.b16 %v1565, %v1561
  %v1614 = vpack.c.b16 %v1566, %v1562
  %v1615 = vpack.c.b16 %v1567, %v1563
  %v1616 = vpack.c.b16 %v1568, %v1564
  %v1617 = vpack.c.b16 %v1573, %v1569
  %v1618 = vpack.c.b16 %v1574, %v1570
  %v1619 = vpack.c.b16 %v1575, %v1571
  %v1620 = vpack.c.b16 %v1576, %v1572
  %v1621 = vpack.c.b16 %v1581, %v1577
  %v1622 = vpack.c.b16 %v1582, %v1578
  %v1623 = vpack.c.b16 %v1583, %v1579
  %v1624 = vpack.c.b16 %v1584, %v1580
  %v1625 = vpack.c.b16 %v1589, %v1585
  %v1626 = vpack.c.b16 %v1590, %v1586
  %v1627 = vpack.c.b16 %v1591, %v1587
  %v1628 = vpack.c.b16 %v1592, %v1588
  %v1629 = vpack.c.b16 %v1597, %v1593
  %v1630 = vpack.c.b16 %v1598, %v1594
  %v1631 = vpack.c.b16 %v1599, %v1595
  %v1632 = vpack.c.b16 %v1600, %v1596
  %1665 = vmatpush.bf16.msra.mxu0 %v1629
  %1666 = vmatpush.bf16.msra.mxu0 %v1625
  %1667 = vmatpush.bf16.msra.mxu0 %v1621
  %1668 = vmatpush.bf16.msra.mxu0 %v1617
  %1669 = vmatpush.bf16.msra.mxu0 %v1613
  %1670 = vmatpush.bf16.msra.mxu0 %v1609
  %1671 = vmatpush.bf16.msra.mxu0 %v1605
  %1672 = vmatpush.bf16.msra.mxu0 %v1601
  %1673 = vmatmul.bf16.gmra.mxu0 %v1472
  %v1674 = vpop.f32.mrf.mxu0
  %v1675 = vadd.f32 0.0, %v1674
  %v1676 = vpop.f32.mrf.mxu0
  %1677 = vdwg.mxu0
  %1678 = vmatpush.bf16.msra.mxu0 %v1630
  %1679 = vmatpush.bf16.msra.mxu0 %v1626
  %1680 = vmatpush.bf16.msra.mxu0 %v1622
  %1681 = vmatpush.bf16.msra.mxu0 %v1618
  %1682 = vmatpush.bf16.msra.mxu0 %v1614
  %1683 = vmatpush.bf16.msra.mxu0 %v1610
  %1684 = vmatpush.bf16.msra.mxu0 %v1606
  %1685 = vmatpush.bf16.msra.mxu0 %v1602
  %1686 = vmatmul.bf16.gmra.mxu0 %v1472
  %v1687 = vpop.f32.mrf.mxu0
  %v1688 = vadd.f32 0.0, %v1687
  %v1689 = vpop.f32.mrf.mxu0
  %1690 = vdwg.mxu0
  %1691 = vmatpush.bf16.msra.mxu0 %v1631
  %1692 = vmatpush.bf16.msra.mxu0 %v1627
  %1693 = vmatpush.bf16.msra.mxu0 %v1623
  %1694 = vmatpush.bf16.msra.mxu0 %v1619
  %1695 = vmatpush.bf16.msra.mxu0 %v1615
  %1696 = vmatpush.bf16.msra.mxu0 %v1611
  %1697 = vmatpush.bf16.msra.mxu0 %v1607
  %1698 = vmatpush.bf16.msra.mxu0 %v1603
  %1699 = vmatmul.bf16.gmra.mxu0 %v1472
  %v1700 = vpop.f32.mrf.mxu0
  %v1701 = vadd.f32 0.0, %v1700
  %v1702 = vpop.f32.mrf.mxu0
  %1703 = vdwg.mxu0
  %1704 = vmatpush.bf16.msra.mxu0 %v1632
  %1705 = vmatpush.bf16.msra.mxu0 %v1628
  %1706 = vmatpush.bf16.msra.mxu0 %v1624
  %1707 = vmatpush.bf16.msra.mxu0 %v1620
  %1708 = vmatpush.bf16.msra.mxu0 %v1616
  %1709 = vmatpush.bf16.msra.mxu0 %v1612
  %1710 = vmatpush.bf16.msra.mxu0 %v1608
  %1711 = vmatpush.bf16.msra.mxu0 %v1604
  %1712 = vmatmul.bf16.gmra.mxu0 %v1472
  %v1713 = vpop.f32.mrf.mxu0
  %v1714 = vadd.f32 0.0, %v1713
  %v1715 = vpop.f32.mrf.mxu0
  %1716 = vdwg.mxu0
  %v1717 = vadd.f32 %v1468, %v1675
  %v1718 = vadd.f32 %v1469, %v1688
  %v1719 = vadd.f32 %v1470, %v1701
  %v1720 = vadd.f32 %v1471, %v1714
  %v1721 = vxor.u32 %v1717, 2147483648
  %v1722 = vmul.f32 %v1721, 1.442695
  %v1723 = vpow.pop %v1722
  %v1724 = vadd.f32 %v1723, 1.0
  %v1725 = vrcp.pop %v1724
  %v1726 = vmul.f32 %v1724, %v1725
  %v1727 = vsub.f32 1.0, %v1726
  %v1728 = vmul.f32 %v1725, %v1727
  %v1729 = vadd.f32 %v1725, %v1728
  %vm1730 = vweird.f32 %v1724
  %vm1731 = vweird.f32 %v1725
  %vm1732 = vmor %vm1730, %vm1731
  %v1733 = vsel %vm1732, %v1725, %v1729
  %v1734 = vand.u32 2147483647, %v1724
  %vm1735 = vcmp.eq.f32.partialorder %v1734, 8.507059e+37
  %v1736 = vand.u32 %v1724, 2147483648
  %v1737 = vor.u32 1.1754944e-38, %v1736
  %v1738 = vsel %vm1735, %v1737, %v1733
  %v1739 = vmul.f32 1.0, %v1738
  %v1740 = vxor.u32 %v1718, 2147483648
  %v1741 = vmul.f32 %v1740, 1.442695
  %v1742 = vpow.pop %v1741
  %v1743 = vadd.f32 %v1742, 1.0
  %v1744 = vrcp.pop %v1743
  %v1745 = vmul.f32 %v1743, %v1744
  %v1746 = vsub.f32 1.0, %v1745
  %v1747 = vmul.f32 %v1744, %v1746
  %v1748 = vadd.f32 %v1744, %v1747
  %vm1749 = vweird.f32 %v1743
  %vm1750 = vweird.f32 %v1744
  %vm1751 = vmor %vm1749, %vm1750
  %v1752 = vsel %vm1751, %v1744, %v1748
  %v1753 = vand.u32 2147483647, %v1743
  %vm1754 = vcmp.eq.f32.partialorder %v1753, 8.507059e+37
  %v1755 = vand.u32 %v1743, 2147483648
  %v1756 = vor.u32 1.1754944e-38, %v1755
  %v1757 = vsel %vm1754, %v1756, %v1752
  %v1758 = vmul.f32 1.0, %v1757
  %v1759 = vtanh.pop %v1719
  %v1760 = vxor.u32 %v1720, 2147483648
  %v1761 = vmul.f32 %v1760, 1.442695
  %v1762 = vpow.pop %v1761
  %v1763 = vadd.f32 %v1762, 1.0
  %v1764 = vrcp.pop %v1763
  %v1765 = vmul.f32 %v1763, %v1764
  %v1766 = vsub.f32 1.0, %v1765
  %v1767 = vmul.f32 %v1764, %v1766
  %v1768 = vadd.f32 %v1764, %v1767
  %vm1769 = vweird.f32 %v1763
  %vm1770 = vweird.f32 %v1764
  %vm1771 = vmor %vm1769, %vm1770
  %v1772 = vsel %vm1771, %v1764, %v1768
  %v1773 = vand.u32 2147483647, %v1763
  %vm1774 = vcmp.eq.f32.partialorder %v1773, 8.507059e+37
  %v1775 = vand.u32 %v1763, 2147483648
  %v1776 = vor.u32 1.1754944e-38, %v1775
  %v1777 = vsel %vm1774, %v1776, %v1772
  %v1778 = vmul.f32 1.0, %v1777
  %v1779 = vmul.f32 %v1758, %v1464
  %v1780 = vmul.f32 %v1739, %v1759
  %v1781 = vadd.f32 %v1779, %v1780
  %v1782 = vtanh.pop %v1781
  %v1783 = vmul.f32 %v1778, %v1782
  %1784 = vst [vmem:[#allocation3 + $0x18] sm:$0xff] %v1783
  %v1785 = vld [vmem:[#allocation2 + $0x80] sm:$0xff]
  %v1786 = vld [vmem:[#allocation2 + $0x88] sm:$0xff]
  %v1787 = vld [vmem:[#allocation2 + $0x90] sm:$0xff]
  %v1788 = vld [vmem:[#allocation2 + $0x98] sm:$0xff]
  %v1789 = vpack.c.bf16 %v1783, %v1783
  %v1790 = vld [vmem:[%s5] sm:$0xff]
  %v1791 = vld [vmem:[%s5 + $0x8] sm:$0xff]
  %v1792 = vld [vmem:[%s5 + $0x10] sm:$0xff]
  %v1793 = vld [vmem:[%s5 + $0x18] sm:$0xff]
  %v1794 = vld [vmem:[%s5 + $0x20] sm:$0xff]
  %v1795 = vld [vmem:[%s5 + $0x28] sm:$0xff]
  %v1796 = vld [vmem:[%s5 + $0x30] sm:$0xff]
  %v1797 = vld [vmem:[%s5 + $0x38] sm:$0xff]
  %v1798 = vld [vmem:[%s5 + $0x40] sm:$0xff]
  %v1799 = vld [vmem:[%s5 + $0x48] sm:$0xff]
  %v1800 = vld [vmem:[%s5 + $0x50] sm:$0xff]
  %v1801 = vld [vmem:[%s5 + $0x58] sm:$0xff]
  %v1802 = vld [vmem:[%s5 + $0x60] sm:$0xff]
  %v1803 = vld [vmem:[%s5 + $0x68] sm:$0xff]
  %v1804 = vld [vmem:[%s5 + $0x70] sm:$0xff]
  %v1805 = vld [vmem:[%s5 + $0x78] sm:$0xff]
  %v1806 = vld [vmem:[%s5 + $0x80] sm:$0xff]
  %v1807 = vld [vmem:[%s5 + $0x88] sm:$0xff]
  %v1808 = vld [vmem:[%s5 + $0x90] sm:$0xff]
  %v1809 = vld [vmem:[%s5 + $0x98] sm:$0xff]
  %v1810 = vld [vmem:[%s5 + $0xa0] sm:$0xff]
  %v1811 = vld [vmem:[%s5 + $0xa8] sm:$0xff]
  %v1812 = vld [vmem:[%s5 + $0xb0] sm:$0xff]
  %v1813 = vld [vmem:[%s5 + $0xb8] sm:$0xff]
  %v1814 = vld [vmem:[%s5 + $0xc0] sm:$0xff]
  %v1815 = vld [vmem:[%s5 + $0xc8] sm:$0xff]
  %v1816 = vld [vmem:[%s5 + $0xd0] sm:$0xff]
  %v1817 = vld [vmem:[%s5 + $0xd8] sm:$0xff]
  %v1818 = vld [vmem:[%s5 + $0xe0] sm:$0xff]
  %v1819 = vld [vmem:[%s5 + $0xe8] sm:$0xff]
  %v1820 = vld [vmem:[%s5 + $0xf0] sm:$0xff]
  %v1821 = vld [vmem:[%s5 + $0xf8] sm:$0xff]
  %v1854 = vunpack.c.l.b16 %v1790
  %v1855 = vunpack.c.h.b16 %v1790
  %v1856 = vunpack.c.l.b16 %v1791
  %v1857 = vunpack.c.h.b16 %v1791
  %v1858 = vunpack.c.l.b16 %v1792
  %v1859 = vunpack.c.h.b16 %v1792
  %v1860 = vunpack.c.l.b16 %v1793
  %v1861 = vunpack.c.h.b16 %v1793
  %v1862 = vunpack.c.l.b16 %v1794
  %v1863 = vunpack.c.h.b16 %v1794
  %v1864 = vunpack.c.l.b16 %v1795
  %v1865 = vunpack.c.h.b16 %v1795
  %v1866 = vunpack.c.l.b16 %v1796
  %v1867 = vunpack.c.h.b16 %v1796
  %v1868 = vunpack.c.l.b16 %v1797
  %v1869 = vunpack.c.h.b16 %v1797
  %v1870 = vunpack.c.l.b16 %v1798
  %v1871 = vunpack.c.h.b16 %v1798
  %v1872 = vunpack.c.l.b16 %v1799
  %v1873 = vunpack.c.h.b16 %v1799
  %v1874 = vunpack.c.l.b16 %v1800
  %v1875 = vunpack.c.h.b16 %v1800
  %v1876 = vunpack.c.l.b16 %v1801
  %v1877 = vunpack.c.h.b16 %v1801
  %v1878 = vunpack.c.l.b16 %v1802
  %v1879 = vunpack.c.h.b16 %v1802
  %v1880 = vunpack.c.l.b16 %v1803
  %v1881 = vunpack.c.h.b16 %v1803
  %v1882 = vunpack.c.l.b16 %v1804
  %v1883 = vunpack.c.h.b16 %v1804
  %v1884 = vunpack.c.l.b16 %v1805
  %v1885 = vunpack.c.h.b16 %v1805
  %v1886 = vunpack.c.l.b16 %v1806
  %v1887 = vunpack.c.h.b16 %v1806
  %v1888 = vunpack.c.l.b16 %v1807
  %v1889 = vunpack.c.h.b16 %v1807
  %v1890 = vunpack.c.l.b16 %v1808
  %v1891 = vunpack.c.h.b16 %v1808
  %v1892 = vunpack.c.l.b16 %v1809
  %v1893 = vunpack.c.h.b16 %v1809
  %v1894 = vunpack.c.l.b16 %v1810
  %v1895 = vunpack.c.h.b16 %v1810
  %v1896 = vunpack.c.l.b16 %v1811
  %v1897 = vunpack.c.h.b16 %v1811
  %v1898 = vunpack.c.l.b16 %v1812
  %v1899 = vunpack.c.h.b16 %v1812
  %v1900 = vunpack.c.l.b16 %v1813
  %v1901 = vunpack.c.h.b16 %v1813
  %v1902 = vunpack.c.l.b16 %v1814
  %v1903 = vunpack.c.h.b16 %v1814
  %v1904 = vunpack.c.l.b16 %v1815
  %v1905 = vunpack.c.h.b16 %v1815
  %v1906 = vunpack.c.l.b16 %v1816
  %v1907 = vunpack.c.h.b16 %v1816
  %v1908 = vunpack.c.l.b16 %v1817
  %v1909 = vunpack.c.h.b16 %v1817
  %v1910 = vunpack.c.l.b16 %v1818
  %v1911 = vunpack.c.h.b16 %v1818
  %v1912 = vunpack.c.l.b16 %v1819
  %v1913 = vunpack.c.h.b16 %v1819
  %v1914 = vunpack.c.l.b16 %v1820
  %v1915 = vunpack.c.h.b16 %v1820
  %v1916 = vunpack.c.l.b16 %v1821
  %v1917 = vunpack.c.h.b16 %v1821
  %v1918 = vpack.c.b16 %v1858, %v1854
  %v1919 = vpack.c.b16 %v1859, %v1855
  %v1920 = vpack.c.b16 %v1860, %v1856
  %v1921 = vpack.c.b16 %v1861, %v1857
  %v1922 = vpack.c.b16 %v1866, %v1862
  %v1923 = vpack.c.b16 %v1867, %v1863
  %v1924 = vpack.c.b16 %v1868, %v1864
  %v1925 = vpack.c.b16 %v1869, %v1865
  %v1926 = vpack.c.b16 %v1874, %v1870
  %v1927 = vpack.c.b16 %v1875, %v1871
  %v1928 = vpack.c.b16 %v1876, %v1872
  %v1929 = vpack.c.b16 %v1877, %v1873
  %v1930 = vpack.c.b16 %v1882, %v1878
  %v1931 = vpack.c.b16 %v1883, %v1879
  %v1932 = vpack.c.b16 %v1884, %v1880
  %v1933 = vpack.c.b16 %v1885, %v1881
  %v1934 = vpack.c.b16 %v1890, %v1886
  %v1935 = vpack.c.b16 %v1891, %v1887
  %v1936 = vpack.c.b16 %v1892, %v1888
  %v1937 = vpack.c.b16 %v1893, %v1889
  %v1938 = vpack.c.b16 %v1898, %v1894
  %v1939 = vpack.c.b16 %v1899, %v1895
  %v1940 = vpack.c.b16 %v1900, %v1896
  %v1941 = vpack.c.b16 %v1901, %v1897
  %v1942 = vpack.c.b16 %v1906, %v1902
  %v1943 = vpack.c.b16 %v1907, %v1903
  %v1944 = vpack.c.b16 %v1908, %v1904
  %v1945 = vpack.c.b16 %v1909, %v1905
  %v1946 = vpack.c.b16 %v1914, %v1910
  %v1947 = vpack.c.b16 %v1915, %v1911
  %v1948 = vpack.c.b16 %v1916, %v1912
  %v1949 = vpack.c.b16 %v1917, %v1913
  %1982 = vmatpush.bf16.msra.mxu0 %v1946
  %1983 = vmatpush.bf16.msra.mxu0 %v1942
  %1984 = vmatpush.bf16.msra.mxu0 %v1938
  %1985 = vmatpush.bf16.msra.mxu0 %v1934
  %1986 = vmatpush.bf16.msra.mxu0 %v1930
  %1987 = vmatpush.bf16.msra.mxu0 %v1926
  %1988 = vmatpush.bf16.msra.mxu0 %v1922
  %1989 = vmatpush.bf16.msra.mxu0 %v1918
  %1990 = vmatmul.bf16.gmra.mxu0 %v1789
  %v1991 = vpop.f32.mrf.mxu0
  %v1992 = vadd.f32 0.0, %v1991
  %v1993 = vpop.f32.mrf.mxu0
  %1994 = vdwg.mxu0
  %1995 = vmatpush.bf16.msra.mxu0 %v1947
  %1996 = vmatpush.bf16.msra.mxu0 %v1943
  %1997 = vmatpush.bf16.msra.mxu0 %v1939
  %1998 = vmatpush.bf16.msra.mxu0 %v1935
  %1999 = vmatpush.bf16.msra.mxu0 %v1931
  %2000 = vmatpush.bf16.msra.mxu0 %v1927
  %2001 = vmatpush.bf16.msra.mxu0 %v1923
  %2002 = vmatpush.bf16.msra.mxu0 %v1919
  %2003 = vmatmul.bf16.gmra.mxu0 %v1789
  %v2004 = vpop.f32.mrf.mxu0
  %v2005 = vadd.f32 0.0, %v2004
  %v2006 = vpop.f32.mrf.mxu0
  %2007 = vdwg.mxu0
  %2008 = vmatpush.bf16.msra.mxu0 %v1948
  %2009 = vmatpush.bf16.msra.mxu0 %v1944
  %2010 = vmatpush.bf16.msra.mxu0 %v1940
  %2011 = vmatpush.bf16.msra.mxu0 %v1936
  %2012 = vmatpush.bf16.msra.mxu0 %v1932
  %2013 = vmatpush.bf16.msra.mxu0 %v1928
  %2014 = vmatpush.bf16.msra.mxu0 %v1924
  %2015 = vmatpush.bf16.msra.mxu0 %v1920
  %2016 = vmatmul.bf16.gmra.mxu0 %v1789
  %v2017 = vpop.f32.mrf.mxu0
  %v2018 = vadd.f32 0.0, %v2017
  %v2019 = vpop.f32.mrf.mxu0
  %2020 = vdwg.mxu0
  %2021 = vmatpush.bf16.msra.mxu0 %v1949
  %2022 = vmatpush.bf16.msra.mxu0 %v1945
  %2023 = vmatpush.bf16.msra.mxu0 %v1941
  %2024 = vmatpush.bf16.msra.mxu0 %v1937
  %2025 = vmatpush.bf16.msra.mxu0 %v1933
  %2026 = vmatpush.bf16.msra.mxu0 %v1929
  %2027 = vmatpush.bf16.msra.mxu0 %v1925
  %2028 = vmatpush.bf16.msra.mxu0 %v1921
  %2029 = vmatmul.bf16.gmra.mxu0 %v1789
  %v2030 = vpop.f32.mrf.mxu0
  %v2031 = vadd.f32 0.0, %v2030
  %v2032 = vpop.f32.mrf.mxu0
  %2033 = vdwg.mxu0
  %v2034 = vadd.f32 %v1785, %v1992
  %v2035 = vadd.f32 %v1786, %v2005
  %v2036 = vadd.f32 %v1787, %v2018
  %v2037 = vadd.f32 %v1788, %v2031
  %v2038 = vxor.u32 %v2034, 2147483648
  %v2039 = vmul.f32 %v2038, 1.442695
  %v2040 = vpow.pop %v2039
  %v2041 = vadd.f32 %v2040, 1.0
  %v2042 = vrcp.pop %v2041
  %v2043 = vmul.f32 %v2041, %v2042
  %v2044 = vsub.f32 1.0, %v2043
  %v2045 = vmul.f32 %v2042, %v2044
  %v2046 = vadd.f32 %v2042, %v2045
  %vm2047 = vweird.f32 %v2041
  %vm2048 = vweird.f32 %v2042
  %vm2049 = vmor %vm2047, %vm2048
  %v2050 = vsel %vm2049, %v2042, %v2046
  %v2051 = vand.u32 2147483647, %v2041
  %vm2052 = vcmp.eq.f32.partialorder %v2051, 8.507059e+37
  %v2053 = vand.u32 %v2041, 2147483648
  %v2054 = vor.u32 1.1754944e-38, %v2053
  %v2055 = vsel %vm2052, %v2054, %v2050
  %v2056 = vmul.f32 1.0, %v2055
  %v2057 = vxor.u32 %v2035, 2147483648
  %v2058 = vmul.f32 %v2057, 1.442695
  %v2059 = vpow.pop %v2058
  %v2060 = vadd.f32 %v2059, 1.0
  %v2061 = vrcp.pop %v2060
  %v2062 = vmul.f32 %v2060, %v2061
  %v2063 = vsub.f32 1.0, %v2062
  %v2064 = vmul.f32 %v2061, %v2063
  %v2065 = vadd.f32 %v2061, %v2064
  %vm2066 = vweird.f32 %v2060
  %vm2067 = vweird.f32 %v2061
  %vm2068 = vmor %vm2066, %vm2067
  %v2069 = vsel %vm2068, %v2061, %v2065
  %v2070 = vand.u32 2147483647, %v2060
  %vm2071 = vcmp.eq.f32.partialorder %v2070, 8.507059e+37
  %v2072 = vand.u32 %v2060, 2147483648
  %v2073 = vor.u32 1.1754944e-38, %v2072
  %v2074 = vsel %vm2071, %v2073, %v2069
  %v2075 = vmul.f32 1.0, %v2074
  %v2076 = vtanh.pop %v2036
  %v2077 = vxor.u32 %v2037, 2147483648
  %v2078 = vmul.f32 %v2077, 1.442695
  %v2079 = vpow.pop %v2078
  %v2080 = vadd.f32 %v2079, 1.0
  %v2081 = vrcp.pop %v2080
  %v2082 = vmul.f32 %v2080, %v2081
  %v2083 = vsub.f32 1.0, %v2082
  %v2084 = vmul.f32 %v2081, %v2083
  %v2085 = vadd.f32 %v2081, %v2084
  %vm2086 = vweird.f32 %v2080
  %vm2087 = vweird.f32 %v2081
  %vm2088 = vmor %vm2086, %vm2087
  %v2089 = vsel %vm2088, %v2081, %v2085
  %v2090 = vand.u32 2147483647, %v2080
  %vm2091 = vcmp.eq.f32.partialorder %v2090, 8.507059e+37
  %v2092 = vand.u32 %v2080, 2147483648
  %v2093 = vor.u32 1.1754944e-38, %v2092
  %v2094 = vsel %vm2091, %v2093, %v2089
  %v2095 = vmul.f32 1.0, %v2094
  %v2096 = vmul.f32 %v2075, %v1781
  %v2097 = vmul.f32 %v2056, %v2076
  %v2098 = vadd.f32 %v2096, %v2097
  %v2099 = vtanh.pop %v2098
  %v2100 = vmul.f32 %v2095, %v2099
  %2101 = vst [vmem:[#allocation3 + $0x20] sm:$0xff] %v2100
  %v2102 = vld [vmem:[#allocation2 + $0xa0] sm:$0xff]
  %v2103 = vld [vmem:[#allocation2 + $0xa8] sm:$0xff]
  %v2104 = vld [vmem:[#allocation2 + $0xb0] sm:$0xff]
  %v2105 = vld [vmem:[#allocation2 + $0xb8] sm:$0xff]
  %v2106 = vpack.c.bf16 %v2100, %v2100
  %v2107 = vld [vmem:[%s5] sm:$0xff]
  %v2108 = vld [vmem:[%s5 + $0x8] sm:$0xff]
  %v2109 = vld [vmem:[%s5 + $0x10] sm:$0xff]
  %v2110 = vld [vmem:[%s5 + $0x18] sm:$0xff]
  %v2111 = vld [vmem:[%s5 + $0x20] sm:$0xff]
  %v2112 = vld [vmem:[%s5 + $0x28] sm:$0xff]
  %v2113 = vld [vmem:[%s5 + $0x30] sm:$0xff]
  %v2114 = vld [vmem:[%s5 + $0x38] sm:$0xff]
  %v2115 = vld [vmem:[%s5 + $0x40] sm:$0xff]
  %v2116 = vld [vmem:[%s5 + $0x48] sm:$0xff]
  %v2117 = vld [vmem:[%s5 + $0x50] sm:$0xff]
  %v2118 = vld [vmem:[%s5 + $0x58] sm:$0xff]
  %v2119 = vld [vmem:[%s5 + $0x60] sm:$0xff]
  %v2120 = vld [vmem:[%s5 + $0x68] sm:$0xff]
  %v2121 = vld [vmem:[%s5 + $0x70] sm:$0xff]
  %v2122 = vld [vmem:[%s5 + $0x78] sm:$0xff]
  %v2123 = vld [vmem:[%s5 + $0x80] sm:$0xff]
  %v2124 = vld [vmem:[%s5 + $0x88] sm:$0xff]
  %v2125 = vld [vmem:[%s5 + $0x90] sm:$0xff]
  %v2126 = vld [vmem:[%s5 + $0x98] sm:$0xff]
  %v2127 = vld [vmem:[%s5 + $0xa0] sm:$0xff]
  %v2128 = vld [vmem:[%s5 + $0xa8] sm:$0xff]
  %v2129 = vld [vmem:[%s5 + $0xb0] sm:$0xff]
  %v2130 = vld [vmem:[%s5 + $0xb8] sm:$0xff]
  %v2131 = vld [vmem:[%s5 + $0xc0] sm:$0xff]
  %v2132 = vld [vmem:[%s5 + $0xc8] sm:$0xff]
  %v2133 = vld [vmem:[%s5 + $0xd0] sm:$0xff]
  %v2134 = vld [vmem:[%s5 + $0xd8] sm:$0xff]
  %v2135 = vld [vmem:[%s5 + $0xe0] sm:$0xff]
  %v2136 = vld [vmem:[%s5 + $0xe8] sm:$0xff]
  %v2137 = vld [vmem:[%s5 + $0xf0] sm:$0xff]
  %v2138 = vld [vmem:[%s5 + $0xf8] sm:$0xff]
  %v2171 = vunpack.c.l.b16 %v2107
  %v2172 = vunpack.c.h.b16 %v2107
  %v2173 = vunpack.c.l.b16 %v2108
  %v2174 = vunpack.c.h.b16 %v2108
  %v2175 = vunpack.c.l.b16 %v2109
  %v2176 = vunpack.c.h.b16 %v2109
  %v2177 = vunpack.c.l.b16 %v2110
  %v2178 = vunpack.c.h.b16 %v2110
  %v2179 = vunpack.c.l.b16 %v2111
  %v2180 = vunpack.c.h.b16 %v2111
  %v2181 = vunpack.c.l.b16 %v2112
  %v2182 = vunpack.c.h.b16 %v2112
  %v2183 = vunpack.c.l.b16 %v2113
  %v2184 = vunpack.c.h.b16 %v2113
  %v2185 = vunpack.c.l.b16 %v2114
  %v2186 = vunpack.c.h.b16 %v2114
  %v2187 = vunpack.c.l.b16 %v2115
  %v2188 = vunpack.c.h.b16 %v2115
  %v2189 = vunpack.c.l.b16 %v2116
  %v2190 = vunpack.c.h.b16 %v2116
  %v2191 = vunpack.c.l.b16 %v2117
  %v2192 = vunpack.c.h.b16 %v2117
  %v2193 = vunpack.c.l.b16 %v2118
  %v2194 = vunpack.c.h.b16 %v2118
  %v2195 = vunpack.c.l.b16 %v2119
  %v2196 = vunpack.c.h.b16 %v2119
  %v2197 = vunpack.c.l.b16 %v2120
  %v2198 = vunpack.c.h.b16 %v2120
  %v2199 = vunpack.c.l.b16 %v2121
  %v2200 = vunpack.c.h.b16 %v2121
  %v2201 = vunpack.c.l.b16 %v2122
  %v2202 = vunpack.c.h.b16 %v2122
  %v2203 = vunpack.c.l.b16 %v2123
  %v2204 = vunpack.c.h.b16 %v2123
  %v2205 = vunpack.c.l.b16 %v2124
  %v2206 = vunpack.c.h.b16 %v2124
  %v2207 = vunpack.c.l.b16 %v2125
  %v2208 = vunpack.c.h.b16 %v2125
  %v2209 = vunpack.c.l.b16 %v2126
  %v2210 = vunpack.c.h.b16 %v2126
  %v2211 = vunpack.c.l.b16 %v2127
  %v2212 = vunpack.c.h.b16 %v2127
  %v2213 = vunpack.c.l.b16 %v2128
  %v2214 = vunpack.c.h.b16 %v2128
  %v2215 = vunpack.c.l.b16 %v2129
  %v2216 = vunpack.c.h.b16 %v2129
  %v2217 = vunpack.c.l.b16 %v2130
  %v2218 = vunpack.c.h.b16 %v2130
  %v2219 = vunpack.c.l.b16 %v2131
  %v2220 = vunpack.c.h.b16 %v2131
  %v2221 = vunpack.c.l.b16 %v2132
  %v2222 = vunpack.c.h.b16 %v2132
  %v2223 = vunpack.c.l.b16 %v2133
  %v2224 = vunpack.c.h.b16 %v2133
  %v2225 = vunpack.c.l.b16 %v2134
  %v2226 = vunpack.c.h.b16 %v2134
  %v2227 = vunpack.c.l.b16 %v2135
  %v2228 = vunpack.c.h.b16 %v2135
  %v2229 = vunpack.c.l.b16 %v2136
  %v2230 = vunpack.c.h.b16 %v2136
  %v2231 = vunpack.c.l.b16 %v2137
  %v2232 = vunpack.c.h.b16 %v2137
  %v2233 = vunpack.c.l.b16 %v2138
  %v2234 = vunpack.c.h.b16 %v2138
  %v2235 = vpack.c.b16 %v2175, %v2171
  %v2236 = vpack.c.b16 %v2176, %v2172
  %v2237 = vpack.c.b16 %v2177, %v2173
  %v2238 = vpack.c.b16 %v2178, %v2174
  %v2239 = vpack.c.b16 %v2183, %v2179
  %v2240 = vpack.c.b16 %v2184, %v2180
  %v2241 = vpack.c.b16 %v2185, %v2181
  %v2242 = vpack.c.b16 %v2186, %v2182
  %v2243 = vpack.c.b16 %v2191, %v2187
  %v2244 = vpack.c.b16 %v2192, %v2188
  %v2245 = vpack.c.b16 %v2193, %v2189
  %v2246 = vpack.c.b16 %v2194, %v2190
  %v2247 = vpack.c.b16 %v2199, %v2195
  %v2248 = vpack.c.b16 %v2200, %v2196
  %v2249 = vpack.c.b16 %v2201, %v2197
  %v2250 = vpack.c.b16 %v2202, %v2198
  %v2251 = vpack.c.b16 %v2207, %v2203
  %v2252 = vpack.c.b16 %v2208, %v2204
  %v2253 = vpack.c.b16 %v2209, %v2205
  %v2254 = vpack.c.b16 %v2210, %v2206
  %v2255 = vpack.c.b16 %v2215, %v2211
  %v2256 = vpack.c.b16 %v2216, %v2212
  %v2257 = vpack.c.b16 %v2217, %v2213
  %v2258 = vpack.c.b16 %v2218, %v2214
  %v2259 = vpack.c.b16 %v2223, %v2219
  %v2260 = vpack.c.b16 %v2224, %v2220
  %v2261 = vpack.c.b16 %v2225, %v2221
  %v2262 = vpack.c.b16 %v2226, %v2222
  %v2263 = vpack.c.b16 %v2231, %v2227
  %v2264 = vpack.c.b16 %v2232, %v2228
  %v2265 = vpack.c.b16 %v2233, %v2229
  %v2266 = vpack.c.b16 %v2234, %v2230
  %2299 = vmatpush.bf16.msra.mxu0 %v2263
  %2300 = vmatpush.bf16.msra.mxu0 %v2259
  %2301 = vmatpush.bf16.msra.mxu0 %v2255
  %2302 = vmatpush.bf16.msra.mxu0 %v2251
  %2303 = vmatpush.bf16.msra.mxu0 %v2247
  %2304 = vmatpush.bf16.msra.mxu0 %v2243
  %2305 = vmatpush.bf16.msra.mxu0 %v2239
  %2306 = vmatpush.bf16.msra.mxu0 %v2235
  %2307 = vmatmul.bf16.gmra.mxu0 %v2106
  %v2308 = vpop.f32.mrf.mxu0
  %v2309 = vadd.f32 0.0, %v2308
  %v2310 = vpop.f32.mrf.mxu0
  %2311 = vdwg.mxu0
  %2312 = vmatpush.bf16.msra.mxu0 %v2264
  %2313 = vmatpush.bf16.msra.mxu0 %v2260
  %2314 = vmatpush.bf16.msra.mxu0 %v2256
  %2315 = vmatpush.bf16.msra.mxu0 %v2252
  %2316 = vmatpush.bf16.msra.mxu0 %v2248
  %2317 = vmatpush.bf16.msra.mxu0 %v2244
  %2318 = vmatpush.bf16.msra.mxu0 %v2240
  %2319 = vmatpush.bf16.msra.mxu0 %v2236
  %2320 = vmatmul.bf16.gmra.mxu0 %v2106
  %v2321 = vpop.f32.mrf.mxu0
  %v2322 = vadd.f32 0.0, %v2321
  %v2323 = vpop.f32.mrf.mxu0
  %2324 = vdwg.mxu0
  %2325 = vmatpush.bf16.msra.mxu0 %v2265
  %2326 = vmatpush.bf16.msra.mxu0 %v2261
  %2327 = vmatpush.bf16.msra.mxu0 %v2257
  %2328 = vmatpush.bf16.msra.mxu0 %v2253
  %2329 = vmatpush.bf16.msra.mxu0 %v2249
  %2330 = vmatpush.bf16.msra.mxu0 %v2245
  %2331 = vmatpush.bf16.msra.mxu0 %v2241
  %2332 = vmatpush.bf16.msra.mxu0 %v2237
  %2333 = vmatmul.bf16.gmra.mxu0 %v2106
  %v2334 = vpop.f32.mrf.mxu0
  %v2335 = vadd.f32 0.0, %v2334
  %v2336 = vpop.f32.mrf.mxu0
  %2337 = vdwg.mxu0
  %2338 = vmatpush.bf16.msra.mxu0 %v2266
  %2339 = vmatpush.bf16.msra.mxu0 %v2262
  %2340 = vmatpush.bf16.msra.mxu0 %v2258
  %2341 = vmatpush.bf16.msra.mxu0 %v2254
  %2342 = vmatpush.bf16.msra.mxu0 %v2250
  %2343 = vmatpush.bf16.msra.mxu0 %v2246
  %2344 = vmatpush.bf16.msra.mxu0 %v2242
  %2345 = vmatpush.bf16.msra.mxu0 %v2238
  %2346 = vmatmul.bf16.gmra.mxu0 %v2106
  %v2347 = vpop.f32.mrf.mxu0
  %v2348 = vadd.f32 0.0, %v2347
  %v2349 = vpop.f32.mrf.mxu0
  %2350 = vdwg.mxu0
  %v2351 = vadd.f32 %v2102, %v2309
  %v2352 = vadd.f32 %v2103, %v2322
  %v2353 = vadd.f32 %v2104, %v2335
  %v2354 = vadd.f32 %v2105, %v2348
  %v2355 = vxor.u32 %v2351, 2147483648
  %v2356 = vmul.f32 %v2355, 1.442695
  %v2357 = vpow.pop %v2356
  %v2358 = vadd.f32 %v2357, 1.0
  %v2359 = vrcp.pop %v2358
  %v2360 = vmul.f32 %v2358, %v2359
  %v2361 = vsub.f32 1.0, %v2360
  %v2362 = vmul.f32 %v2359, %v2361
  %v2363 = vadd.f32 %v2359, %v2362
  %vm2364 = vweird.f32 %v2358
  %vm2365 = vweird.f32 %v2359
  %vm2366 = vmor %vm2364, %vm2365
  %v2367 = vsel %vm2366, %v2359, %v2363
  %v2368 = vand.u32 2147483647, %v2358
  %vm2369 = vcmp.eq.f32.partialorder %v2368, 8.507059e+37
  %v2370 = vand.u32 %v2358, 2147483648
  %v2371 = vor.u32 1.1754944e-38, %v2370
  %v2372 = vsel %vm2369, %v2371, %v2367
  %v2373 = vmul.f32 1.0, %v2372
  %v2374 = vxor.u32 %v2352, 2147483648
  %v2375 = vmul.f32 %v2374, 1.442695
  %v2376 = vpow.pop %v2375
  %v2377 = vadd.f32 %v2376, 1.0
  %v2378 = vrcp.pop %v2377
  %v2379 = vmul.f32 %v2377, %v2378
  %v2380 = vsub.f32 1.0, %v2379
  %v2381 = vmul.f32 %v2378, %v2380
  %v2382 = vadd.f32 %v2378, %v2381
  %vm2383 = vweird.f32 %v2377
  %vm2384 = vweird.f32 %v2378
  %vm2385 = vmor %vm2383, %vm2384
  %v2386 = vsel %vm2385, %v2378, %v2382
  %v2387 = vand.u32 2147483647, %v2377
  %vm2388 = vcmp.eq.f32.partialorder %v2387, 8.507059e+37
  %v2389 = vand.u32 %v2377, 2147483648
  %v2390 = vor.u32 1.1754944e-38, %v2389
  %v2391 = vsel %vm2388, %v2390, %v2386
  %v2392 = vmul.f32 1.0, %v2391
  %v2393 = vtanh.pop %v2353
  %v2394 = vxor.u32 %v2354, 2147483648
  %v2395 = vmul.f32 %v2394, 1.442695
  %v2396 = vpow.pop %v2395
  %v2397 = vadd.f32 %v2396, 1.0
  %v2398 = vrcp.pop %v2397
  %v2399 = vmul.f32 %v2397, %v2398
  %v2400 = vsub.f32 1.0, %v2399
  %v2401 = vmul.f32 %v2398, %v2400
  %v2402 = vadd.f32 %v2398, %v2401
  %vm2403 = vweird.f32 %v2397
  %vm2404 = vweird.f32 %v2398
  %vm2405 = vmor %vm2403, %vm2404
  %v2406 = vsel %vm2405, %v2398, %v2402
  %v2407 = vand.u32 2147483647, %v2397
  %vm2408 = vcmp.eq.f32.partialorder %v2407, 8.507059e+37
  %v2409 = vand.u32 %v2397, 2147483648
  %v2410 = vor.u32 1.1754944e-38, %v2409
  %v2411 = vsel %vm2408, %v2410, %v2406
  %v2412 = vmul.f32 1.0, %v2411
  %v2413 = vmul.f32 %v2392, %v2098
  %v2414 = vmul.f32 %v2373, %v2393
  %v2415 = vadd.f32 %v2413, %v2414
  %v2416 = vtanh.pop %v2415
  %v2417 = vmul.f32 %v2412, %v2416
  %2418 = vst [vmem:[#allocation3 + $0x28] sm:$0xff] %v2417
  %v2419 = vld [vmem:[#allocation2 + $0xc0] sm:$0xff]
  %v2420 = vld [vmem:[#allocation2 + $0xc8] sm:$0xff]
  %v2421 = vld [vmem:[#allocation2 + $0xd0] sm:$0xff]
  %v2422 = vld [vmem:[#allocation2 + $0xd8] sm:$0xff]
  %v2423 = vpack.c.bf16 %v2417, %v2417
  %v2424 = vld [vmem:[%s5] sm:$0xff]
  %v2425 = vld [vmem:[%s5 + $0x8] sm:$0xff]
  %v2426 = vld [vmem:[%s5 + $0x10] sm:$0xff]
  %v2427 = vld [vmem:[%s5 + $0x18] sm:$0xff]
  %v2428 = vld [vmem:[%s5 + $0x20] sm:$0xff]
  %v2429 = vld [vmem:[%s5 + $0x28] sm:$0xff]
  %v2430 = vld [vmem:[%s5 + $0x30] sm:$0xff]
  %v2431 = vld [vmem:[%s5 + $0x38] sm:$0xff]
  %v2432 = vld [vmem:[%s5 + $0x40] sm:$0xff]
  %v2433 = vld [vmem:[%s5 + $0x48] sm:$0xff]
  %v2434 = vld [vmem:[%s5 + $0x50] sm:$0xff]
  %v2435 = vld [vmem:[%s5 + $0x58] sm:$0xff]
  %v2436 = vld [vmem:[%s5 + $0x60] sm:$0xff]
  %v2437 = vld [vmem:[%s5 + $0x68] sm:$0xff]
  %v2438 = vld [vmem:[%s5 + $0x70] sm:$0xff]
  %v2439 = vld [vmem:[%s5 + $0x78] sm:$0xff]
  %v2440 = vld [vmem:[%s5 + $0x80] sm:$0xff]
  %v2441 = vld [vmem:[%s5 + $0x88] sm:$0xff]
  %v2442 = vld [vmem:[%s5 + $0x90] sm:$0xff]
  %v2443 = vld [vmem:[%s5 + $0x98] sm:$0xff]
  %v2444 = vld [vmem:[%s5 + $0xa0] sm:$0xff]
  %v2445 = vld [vmem:[%s5 + $0xa8] sm:$0xff]
  %v2446 = vld [vmem:[%s5 + $0xb0] sm:$0xff]
  %v2447 = vld [vmem:[%s5 + $0xb8] sm:$0xff]
  %v2448 = vld [vmem:[%s5 + $0xc0] sm:$0xff]
  %v2449 = vld [vmem:[%s5 + $0xc8] sm:$0xff]
  %v2450 = vld [vmem:[%s5 + $0xd0] sm:$0xff]
  %v2451 = vld [vmem:[%s5 + $0xd8] sm:$0xff]
  %v2452 = vld [vmem:[%s5 + $0xe0] sm:$0xff]
  %v2453 = vld [vmem:[%s5 + $0xe8] sm:$0xff]
  %v2454 = vld [vmem:[%s5 + $0xf0] sm:$0xff]
  %v2455 = vld [vmem:[%s5 + $0xf8] sm:$0xff]
  %v2488 = vunpack.c.l.b16 %v2424
  %v2489 = vunpack.c.h.b16 %v2424
  %v2490 = vunpack.c.l.b16 %v2425
  %v2491 = vunpack.c.h.b16 %v2425
  %v2492 = vunpack.c.l.b16 %v2426
  %v2493 = vunpack.c.h.b16 %v2426
  %v2494 = vunpack.c.l.b16 %v2427
  %v2495 = vunpack.c.h.b16 %v2427
  %v2496 = vunpack.c.l.b16 %v2428
  %v2497 = vunpack.c.h.b16 %v2428
  %v2498 = vunpack.c.l.b16 %v2429
  %v2499 = vunpack.c.h.b16 %v2429
  %v2500 = vunpack.c.l.b16 %v2430
  %v2501 = vunpack.c.h.b16 %v2430
  %v2502 = vunpack.c.l.b16 %v2431
  %v2503 = vunpack.c.h.b16 %v2431
  %v2504 = vunpack.c.l.b16 %v2432
  %v2505 = vunpack.c.h.b16 %v2432
  %v2506 = vunpack.c.l.b16 %v2433
  %v2507 = vunpack.c.h.b16 %v2433
  %v2508 = vunpack.c.l.b16 %v2434
  %v2509 = vunpack.c.h.b16 %v2434
  %v2510 = vunpack.c.l.b16 %v2435
  %v2511 = vunpack.c.h.b16 %v2435
  %v2512 = vunpack.c.l.b16 %v2436
  %v2513 = vunpack.c.h.b16 %v2436
  %v2514 = vunpack.c.l.b16 %v2437
  %v2515 = vunpack.c.h.b16 %v2437
  %v2516 = vunpack.c.l.b16 %v2438
  %v2517 = vunpack.c.h.b16 %v2438
  %v2518 = vunpack.c.l.b16 %v2439
  %v2519 = vunpack.c.h.b16 %v2439
  %v2520 = vunpack.c.l.b16 %v2440
  %v2521 = vunpack.c.h.b16 %v2440
  %v2522 = vunpack.c.l.b16 %v2441
  %v2523 = vunpack.c.h.b16 %v2441
  %v2524 = vunpack.c.l.b16 %v2442
  %v2525 = vunpack.c.h.b16 %v2442
  %v2526 = vunpack.c.l.b16 %v2443
  %v2527 = vunpack.c.h.b16 %v2443
  %v2528 = vunpack.c.l.b16 %v2444
  %v2529 = vunpack.c.h.b16 %v2444
  %v2530 = vunpack.c.l.b16 %v2445
  %v2531 = vunpack.c.h.b16 %v2445
  %v2532 = vunpack.c.l.b16 %v2446
  %v2533 = vunpack.c.h.b16 %v2446
  %v2534 = vunpack.c.l.b16 %v2447
  %v2535 = vunpack.c.h.b16 %v2447
  %v2536 = vunpack.c.l.b16 %v2448
  %v2537 = vunpack.c.h.b16 %v2448
  %v2538 = vunpack.c.l.b16 %v2449
  %v2539 = vunpack.c.h.b16 %v2449
  %v2540 = vunpack.c.l.b16 %v2450
  %v2541 = vunpack.c.h.b16 %v2450
  %v2542 = vunpack.c.l.b16 %v2451
  %v2543 = vunpack.c.h.b16 %v2451
  %v2544 = vunpack.c.l.b16 %v2452
  %v2545 = vunpack.c.h.b16 %v2452
  %v2546 = vunpack.c.l.b16 %v2453
  %v2547 = vunpack.c.h.b16 %v2453
  %v2548 = vunpack.c.l.b16 %v2454
  %v2549 = vunpack.c.h.b16 %v2454
  %v2550 = vunpack.c.l.b16 %v2455
  %v2551 = vunpack.c.h.b16 %v2455
  %v2552 = vpack.c.b16 %v2492, %v2488
  %v2553 = vpack.c.b16 %v2493, %v2489
  %v2554 = vpack.c.b16 %v2494, %v2490
  %v2555 = vpack.c.b16 %v2495, %v2491
  %v2556 = vpack.c.b16 %v2500, %v2496
  %v2557 = vpack.c.b16 %v2501, %v2497
  %v2558 = vpack.c.b16 %v2502, %v2498
  %v2559 = vpack.c.b16 %v2503, %v2499
  %v2560 = vpack.c.b16 %v2508, %v2504
  %v2561 = vpack.c.b16 %v2509, %v2505
  %v2562 = vpack.c.b16 %v2510, %v2506
  %v2563 = vpack.c.b16 %v2511, %v2507
  %v2564 = vpack.c.b16 %v2516, %v2512
  %v2565 = vpack.c.b16 %v2517, %v2513
  %v2566 = vpack.c.b16 %v2518, %v2514
  %v2567 = vpack.c.b16 %v2519, %v2515
  %v2568 = vpack.c.b16 %v2524, %v2520
  %v2569 = vpack.c.b16 %v2525, %v2521
  %v2570 = vpack.c.b16 %v2526, %v2522
  %v2571 = vpack.c.b16 %v2527, %v2523
  %v2572 = vpack.c.b16 %v2532, %v2528
  %v2573 = vpack.c.b16 %v2533, %v2529
  %v2574 = vpack.c.b16 %v2534, %v2530
  %v2575 = vpack.c.b16 %v2535, %v2531
  %v2576 = vpack.c.b16 %v2540, %v2536
  %v2577 = vpack.c.b16 %v2541, %v2537
  %v2578 = vpack.c.b16 %v2542, %v2538
  %v2579 = vpack.c.b16 %v2543, %v2539
  %v2580 = vpack.c.b16 %v2548, %v2544
  %v2581 = vpack.c.b16 %v2549, %v2545
  %v2582 = vpack.c.b16 %v2550, %v2546
  %v2583 = vpack.c.b16 %v2551, %v2547
  %2616 = vmatpush.bf16.msra.mxu0 %v2580
  %2617 = vmatpush.bf16.msra.mxu0 %v2576
  %2618 = vmatpush.bf16.msra.mxu0 %v2572
  %2619 = vmatpush.bf16.msra.mxu0 %v2568
  %2620 = vmatpush.bf16.msra.mxu0 %v2564
  %2621 = vmatpush.bf16.msra.mxu0 %v2560
  %2622 = vmatpush.bf16.msra.mxu0 %v2556
  %2623 = vmatpush.bf16.msra.mxu0 %v2552
  %2624 = vmatmul.bf16.gmra.mxu0 %v2423
  %v2625 = vpop.f32.mrf.mxu0
  %v2626 = vadd.f32 0.0, %v2625
  %v2627 = vpop.f32.mrf.mxu0
  %2628 = vdwg.mxu0
  %2629 = vmatpush.bf16.msra.mxu0 %v2581
  %2630 = vmatpush.bf16.msra.mxu0 %v2577
  %2631 = vmatpush.bf16.msra.mxu0 %v2573
  %2632 = vmatpush.bf16.msra.mxu0 %v2569
  %2633 = vmatpush.bf16.msra.mxu0 %v2565
  %2634 = vmatpush.bf16.msra.mxu0 %v2561
  %2635 = vmatpush.bf16.msra.mxu0 %v2557
  %2636 = vmatpush.bf16.msra.mxu0 %v2553
  %2637 = vmatmul.bf16.gmra.mxu0 %v2423
  %v2638 = vpop.f32.mrf.mxu0
  %v2639 = vadd.f32 0.0, %v2638
  %v2640 = vpop.f32.mrf.mxu0
  %2641 = vdwg.mxu0
  %2642 = vmatpush.bf16.msra.mxu0 %v2582
  %2643 = vmatpush.bf16.msra.mxu0 %v2578
  %2644 = vmatpush.bf16.msra.mxu0 %v2574
  %2645 = vmatpush.bf16.msra.mxu0 %v2570
  %2646 = vmatpush.bf16.msra.mxu0 %v2566
  %2647 = vmatpush.bf16.msra.mxu0 %v2562
  %2648 = vmatpush.bf16.msra.mxu0 %v2558
  %2649 = vmatpush.bf16.msra.mxu0 %v2554
  %2650 = vmatmul.bf16.gmra.mxu0 %v2423
  %v2651 = vpop.f32.mrf.mxu0
  %v2652 = vadd.f32 0.0, %v2651
  %v2653 = vpop.f32.mrf.mxu0
  %2654 = vdwg.mxu0
  %2655 = vmatpush.bf16.msra.mxu0 %v2583
  %2656 = vmatpush.bf16.msra.mxu0 %v2579
  %2657 = vmatpush.bf16.msra.mxu0 %v2575
  %2658 = vmatpush.bf16.msra.mxu0 %v2571
  %2659 = vmatpush.bf16.msra.mxu0 %v2567
  %2660 = vmatpush.bf16.msra.mxu0 %v2563
  %2661 = vmatpush.bf16.msra.mxu0 %v2559
  %2662 = vmatpush.bf16.msra.mxu0 %v2555
  %2663 = vmatmul.bf16.gmra.mxu0 %v2423
  %v2664 = vpop.f32.mrf.mxu0
  %v2665 = vadd.f32 0.0, %v2664
  %v2666 = vpop.f32.mrf.mxu0
  %2667 = vdwg.mxu0
  %v2668 = vadd.f32 %v2419, %v2626
  %v2669 = vadd.f32 %v2420, %v2639
  %v2670 = vadd.f32 %v2421, %v2652
  %v2671 = vadd.f32 %v2422, %v2665
  %v2672 = vxor.u32 %v2668, 2147483648
  %v2673 = vmul.f32 %v2672, 1.442695
  %v2674 = vpow.pop %v2673
  %v2675 = vadd.f32 %v2674, 1.0
  %v2676 = vrcp.pop %v2675
  %v2677 = vmul.f32 %v2675, %v2676
  %v2678 = vsub.f32 1.0, %v2677
  %v2679 = vmul.f32 %v2676, %v2678
  %v2680 = vadd.f32 %v2676, %v2679
  %vm2681 = vweird.f32 %v2675
  %vm2682 = vweird.f32 %v2676
  %vm2683 = vmor %vm2681, %vm2682
  %v2684 = vsel %vm2683, %v2676, %v2680
  %v2685 = vand.u32 2147483647, %v2675
  %vm2686 = vcmp.eq.f32.partialorder %v2685, 8.507059e+37
  %v2687 = vand.u32 %v2675, 2147483648
  %v2688 = vor.u32 1.1754944e-38, %v2687
  %v2689 = vsel %vm2686, %v2688, %v2684
  %v2690 = vmul.f32 1.0, %v2689
  %v2691 = vxor.u32 %v2669, 2147483648
  %v2692 = vmul.f32 %v2691, 1.442695
  %v2693 = vpow.pop %v2692
  %v2694 = vadd.f32 %v2693, 1.0
  %v2695 = vrcp.pop %v2694
  %v2696 = vmul.f32 %v2694, %v2695
  %v2697 = vsub.f32 1.0, %v2696
  %v2698 = vmul.f32 %v2695, %v2697
  %v2699 = vadd.f32 %v2695, %v2698
  %vm2700 = vweird.f32 %v2694
  %vm2701 = vweird.f32 %v2695
  %vm2702 = vmor %vm2700, %vm2701
  %v2703 = vsel %vm2702, %v2695, %v2699
  %v2704 = vand.u32 2147483647, %v2694
  %vm2705 = vcmp.eq.f32.partialorder %v2704, 8.507059e+37
  %v2706 = vand.u32 %v2694, 2147483648
  %v2707 = vor.u32 1.1754944e-38, %v2706
  %v2708 = vsel %vm2705, %v2707, %v2703
  %v2709 = vmul.f32 1.0, %v2708
  %v2710 = vtanh.pop %v2670
  %v2711 = vxor.u32 %v2671, 2147483648
  %v2712 = vmul.f32 %v2711, 1.442695
  %v2713 = vpow.pop %v2712
  %v2714 = vadd.f32 %v2713, 1.0
  %v2715 = vrcp.pop %v2714
  %v2716 = vmul.f32 %v2714, %v2715
  %v2717 = vsub.f32 1.0, %v2716
  %v2718 = vmul.f32 %v2715, %v2717
  %v2719 = vadd.f32 %v2715, %v2718
  %vm2720 = vweird.f32 %v2714
  %vm2721 = vweird.f32 %v2715
  %vm2722 = vmor %vm2720, %vm2721
  %v2723 = vsel %vm2722, %v2715, %v2719
  %v2724 = vand.u32 2147483647, %v2714
  %vm2725 = vcmp.eq.f32.partialorder %v2724, 8.507059e+37
  %v2726 = vand.u32 %v2714, 2147483648
  %v2727 = vor.u32 1.1754944e-38, %v2726
  %v2728 = vsel %vm2725, %v2727, %v2723
  %v2729 = vmul.f32 1.0, %v2728
  %v2730 = vmul.f32 %v2709, %v2415
  %v2731 = vmul.f32 %v2690, %v2710
  %v2732 = vadd.f32 %v2730, %v2731
  %v2733 = vtanh.pop %v2732
  %v2734 = vmul.f32 %v2729, %v2733
  %2735 = vst [vmem:[#allocation3 + $0x30] sm:$0xff] %v2734
  %v2736 = vld [vmem:[#allocation2 + $0xe0] sm:$0xff]
  %v2737 = vld [vmem:[#allocation2 + $0xe8] sm:$0xff]
  %v2738 = vld [vmem:[#allocation2 + $0xf0] sm:$0xff]
  %v2739 = vld [vmem:[#allocation2 + $0xf8] sm:$0xff]
  %v2740 = vpack.c.bf16 %v2734, %v2734
  %v2741 = vld [vmem:[%s5] sm:$0xff]
  %v2742 = vld [vmem:[%s5 + $0x8] sm:$0xff]
  %v2743 = vld [vmem:[%s5 + $0x10] sm:$0xff]
  %v2744 = vld [vmem:[%s5 + $0x18] sm:$0xff]
  %v2745 = vld [vmem:[%s5 + $0x20] sm:$0xff]
  %v2746 = vld [vmem:[%s5 + $0x28] sm:$0xff]
  %v2747 = vld [vmem:[%s5 + $0x30] sm:$0xff]
  %v2748 = vld [vmem:[%s5 + $0x38] sm:$0xff]
  %v2749 = vld [vmem:[%s5 + $0x40] sm:$0xff]
  %v2750 = vld [vmem:[%s5 + $0x48] sm:$0xff]
  %v2751 = vld [vmem:[%s5 + $0x50] sm:$0xff]
  %v2752 = vld [vmem:[%s5 + $0x58] sm:$0xff]
  %v2753 = vld [vmem:[%s5 + $0x60] sm:$0xff]
  %v2754 = vld [vmem:[%s5 + $0x68] sm:$0xff]
  %v2755 = vld [vmem:[%s5 + $0x70] sm:$0xff]
  %v2756 = vld [vmem:[%s5 + $0x78] sm:$0xff]
  %v2757 = vld [vmem:[%s5 + $0x80] sm:$0xff]
  %v2758 = vld [vmem:[%s5 + $0x88] sm:$0xff]
  %v2759 = vld [vmem:[%s5 + $0x90] sm:$0xff]
  %v2760 = vld [vmem:[%s5 + $0x98] sm:$0xff]
  %v2761 = vld [vmem:[%s5 + $0xa0] sm:$0xff]
  %v2762 = vld [vmem:[%s5 + $0xa8] sm:$0xff]
  %v2763 = vld [vmem:[%s5 + $0xb0] sm:$0xff]
  %v2764 = vld [vmem:[%s5 + $0xb8] sm:$0xff]
  %v2765 = vld [vmem:[%s5 + $0xc0] sm:$0xff]
  %v2766 = vld [vmem:[%s5 + $0xc8] sm:$0xff]
  %v2767 = vld [vmem:[%s5 + $0xd0] sm:$0xff]
  %v2768 = vld [vmem:[%s5 + $0xd8] sm:$0xff]
  %v2769 = vld [vmem:[%s5 + $0xe0] sm:$0xff]
  %v2770 = vld [vmem:[%s5 + $0xe8] sm:$0xff]
  %v2771 = vld [vmem:[%s5 + $0xf0] sm:$0xff]
  %v2772 = vld [vmem:[%s5 + $0xf8] sm:$0xff]
  %v2805 = vunpack.c.l.b16 %v2741
  %v2806 = vunpack.c.h.b16 %v2741
  %v2807 = vunpack.c.l.b16 %v2742
  %v2808 = vunpack.c.h.b16 %v2742
  %v2809 = vunpack.c.l.b16 %v2743
  %v2810 = vunpack.c.h.b16 %v2743
  %v2811 = vunpack.c.l.b16 %v2744
  %v2812 = vunpack.c.h.b16 %v2744
  %v2813 = vunpack.c.l.b16 %v2745
  %v2814 = vunpack.c.h.b16 %v2745
  %v2815 = vunpack.c.l.b16 %v2746
  %v2816 = vunpack.c.h.b16 %v2746
  %v2817 = vunpack.c.l.b16 %v2747
  %v2818 = vunpack.c.h.b16 %v2747
  %v2819 = vunpack.c.l.b16 %v2748
  %v2820 = vunpack.c.h.b16 %v2748
  %v2821 = vunpack.c.l.b16 %v2749
  %v2822 = vunpack.c.h.b16 %v2749
  %v2823 = vunpack.c.l.b16 %v2750
  %v2824 = vunpack.c.h.b16 %v2750
  %v2825 = vunpack.c.l.b16 %v2751
  %v2826 = vunpack.c.h.b16 %v2751
  %v2827 = vunpack.c.l.b16 %v2752
  %v2828 = vunpack.c.h.b16 %v2752
  %v2829 = vunpack.c.l.b16 %v2753
  %v2830 = vunpack.c.h.b16 %v2753
  %v2831 = vunpack.c.l.b16 %v2754
  %v2832 = vunpack.c.h.b16 %v2754
  %v2833 = vunpack.c.l.b16 %v2755
  %v2834 = vunpack.c.h.b16 %v2755
  %v2835 = vunpack.c.l.b16 %v2756
  %v2836 = vunpack.c.h.b16 %v2756
  %v2837 = vunpack.c.l.b16 %v2757
  %v2838 = vunpack.c.h.b16 %v2757
  %v2839 = vunpack.c.l.b16 %v2758
  %v2840 = vunpack.c.h.b16 %v2758
  %v2841 = vunpack.c.l.b16 %v2759
  %v2842 = vunpack.c.h.b16 %v2759
  %v2843 = vunpack.c.l.b16 %v2760
  %v2844 = vunpack.c.h.b16 %v2760
  %v2845 = vunpack.c.l.b16 %v2761
  %v2846 = vunpack.c.h.b16 %v2761
  %v2847 = vunpack.c.l.b16 %v2762
  %v2848 = vunpack.c.h.b16 %v2762
  %v2849 = vunpack.c.l.b16 %v2763
  %v2850 = vunpack.c.h.b16 %v2763
  %v2851 = vunpack.c.l.b16 %v2764
  %v2852 = vunpack.c.h.b16 %v2764
  %v2853 = vunpack.c.l.b16 %v2765
  %v2854 = vunpack.c.h.b16 %v2765
  %v2855 = vunpack.c.l.b16 %v2766
  %v2856 = vunpack.c.h.b16 %v2766
  %v2857 = vunpack.c.l.b16 %v2767
  %v2858 = vunpack.c.h.b16 %v2767
  %v2859 = vunpack.c.l.b16 %v2768
  %v2860 = vunpack.c.h.b16 %v2768
  %v2861 = vunpack.c.l.b16 %v2769
  %v2862 = vunpack.c.h.b16 %v2769
  %v2863 = vunpack.c.l.b16 %v2770
  %v2864 = vunpack.c.h.b16 %v2770
  %v2865 = vunpack.c.l.b16 %v2771
  %v2866 = vunpack.c.h.b16 %v2771
  %v2867 = vunpack.c.l.b16 %v2772
  %v2868 = vunpack.c.h.b16 %v2772
  %v2869 = vpack.c.b16 %v2809, %v2805
  %v2870 = vpack.c.b16 %v2810, %v2806
  %v2871 = vpack.c.b16 %v2811, %v2807
  %v2872 = vpack.c.b16 %v2812, %v2808
  %v2873 = vpack.c.b16 %v2817, %v2813
  %v2874 = vpack.c.b16 %v2818, %v2814
  %v2875 = vpack.c.b16 %v2819, %v2815
  %v2876 = vpack.c.b16 %v2820, %v2816
  %v2877 = vpack.c.b16 %v2825, %v2821
  %v2878 = vpack.c.b16 %v2826, %v2822
  %v2879 = vpack.c.b16 %v2827, %v2823
  %v2880 = vpack.c.b16 %v2828, %v2824
  %v2881 = vpack.c.b16 %v2833, %v2829
  %v2882 = vpack.c.b16 %v2834, %v2830
  %v2883 = vpack.c.b16 %v2835, %v2831
  %v2884 = vpack.c.b16 %v2836, %v2832
  %v2885 = vpack.c.b16 %v2841, %v2837
  %v2886 = vpack.c.b16 %v2842, %v2838
  %v2887 = vpack.c.b16 %v2843, %v2839
  %v2888 = vpack.c.b16 %v2844, %v2840
  %v2889 = vpack.c.b16 %v2849, %v2845
  %v2890 = vpack.c.b16 %v2850, %v2846
  %v2891 = vpack.c.b16 %v2851, %v2847
  %v2892 = vpack.c.b16 %v2852, %v2848
  %v2893 = vpack.c.b16 %v2857, %v2853
  %v2894 = vpack.c.b16 %v2858, %v2854
  %v2895 = vpack.c.b16 %v2859, %v2855
  %v2896 = vpack.c.b16 %v2860, %v2856
  %v2897 = vpack.c.b16 %v2865, %v2861
  %v2898 = vpack.c.b16 %v2866, %v2862
  %v2899 = vpack.c.b16 %v2867, %v2863
  %v2900 = vpack.c.b16 %v2868, %v2864
  %2933 = vmatpush.bf16.msra.mxu0 %v2897
  %2934 = vmatpush.bf16.msra.mxu0 %v2893
  %2935 = vmatpush.bf16.msra.mxu0 %v2889
  %2936 = vmatpush.bf16.msra.mxu0 %v2885
  %2937 = vmatpush.bf16.msra.mxu0 %v2881
  %2938 = vmatpush.bf16.msra.mxu0 %v2877
  %2939 = vmatpush.bf16.msra.mxu0 %v2873
  %2940 = vmatpush.bf16.msra.mxu0 %v2869
  %2941 = vmatmul.bf16.gmra.mxu0 %v2740
  %v2942 = vpop.f32.mrf.mxu0
  %v2943 = vadd.f32 0.0, %v2942
  %v2944 = vpop.f32.mrf.mxu0
  %2945 = vdwg.mxu0
  %2946 = vmatpush.bf16.msra.mxu0 %v2898
  %2947 = vmatpush.bf16.msra.mxu0 %v2894
  %2948 = vmatpush.bf16.msra.mxu0 %v2890
  %2949 = vmatpush.bf16.msra.mxu0 %v2886
  %2950 = vmatpush.bf16.msra.mxu0 %v2882
  %2951 = vmatpush.bf16.msra.mxu0 %v2878
  %2952 = vmatpush.bf16.msra.mxu0 %v2874
  %2953 = vmatpush.bf16.msra.mxu0 %v2870
  %2954 = vmatmul.bf16.gmra.mxu0 %v2740
  %v2955 = vpop.f32.mrf.mxu0
  %v2956 = vadd.f32 0.0, %v2955
  %v2957 = vpop.f32.mrf.mxu0
  %2958 = vdwg.mxu0
  %2959 = vmatpush.bf16.msra.mxu0 %v2899
  %2960 = vmatpush.bf16.msra.mxu0 %v2895
  %2961 = vmatpush.bf16.msra.mxu0 %v2891
  %2962 = vmatpush.bf16.msra.mxu0 %v2887
  %2963 = vmatpush.bf16.msra.mxu0 %v2883
  %2964 = vmatpush.bf16.msra.mxu0 %v2879
  %2965 = vmatpush.bf16.msra.mxu0 %v2875
  %2966 = vmatpush.bf16.msra.mxu0 %v2871
  %2967 = vmatmul.bf16.gmra.mxu0 %v2740
  %v2968 = vpop.f32.mrf.mxu0
  %v2969 = vadd.f32 0.0, %v2968
  %v2970 = vpop.f32.mrf.mxu0
  %2971 = vdwg.mxu0
  %2972 = vmatpush.bf16.msra.mxu0 %v2900
  %2973 = vmatpush.bf16.msra.mxu0 %v2896
  %2974 = vmatpush.bf16.msra.mxu0 %v2892
  %2975 = vmatpush.bf16.msra.mxu0 %v2888
  %2976 = vmatpush.bf16.msra.mxu0 %v2884
  %2977 = vmatpush.bf16.msra.mxu0 %v2880
  %2978 = vmatpush.bf16.msra.mxu0 %v2876
  %2979 = vmatpush.bf16.msra.mxu0 %v2872
  %2980 = vmatmul.bf16.gmra.mxu0 %v2740
  %v2981 = vpop.f32.mrf.mxu0
  %v2982 = vadd.f32 0.0, %v2981
  %v2983 = vpop.f32.mrf.mxu0
  %2984 = vdwg.mxu0
  %v2985 = vadd.f32 %v2736, %v2943
  %v2986 = vadd.f32 %v2737, %v2956
  %v2987 = vadd.f32 %v2738, %v2969
  %v2988 = vadd.f32 %v2739, %v2982
  %v2989 = vxor.u32 %v2985, 2147483648
  %v2990 = vmul.f32 %v2989, 1.442695
  %v2991 = vpow.pop %v2990
  %v2992 = vadd.f32 %v2991, 1.0
  %v2993 = vrcp.pop %v2992
  %v2994 = vmul.f32 %v2992, %v2993
  %v2995 = vsub.f32 1.0, %v2994
  %v2996 = vmul.f32 %v2993, %v2995
  %v2997 = vadd.f32 %v2993, %v2996
  %vm2998 = vweird.f32 %v2992
  %vm2999 = vweird.f32 %v2993
  %vm3000 = vmor %vm2998, %vm2999
  %v3001 = vsel %vm3000, %v2993, %v2997
  %v3002 = vand.u32 2147483647, %v2992
  %vm3003 = vcmp.eq.f32.partialorder %v3002, 8.507059e+37
  %v3004 = vand.u32 %v2992, 2147483648
  %v3005 = vor.u32 1.1754944e-38, %v3004
  %v3006 = vsel %vm3003, %v3005, %v3001
  %v3007 = vmul.f32 1.0, %v3006
  %v3008 = vxor.u32 %v2986, 2147483648
  %v3009 = vmul.f32 %v3008, 1.442695
  %v3010 = vpow.pop %v3009
  %v3011 = vadd.f32 %v3010, 1.0
  %v3012 = vrcp.pop %v3011
  %v3013 = vmul.f32 %v3011, %v3012
  %v3014 = vsub.f32 1.0, %v3013
  %v3015 = vmul.f32 %v3012, %v3014
  %v3016 = vadd.f32 %v3012, %v3015
  %vm3017 = vweird.f32 %v3011
  %vm3018 = vweird.f32 %v3012
  %vm3019 = vmor %vm3017, %vm3018
  %v3020 = vsel %vm3019, %v3012, %v3016
  %v3021 = vand.u32 2147483647, %v3011
  %vm3022 = vcmp.eq.f32.partialorder %v3021, 8.507059e+37
  %v3023 = vand.u32 %v3011, 2147483648
  %v3024 = vor.u32 1.1754944e-38, %v3023
  %v3025 = vsel %vm3022, %v3024, %v3020
  %v3026 = vmul.f32 1.0, %v3025
  %v3027 = vtanh.pop %v2987
  %v3028 = vxor.u32 %v2988, 2147483648
  %v3029 = vmul.f32 %v3028, 1.442695
  %v3030 = vpow.pop %v3029
  %v3031 = vadd.f32 %v3030, 1.0
  %v3032 = vrcp.pop %v3031
  %v3033 = vmul.f32 %v3031, %v3032
  %v3034 = vsub.f32 1.0, %v3033
  %v3035 = vmul.f32 %v3032, %v3034
  %v3036 = vadd.f32 %v3032, %v3035
  %vm3037 = vweird.f32 %v3031
  %vm3038 = vweird.f32 %v3032
  %vm3039 = vmor %vm3037, %vm3038
  %v3040 = vsel %vm3039, %v3032, %v3036
  %v3041 = vand.u32 2147483647, %v3031
  %vm3042 = vcmp.eq.f32.partialorder %v3041, 8.507059e+37
  %v3043 = vand.u32 %v3031, 2147483648
  %v3044 = vor.u32 1.1754944e-38, %v3043
  %v3045 = vsel %vm3042, %v3044, %v3040
  %v3046 = vmul.f32 1.0, %v3045
  %v3047 = vmul.f32 %v3026, %v2732
  %v3048 = vmul.f32 %v3007, %v3027
  %v3049 = vadd.f32 %v3047, %v3048
  %v3050 = vtanh.pop %v3049
  %v3051 = vmul.f32 %v3046, %v3050
  %3052 = vst [vmem:[#allocation3 + $0x38] sm:$0xff] %v3051
  %v3053 = vld [vmem:[#allocation3] sm:$0xff]
  %v3054 = vld [vmem:[#allocation3 + $0x8] sm:$0xff]
  %v3055 = vld [vmem:[#allocation3 + $0x10] sm:$0xff]
  %v3056 = vld [vmem:[#allocation3 + $0x18] sm:$0xff]
  %v3057 = vld [vmem:[#allocation3 + $0x20] sm:$0xff]
  %v3058 = vld [vmem:[#allocation3 + $0x28] sm:$0xff]
  %v3059 = vld [vmem:[#allocation3 + $0x30] sm:$0xff]
  %v3060 = vld [vmem:[#allocation3 + $0x38] sm:$0xff]
  %v3061 = vpack.c.bf16 %v3054, %v3053
  %v3062 = vpack.c.bf16 %v3056, %v3055
  %v3063 = vpack.c.bf16 %v3058, %v3057
  %v3064 = vpack.c.bf16 %v3060, %v3059
  %v3065 = vld [vmem:[%s7] sm:$0xf]
  %v3066 = vld [vmem:[%s7 + $0x4] sm:$0xf]
  %v3067 = vld [vmem:[%s7 + $0x8] sm:$0xf]
  %v3068 = vld [vmem:[%s7 + $0xc] sm:$0xf]
  %v3069 = vld [vmem:[%s7 + $0x10] sm:$0xf]
  %v3070 = vld [vmem:[%s7 + $0x14] sm:$0xf]
  %v3071 = vld [vmem:[%s7 + $0x18] sm:$0xf]
  %v3072 = vld [vmem:[%s7 + $0x1c] sm:$0xf]
  %v3073 = vld [vmem:[%s7 + $0x20] sm:$0xf]
  %v3074 = vld [vmem:[%s7 + $0x24] sm:$0xf]
  %v3075 = vld [vmem:[%s7 + $0x28] sm:$0xf]
  %v3076 = vld [vmem:[%s7 + $0x2c] sm:$0xf]
  %v3077 = vld [vmem:[%s7 + $0x30] sm:$0xf]
  %v3078 = vld [vmem:[%s7 + $0x34] sm:$0xf]
  %v3079 = vld [vmem:[%s7 + $0x38] sm:$0xf]
  %v3080 = vld [vmem:[%s7 + $0x3c] sm:$0xf]
  %v3081 = vld [vmem:[%s8] sm:$0x1]
  %v3083 = vperm.slane %v3081, 0
  %v3101 = vunpack.c.l.b16 %v3065
  %v3102 = vunpack.c.l.b16 %v3066
  %v3103 = vunpack.c.l.b16 %v3067
  %v3104 = vunpack.c.l.b16 %v3068
  %v3105 = vunpack.c.l.b16 %v3069
  %v3106 = vunpack.c.l.b16 %v3070
  %v3107 = vunpack.c.l.b16 %v3071
  %v3108 = vunpack.c.l.b16 %v3072
  %v3109 = vunpack.c.l.b16 %v3073
  %v3110 = vunpack.c.l.b16 %v3074
  %v3111 = vunpack.c.l.b16 %v3075
  %v3112 = vunpack.c.l.b16 %v3076
  %v3113 = vunpack.c.l.b16 %v3077
  %v3114 = vunpack.c.l.b16 %v3078
  %v3115 = vunpack.c.l.b16 %v3079
  %v3116 = vunpack.c.l.b16 %v3080
  %v3117 = vpack.c.b16 %v3102, %v3101
  %v3118 = vpack.c.b16 %v3104, %v3103
  %v3119 = vpack.c.b16 %v3106, %v3105
  %v3120 = vpack.c.b16 %v3108, %v3107
  %v3121 = vpack.c.b16 %v3110, %v3109
  %v3122 = vpack.c.b16 %v3112, %v3111
  %v3123 = vpack.c.b16 %v3114, %v3113
  %v3124 = vpack.c.b16 %v3116, %v3115
  %3133 = vmatpush.bf16.msra.mxu0 %v3124
  %3134 = vmatpush.bf16.msra.mxu0 %v3123
  %3135 = vmatpush.bf16.msra.mxu0 %v3122
  %3136 = vmatpush.bf16.msra.mxu0 %v3121
  %3137 = vmatpush.bf16.msra.mxu0 %v3120
  %3138 = vmatpush.bf16.msra.mxu0 %v3119
  %3139 = vmatpush.bf16.msra.mxu0 %v3118
  %3140 = vmatpush.bf16.msra.mxu0 %v3117
  %3141 = vmatmul.bf16.gmra.mxu0 %v3061
  %v3142 = vpop.f32.mrf.mxu0
  %v3143 = vadd.f32 %v3083, %v3142
  %v3144 = vpop.f32.mrf.mxu0
  %v3145 = vadd.f32 %v3083, %v3144
  %3146 = vmatmul.bf16.gmra.mxu0 %v3062
  %v3147 = vpop.f32.mrf.mxu0
  %v3148 = vadd.f32 %v3083, %v3147
  %v3149 = vpop.f32.mrf.mxu0
  %v3150 = vadd.f32 %v3083, %v3149
  %3151 = vmatmul.bf16.gmra.mxu0 %v3063
  %v3152 = vpop.f32.mrf.mxu0
  %v3153 = vadd.f32 %v3083, %v3152
  %v3154 = vpop.f32.mrf.mxu0
  %v3155 = vadd.f32 %v3083, %v3154
  %3156 = vmatmul.bf16.gmra.mxu0 %v3064
  %v3157 = vpop.f32.mrf.mxu0
  %v3158 = vadd.f32 %v3083, %v3157
  %v3159 = vpop.f32.mrf.mxu0
  %v3160 = vadd.f32 %v3083, %v3159
  %3161 = vdwg.mxu0
  %3162 = vst [vmem:[%s9] sm:$0xff] %v3143
  %3163 = vst [vmem:[%s9 + $0x8] sm:$0xff] %v3145
  %3164 = vst [vmem:[%s9 + $0x10] sm:$0xff] %v3148
  %3165 = vst [vmem:[%s9 + $0x18] sm:$0xff] %v3150
  %3166 = vst [vmem:[%s9 + $0x20] sm:$0xff] %v3153
  %3167 = vst [vmem:[%s9 + $0x28] sm:$0xff] %v3155
  %3168 = vst [vmem:[%s9 + $0x30] sm:$0xff] %v3158
  %3169 = vst [vmem:[%s9 + $0x38] sm:$0xff] %v3160
  // Predicated region
  $region38: #{lstm_forward.1} parent=0 // pred_check
    _
  $region39: #{lstm_forward.1} parent=0 // pred_check_branch
    %3171 = sbr.rel (0) target = $region41
  $region40: #{lstm_forward.1} parent=0 // pred_region
    _
  $region41: #{lstm_forward.1} parent=0 // pred_fallthru
    _
  // Predicated region
  $region42: #{lstm_forward.1} parent=0 // pred_check
    _
  $region43: #{lstm_forward.1} parent=0 // pred_check_branch
    %3173 = sbr.rel (0) target = $region45
  $region44: #{lstm_forward.1} parent=0 // pred_region
    _
  $region45: #{lstm_forward.1} parent=0 // pred_fallthru
    _

</llo_original>
